<compile_context>
chip_gen: v5e
topology: v5e:2x2
jax: 0.10.0
libtpu: 0.0.40
codegen_flags: <defaults>
</compile_context>

<pallas_src>
import functools

import numpy as np

import jax
import jax.numpy as jnp
from jax.experimental import pallas as pl
from jax.experimental.pallas import tpu as pltpu


COMPUTE_DTYPE = jnp.bfloat16          # MXU operand dtype for the big matmuls
VMEM_LIMIT_BYTES = 32 * 1024 * 1024   # v7x-safe scoped VMEM budget


# --------------------------------------------------------------------------
# Fused conv (as im2col matmul) + bias + ReLU + GroupNorm, one sample per
# grid step.  Per-group statistics are formed with a tiny channel->group
# one-hot projection matmul (no lane-splitting reshape in-kernel).
# --------------------------------------------------------------------------
def _conv_gn_kernel(p_ref, w_ref, b_ref, gam_ref, bet_ref, gp_ref, gpt_ref,
                    o_ref, *, eps, inv_count):
    # p_ref: (1, R, K) bf16 patches for one sample; w_ref: (K, C) bf16.
    h = jnp.dot(p_ref[0], w_ref[...], preferred_element_type=jnp.float32)
    h = jnp.maximum(h + b_ref[...], 0.0)                         # (R, C) f32

    sum_c = jnp.sum(h, axis=0, keepdims=True)                    # (1, C)
    mean_g = jnp.dot(sum_c, gp_ref[...],
                     preferred_element_type=jnp.float32) * inv_count
    mean_c = jnp.dot(mean_g, gpt_ref[...],
                     preferred_element_type=jnp.float32)         # (1, C)
    d = h - mean_c
    sq_c = jnp.sum(d * d, axis=0, keepdims=True)                 # (1, C)
    var_g = jnp.dot(sq_c, gp_ref[...],
                    preferred_element_type=jnp.float32) * inv_count
    var_c = jnp.dot(var_g, gpt_ref[...],
                    preferred_element_type=jnp.float32)          # (1, C)
    xhat = d * jax.lax.rsqrt(var_c + eps)
    o_ref[0] = (xhat * gam_ref[...] + bet_ref[...]).astype(o_ref.dtype)


def conv_gn_pallas(patches, w, b, gamma, beta, num_groups, eps=1e-5,
                   out_dtype=COMPUTE_DTYPE):
    """patches: (N, R, K); w: (K, C); per-sample GroupNorm over (R, C//G)."""
    n, r, k = patches.shape
    c = w.shape[1]
    g = num_groups
    cg = c // g
    # channel -> group one-hot membership (constants, built once at trace time)
    gp = jnp.asarray(np.arange(c)[:, None] // cg == np.arange(g)[None, :],
                     dtype=np.float32)
    gpt = jnp.transpose(gp)

    kern = functools.partial(_conv_gn_kernel, eps=eps, inv_count=1.0 / (r * cg))
    return pl.pallas_call(
        kern,
        grid=(n,),
        in_specs=[
            pl.BlockSpec((1, r, k), lambda i: (i, 0, 0)),
            pl.BlockSpec((k, c), lambda i: (0, 0)),
            pl.BlockSpec((1, c), lambda i: (0, 0)),
            pl.BlockSpec((1, c), lambda i: (0, 0)),
            pl.BlockSpec((1, c), lambda i: (0, 0)),
            pl.BlockSpec((c, g), lambda i: (0, 0)),
            pl.BlockSpec((g, c), lambda i: (0, 0)),
        ],
        out_specs=pl.BlockSpec((1, r, c), lambda i: (i, 0, 0)),
        out_shape=jax.ShapeDtypeStruct((n, r, c), out_dtype),
        compiler_params=pltpu.CompilerParams(
            dimension_semantics=("parallel",),
            vmem_limit_bytes=VMEM_LIMIT_BYTES),
    )(patches, w, b.reshape(1, c), gamma.reshape(1, c), beta.reshape(1, c),
      gp, gpt)


# --------------------------------------------------------------------------
# Fused tail: lin -> ReLU -> GRU input projection -> GRU recurrence
# (statically unrolled, PyTorch gate order r, z, n) -> ReLU -> hl1 -> ReLU
# -> hl2 -> ReLU -> actor -> tanh.  Single grid step; everything stays in VMEM.
# --------------------------------------------------------------------------
def _tail_kernel(flat_ref, lin_w_ref, lin_b_ref, wi_ref, bi_ref, wh_ref, bh_ref,
                 h1w_ref, h1b_ref, h2w_ref, h2b_ref, aw_ref, ab_ref,
                 act_ref, hn_ref, *, t_len, bsz, dr):
    # lin -> ReLU (bf16 operands, f32 accumulation)
    x1 = jnp.dot(flat_ref[...], lin_w_ref[...],
                 preferred_element_type=jnp.float32) + lin_b_ref[...]
    x1 = jnp.maximum(x1, 0.0)                                     # (T*B, dl)

    # GRU input projections for the whole sequence, hoisted out of the loop.
    xg = jnp.dot(x1.astype(wi_ref.dtype), wi_ref[...],
                 preferred_element_type=jnp.float32) + bi_ref[...]  # (T*B, 3dr)

    wh = wh_ref[...]
    bh = bh_ref[...]
    h1w = h1w_ref[...]
    h1b = h1b_ref[...]
    h2w = h2w_ref[...]
    h2b = h2b_ref[...]
    aw = aw_ref[...]
    ab = ab_ref[...]

    h = jnp.zeros((bsz, dr), jnp.float32)          # nn.GRU default h0 = zeros
    for t in range(t_len):                         # static unroll: T is tiny
        xg_t = xg[t * bsz:(t + 1) * bsz, :]
        hg = jnp.dot(h, wh, preferred_element_type=jnp.float32) + bh
        r = jax.nn.sigmoid(xg_t[:, :dr] + hg[:, :dr])
        z = jax.nn.sigmoid(xg_t[:, dr:2 * dr] + hg[:, dr:2 * dr])
        ncand = jnp.tanh(xg_t[:, 2 * dr:] + r * hg[:, 2 * dr:])
        h = (1.0 - z) * ncand + z * h

        # Head fused per timestep (avoids any in-kernel concat / scratch).
        x2 = jnp.maximum(h, 0.0)                   # F.relu(x2)
        a1 = jnp.maximum(jnp.dot(x2.astype(h1w.dtype), h1w,
                                 preferred_element_type=jnp.float32) + h1b, 0.0)
        a2 = jnp.maximum(jnp.dot(a1.astype(h2w.dtype), h2w,
                                 preferred_element_type=jnp.float32) + h2b, 0.0)
        act_ref[t] = jnp.tanh(
            jnp.dot(a2, aw, preferred_element_type=jnp.float32) + ab
        ).astype(act_ref.dtype)

    hn_ref[...] = h                                # raw final hidden state


def tail_pallas(flat, params, t_len, bsz, dr, na):
    args = [
        flat,
        params["lin_w_nhwc_bf16"], params["lin_b"].reshape(1, -1),
        params["gru_wi_cat_bf16"], params["gru_bi_cat"],
        params["gru_wh_cat"], params["gru_bh_cat"],
        params["hl1_w_bf16"], params["hl1_b"].reshape(1, -1),
        params["hl2_w_bf16"], params["hl2_b"].reshape(1, -1),
        params["actor_w"], params["actor_b"].reshape(1, -1),
    ]
    in_specs = [pl.BlockSpec(a.shape, lambda i: (0, 0)) for a in args]
    out_specs = [
        pl.BlockSpec((t_len, bsz, na), lambda i: (0, 0, 0)),
        pl.BlockSpec((bsz, dr), lambda i: (0, 0)),
    ]
    out_shape = (jax.ShapeDtypeStruct((t_len, bsz, na), jnp.float32),
                 jax.ShapeDtypeStruct((bsz, dr), jnp.float32))
    kern = functools.partial(_tail_kernel, t_len=t_len, bsz=bsz, dr=dr)
    action, hn = pl.pallas_call(
        kern,
        grid=(1,),
        in_specs=in_specs,
        out_specs=out_specs,
        out_shape=out_shape,
        compiler_params=pltpu.CompilerParams(
            dimension_semantics=("arbitrary",),
            vmem_limit_bytes=VMEM_LIMIT_BYTES),
    )(*args)
    return action, hn


# --------------------------------------------------------------------------
# JAX glue: NHWC im2col patch extraction (pure strided slicing; matmul is
# Pallas).  Patch feature order is (kh, kw, cin), matching the flattened conv
# weights.  Returns (N, OH*OW, k*k*C).
# --------------------------------------------------------------------------
def _im2col_nhwc(x, k, stride):
    n, h, w, c = x.shape
    oh = (h - k) // stride + 1
    ow = (w - k) // stride + 1
    cols = []
    for i in range(k):
        for j in range(k):
            cols.append(x[:, i:i + stride * oh:stride, j:j + stride * ow:stride, :])
    p = jnp.stack(cols, axis=3)                 # (N, OH, OW, k*k, C)
    return p.reshape(n, oh * ow, k * k * c), oh, ow


# --------------------------------------------------------------------------
# Actor_RGB forward (Pallas path): 3 pallas_calls total.
# --------------------------------------------------------------------------
def actor_rgb_forward(rgb, params, settings):
    d1, d2, dl, dr, na = (settings["d1"], settings["d2"], settings["dl"],
                          settings["dr"], settings["output_a"])
    t_len, bsz = rgb.shape[0], rgb.shape[1]
    ch = settings["channels"]

    # torch does .view(-1, 3, 84, 84) (NCHW); convert once to NHWC + bf16.
    x = rgb.reshape(-1, ch, 84, 84).transpose(0, 2, 3, 1).astype(COMPUTE_DTYPE)
    n = x.shape[0]

    # conv1 + bias + ReLU + GroupNorm(d1/2, d1), per-sample grid step.
    p1, oh1, ow1 = _im2col_nhwc(x, 8, 4)                        # (N, 400, 192) bf16
    g1 = conv_gn_pallas(p1, params["conv1_wf_bf16"], params["conv1_b"],
                        params["gn1_w"], params["gn1_b"], d1 // 2)
    g1 = g1.reshape(n, oh1, ow1, d1)                            # (N, 20, 20, d1) bf16

    # conv2 + bias + ReLU + GroupNorm(d2/2, d2), per-sample grid step.
    p2, oh2, ow2 = _im2col_nhwc(g1, 4, 2)                       # (N, 81, 128) bf16
    g2 = conv_gn_pallas(p2, params["conv2_wf_bf16"], params["conv2_b"],
                        params["gn2_w"], params["gn2_b"], d2 // 2)

    # NHWC flatten (lin weight rows were pre-permuted to match torch's NCHW
    # .view flatten), then the whole tail in one kernel.
    flat = g2.reshape(n, oh2 * ow2 * d2)                        # (N, 648) bf16
    action, hn = tail_pallas(flat, params, t_len, bsz, dr, na)
    return action, hn.reshape(1, bsz, dr)


# --------------------------------------------------------------------------
# Deterministic parameter init (shapes follow Actor_RGB.__init__), plus the
# one-time Pallas-layout derivations (NHWC-flattened conv weights, permuted
# lin weight, concatenated GRU gate weights, bf16 MXU-operand copies).
# --------------------------------------------------------------------------
def init_params(key, settings):
    d1, d2, dl, dr, na = (settings["d1"], settings["d2"], settings["dl"],
                          settings["dr"], settings["output_a"])
    ch = settings["channels"]
    w_in, h_in = settings["RGB_state_space"]
    w1 = (w_in - 8) // 4 + 1
    w2 = (w1 - 4) // 2 + 1
    h1 = (h_in - 8) // 4 + 1
    h2 = (h1 - 4) // 2 + 1
    linear_input = int(w2 * h2 * d2)

    keys = iter(jax.random.split(key, 40))

    def u(shape, fan_in):
        bound = 1.0 / np.sqrt(fan_in)
        return jax.random.uniform(next(keys), shape, jnp.float32, -bound, bound)

    p = {}
    conv1_w4 = u((d1, ch, 8, 8), ch * 64)                        # OIHW (torch)
    p["conv1_w4"] = conv1_w4
    conv1_wf = conv1_w4.transpose(2, 3, 1, 0).reshape(8 * 8 * ch, d1)
    p["conv1_wf_bf16"] = conv1_wf.astype(COMPUTE_DTYPE)          # (kh,kw,cin)->cout
    p["conv1_b"] = u((d1,), ch * 64)
    p["gn1_w"] = 1.0 + 0.1 * jax.random.normal(next(keys), (d1,), jnp.float32)
    p["gn1_b"] = 0.1 * jax.random.normal(next(keys), (d1,), jnp.float32)

    conv2_w4 = u((d2, d1, 4, 4), d1 * 16)
    p["conv2_w4"] = conv2_w4
    conv2_wf = conv2_w4.transpose(2, 3, 1, 0).reshape(4 * 4 * d1, d2)
    p["conv2_wf_bf16"] = conv2_wf.astype(COMPUTE_DTYPE)
    p["conv2_b"] = u((d2,), d1 * 16)
    p["gn2_w"] = 1.0 + 0.1 * jax.random.normal(next(keys), (d2,), jnp.float32)
    p["gn2_b"] = 0.1 * jax.random.normal(next(keys), (d2,), jnp.float32)

    lin_w = u((linear_input, dl), linear_input)                  # rows in torch NCHW order
    p["lin_w"] = lin_w
    # Row permutation so the NHWC flatten (h, w, c) hits the same weights as
    # torch's NCHW .view flatten (c, h, w).
    lin_w_nhwc = lin_w.reshape(d2, h2, w2, dl).transpose(1, 2, 0, 3).reshape(linear_input, dl)
    p["lin_w_nhwc_bf16"] = lin_w_nhwc.astype(COMPUTE_DTYPE)
    p["lin_b"] = u((dl,), linear_input)

    # GRU (PyTorch gate order r, z, n; weights stored transposed: (in_dim, dr))
    for gate in ("r", "z", "n"):
        p[f"w_i{gate}"] = u((dl, dr), dr)
        p[f"w_h{gate}"] = u((dr, dr), dr)
        p[f"b_i{gate}"] = u((1, dr), dr)
        p[f"b_h{gate}"] = u((1, dr), dr)
    p["gru_wi_cat_bf16"] = jnp.concatenate(
        [p["w_ir"], p["w_iz"], p["w_in"]], axis=1).astype(COMPUTE_DTYPE)   # (dl, 3dr)
    p["gru_bi_cat"] = jnp.concatenate([p["b_ir"], p["b_iz"], p["b_in"]], axis=1)
    p["gru_wh_cat"] = jnp.concatenate([p["w_hr"], p["w_hz"], p["w_hn"]], axis=1)
    p["gru_bh_cat"] = jnp.concatenate([p["b_hr"], p["b_hz"], p["b_hn"]], axis=1)

    p["hl1_w"] = u((dr, 200), dr)
    p["hl1_w_bf16"] = p["hl1_w"].astype(COMPUTE_DTYPE)
    p["hl1_b"] = u((200,), dr)
    p["hl2_w"] = u((200, 100), 200)
    p["hl2_w_bf16"] = p["hl2_w"].astype(COMPUTE_DTYPE)
    p["hl2_b"] = u((100,), 200)
    p["actor_w"] = u((100, na), 100)
    p["actor_b"] = u((na,), 100)
    return p


# --------------------------------------------------------------------------
# Pure-JAX float32 reference (mirrors the PyTorch forward) for verification.
# --------------------------------------------------------------------------
def reference_forward(rgb, params, settings):
    d1, d2, dl, dr, _ = (settings["d1"], settings["d2"], settings["dl"],
                         settings["dr"], settings["output_a"])
    t_len, b = rgb.shape[0], rgb.shape[1]
    x = rgb.reshape(-1, settings["channels"], 84, 84)

    def conv(x, w4, bias, stride):
        y = jax.lax.conv_general_dilated(
            x, w4, window_strides=(stride, stride), padding="VALID",
            dimension_numbers=("NCHW", "OIHW", "NCHW"))
        return y + bias[None, :, None, None]

    def gn(x, gamma, beta, groups, eps=1e-5):
        n, c, h, w = x.shape
        xg = x.reshape(n, groups, -1)
        mean = xg.mean(-1, keepdims=True)
        var = ((xg - mean) ** 2).mean(-1, keepdims=True)
        xhat = ((xg - mean) / jnp.sqrt(var + eps)).reshape(n, c, h, w)
        return xhat * gamma[None, :, None, None] + beta[None, :, None, None]

    x1 = gn(jax.nn.relu(conv(x, params["conv1_w4"], params["conv1_b"], 4)),
            params["gn1_w"], params["gn1_b"], d1 // 2)
    x2 = gn(jax.nn.relu(conv(x1, params["conv2_w4"], params["conv2_b"], 2)),
            params["gn2_w"], params["gn2_b"], d2 // 2)
    flat = x2.reshape(x2.shape[0], -1)
    l1 = jax.nn.relu(flat @ params["lin_w"] + params["lin_b"])
    x_seq = l1.reshape(t_len, -1, dl)

    def step(h, xt):
        r = jax.nn.sigmoid(xt @ params["w_ir"] + params["b_ir"]
                           + h @ params["w_hr"] + params["b_hr"])
        z = jax.nn.sigmoid(xt @ params["w_iz"] + params["b_iz"]
                           + h @ params["w_hz"] + params["b_hz"])
        n = jnp.tanh(xt @ params["w_in"] + params["b_in"]
                     + r * (h @ params["w_hn"] + params["b_hn"]))
        h_new = (1.0 - z) * n + z * h
        return h_new, h_new

    h0 = jnp.zeros((x_seq.shape[1], dr), jnp.float32)
    h_t, gru_out = jax.lax.scan(step, h0, x_seq)

    h = jax.nn.relu(gru_out)
    h = jax.nn.relu(h @ params["hl1_w"] + params["hl1_b"])
    h = jax.nn.relu(h @ params["hl2_w"] + params["hl2_b"])
    action = jnp.tanh(h @ params["actor_w"] + params["actor_b"])
    return action, h_t.reshape(1, b, dr)


if __name__ == "__main__":
    settings = {
        "channels": 3,
        "RGB_state_space": (84, 84),   # module hard-codes view(-1, 3, 84, 84)
        "d1": 8, "d2": 8, "dl": 32, "dr": 16, "output_a": 4,
    }
    T, B = 3, 2

    key = jax.random.PRNGKey(0)
    k_in, k_par = jax.random.split(key)
    rgb = jax.random.normal(k_in, (T, B, settings["channels"], 84, 84), jnp.float32)
    params = init_params(k_par, settings)

    fwd = jax.jit(functools.partial(actor_rgb_forward, settings=settings))
    action, hn = jax.block_until_ready(fwd(rgb, params))

    ref_action, ref_hn = reference_forward(rgb, params, settings)
    # Tolerance covers bf16 MXU operands (f32 accumulation) on the conv / lin /
    # GRU-projection / hl matmuls and bf16 intermediate activations; any
    # structural bug (gate order, group mapping, flatten permutation) would
    # blow past this by orders of magnitude.
    np.testing.assert_allclose(np.asarray(action), np.asarray(ref_action),
                               rtol=3e-2, atol=3e-2)
    np.testing.assert_allclose(np.asarray(hn), np.asarray(ref_hn),
                               rtol=3e-2, atol=3e-2)
    assert action.shape == (T, B, settings["output_a"]) and hn.shape == (1, B, settings["dr"])
    print("KERNEL_OK")
</pallas_src>

<mosaic_0001>
module attributes {stable_mosaic.version = 11 : i64} {
  func.func @_conv_gn_kernel(%arg0: i32, %arg1: memref<1x400x192xbf16, #tpu.memory_space<vmem>>, %arg2: memref<192x8xbf16, #tpu.memory_space<vmem>>, %arg3: memref<1x8xf32, #tpu.memory_space<vmem>>, %arg4: memref<1x8xf32, #tpu.memory_space<vmem>>, %arg5: memref<1x8xf32, #tpu.memory_space<vmem>>, %arg6: memref<8x4xf32, #tpu.memory_space<vmem>>, %arg7: memref<4x8xf32, #tpu.memory_space<vmem>>, %arg8: memref<1x400x8xbf16, #tpu.memory_space<vmem>>) attributes {dimension_semantics = [#tpu.dimension_semantics<parallel>], iteration_bounds = array<i64: 6>, scalar_prefetch = 0 : i64, scratch_operands = 0 : i64, tpu.core_type = #tpu.core_type<tc>, window_params = [{transform_indices = @transform_0, window_bounds = array<i64: 1, 400, 192>}, {pipeline_mode = #tpu.pipeline_mode<synchronous>, transform_indices = @transform_1, window_bounds = array<i64: 192, 8>}, {pipeline_mode = #tpu.pipeline_mode<synchronous>, transform_indices = @transform_2, window_bounds = array<i64: 1, 8>}, {pipeline_mode = #tpu.pipeline_mode<synchronous>, transform_indices = @transform_3, window_bounds = array<i64: 1, 8>}, {pipeline_mode = #tpu.pipeline_mode<synchronous>, transform_indices = @transform_4, window_bounds = array<i64: 1, 8>}, {pipeline_mode = #tpu.pipeline_mode<synchronous>, transform_indices = @transform_5, window_bounds = array<i64: 8, 4>}, {pipeline_mode = #tpu.pipeline_mode<synchronous>, transform_indices = @transform_6, window_bounds = array<i64: 4, 8>}, {transform_indices = @transform_7, window_bounds = array<i64: 1, 400, 8>}]} {
    %c0 = arith.constant 0 : index
    %c0_0 = arith.constant 0 : index
    %c0_1 = arith.constant 0 : index
    %0 = vector.load %arg1[%c0, %c0_0, %c0_1] : memref<1x400x192xbf16, #tpu.memory_space<vmem>>, vector<1x400x192xbf16>
    %1 = vector.shape_cast %0 : vector<1x400x192xbf16> to vector<400x192xbf16>
    %c0_2 = arith.constant 0 : index
    %c0_3 = arith.constant 0 : index
    %2 = vector.load %arg2[%c0_2, %c0_3] : memref<192x8xbf16, #tpu.memory_space<vmem>>, vector<192x8xbf16>
    %cst = arith.constant dense<0.000000e+00> : vector<400x8xf32>
    %3 = tpu.matmul %1, %2, %cst {dimension_numbers = #tpu.dot_dimension_numbers<[1], [0], [0], [1], [0, 0, 1, 1], [], []>} : vector<400x192xbf16>, vector<192x8xbf16>, vector<400x8xf32> -> vector<400x8xf32>
    %c0_4 = arith.constant 0 : index
    %c0_5 = arith.constant 0 : index
    %4 = vector.load %arg3[%c0_4, %c0_5] : memref<1x8xf32, #tpu.memory_space<vmem>>, vector<1x8xf32>
    %5 = vector.broadcast %4 : vector<1x8xf32> to vector<400x8xf32>
    %6 = arith.addf %3, %5 : vector<400x8xf32>
    %cst_6 = arith.constant 0.000000e+00 : f32
    %7 = vector.broadcast %cst_6 : f32 to vector<400x8xf32>
    %8 = arith.maximumf %6, %7 : vector<400x8xf32>
    %cst_7 = arith.constant dense<0.000000e+00> : vector<8xf32>
    %9 = vector.multi_reduction <add>, %8, %cst_7 [0] : vector<400x8xf32> to vector<8xf32>
    %10 = vector.shape_cast %9 : vector<8xf32> to vector<1x8xf32>
    %c0_8 = arith.constant 0 : index
    %c0_9 = arith.constant 0 : index
    %11 = vector.load %arg6[%c0_8, %c0_9] : memref<8x4xf32, #tpu.memory_space<vmem>>, vector<8x4xf32>
    %cst_10 = arith.constant dense<0.000000e+00> : vector<1x4xf32>
    %12 = tpu.matmul %10, %11, %cst_10 {dimension_numbers = #tpu.dot_dimension_numbers<[1], [0], [0], [1], [0, 0, 1, 1], [], []>} : vector<1x8xf32>, vector<8x4xf32>, vector<1x4xf32> -> vector<1x4xf32>
    %cst_11 = arith.constant 1.250000e-03 : f32
    %13 = vector.broadcast %cst_11 : f32 to vector<1x4xf32>
    %14 = arith.mulf %12, %13 : vector<1x4xf32>
    %c0_12 = arith.constant 0 : index
    %c0_13 = arith.constant 0 : index
    %15 = vector.load %arg7[%c0_12, %c0_13] : memref<4x8xf32, #tpu.memory_space<vmem>>, vector<4x8xf32>
    %cst_14 = arith.constant dense<0.000000e+00> : vector<1x8xf32>
    %16 = tpu.matmul %14, %15, %cst_14 {dimension_numbers = #tpu.dot_dimension_numbers<[1], [0], [0], [1], [0, 0, 1, 1], [], []>} : vector<1x4xf32>, vector<4x8xf32>, vector<1x8xf32> -> vector<1x8xf32>
    %17 = vector.broadcast %16 : vector<1x8xf32> to vector<400x8xf32>
    %18 = arith.subf %8, %17 : vector<400x8xf32>
    %19 = arith.mulf %18, %18 : vector<400x8xf32>
    %cst_15 = arith.constant dense<0.000000e+00> : vector<8xf32>
    %20 = vector.multi_reduction <add>, %19, %cst_15 [0] : vector<400x8xf32> to vector<8xf32>
    %21 = vector.shape_cast %20 : vector<8xf32> to vector<1x8xf32>
    %c0_16 = arith.constant 0 : index
    %c0_17 = arith.constant 0 : index
    %22 = vector.load %arg6[%c0_16, %c0_17] : memref<8x4xf32, #tpu.memory_space<vmem>>, vector<8x4xf32>
    %cst_18 = arith.constant dense<0.000000e+00> : vector<1x4xf32>
    %23 = tpu.matmul %21, %22, %cst_18 {dimension_numbers = #tpu.dot_dimension_numbers<[1], [0], [0], [1], [0, 0, 1, 1], [], []>} : vector<1x8xf32>, vector<8x4xf32>, vector<1x4xf32> -> vector<1x4xf32>
    %cst_19 = arith.constant 1.250000e-03 : f32
    %24 = vector.broadcast %cst_19 : f32 to vector<1x4xf32>
    %25 = arith.mulf %23, %24 : vector<1x4xf32>
    %c0_20 = arith.constant 0 : index
    %c0_21 = arith.constant 0 : index
    %26 = vector.load %arg7[%c0_20, %c0_21] : memref<4x8xf32, #tpu.memory_space<vmem>>, vector<4x8xf32>
    %cst_22 = arith.constant dense<0.000000e+00> : vector<1x8xf32>
    %27 = tpu.matmul %25, %26, %cst_22 {dimension_numbers = #tpu.dot_dimension_numbers<[1], [0], [0], [1], [0, 0, 1, 1], [], []>} : vector<1x4xf32>, vector<4x8xf32>, vector<1x8xf32> -> vector<1x8xf32>
    %cst_23 = arith.constant 9.99999974E-6 : f32
    %28 = vector.broadcast %cst_23 : f32 to vector<1x8xf32>
    %29 = arith.addf %27, %28 : vector<1x8xf32>
    %30 = math.rsqrt %29 : vector<1x8xf32>
    %31 = vector.broadcast %30 : vector<1x8xf32> to vector<400x8xf32>
    %32 = arith.mulf %18, %31 : vector<400x8xf32>
    %c0_24 = arith.constant 0 : index
    %c0_25 = arith.constant 0 : index
    %33 = vector.load %arg4[%c0_24, %c0_25] : memref<1x8xf32, #tpu.memory_space<vmem>>, vector<1x8xf32>
    %34 = vector.broadcast %33 : vector<1x8xf32> to vector<400x8xf32>
    %35 = arith.mulf %32, %34 : vector<400x8xf32>
    %c0_26 = arith.constant 0 : index
    %c0_27 = arith.constant 0 : index
    %36 = vector.load %arg5[%c0_26, %c0_27] : memref<1x8xf32, #tpu.memory_space<vmem>>, vector<1x8xf32>
    %37 = vector.broadcast %36 : vector<1x8xf32> to vector<400x8xf32>
    %38 = arith.addf %35, %37 : vector<400x8xf32>
    %39 = arith.truncf %38 : vector<400x8xf32> to vector<400x8xbf16>
    %c0_28 = arith.constant 0 : index
    %c0_29 = arith.constant 0 : index
    %c0_30 = arith.constant 0 : index
    %40 = vector.load %arg8[%c0_28, %c0_29, %c0_30] : memref<1x400x8xbf16, #tpu.memory_space<vmem>>, vector<1x400x8xbf16>
    %41 = vector.shape_cast %40 : vector<1x400x8xbf16> to vector<400x8xbf16>
    %42 = vector.shape_cast %39 : vector<400x8xbf16> to vector<1x400x8xbf16>
    tpu.vector_store %arg8[%c0_28, %c0_29, %c0_30], %42 {strides = array<i32>} : memref<1x400x8xbf16, #tpu.memory_space<vmem>>, vector<1x400x8xbf16>,
    return
  }
  func.func @transform_0(%arg0: i32) -> (i32, i32, i32) {
    %c0_i32 = arith.constant 0 : i32
    %c0_i32_0 = arith.constant 0 : i32
    %c0_i32_1 = arith.constant 0 : i32
    return %arg0, %c0_i32, %c0_i32_0 : i32, i32, i32
  }
  func.func @transform_1(%arg0: i32) -> (i32, i32) {
    %c0_i32 = arith.constant 0 : i32
    %c0_i32_0 = arith.constant 0 : i32
    %c0_i32_1 = arith.constant 0 : i32
    return %c0_i32, %c0_i32_0 : i32, i32
  }
  func.func @transform_2(%arg0: i32) -> (i32, i32) {
    %c0_i32 = arith.constant 0 : i32
    %c0_i32_0 = arith.constant 0 : i32
    %c0_i32_1 = arith.constant 0 : i32
    return %c0_i32, %c0_i32_0 : i32, i32
  }
  func.func @transform_3(%arg0: i32) -> (i32, i32) {
    %c0_i32 = arith.constant 0 : i32
    %c0_i32_0 = arith.constant 0 : i32
    %c0_i32_1 = arith.constant 0 : i32
    return %c0_i32, %c0_i32_0 : i32, i32
  }
  func.func @transform_4(%arg0: i32) -> (i32, i32) {
    %c0_i32 = arith.constant 0 : i32
    %c0_i32_0 = arith.constant 0 : i32
    %c0_i32_1 = arith.constant 0 : i32
    return %c0_i32, %c0_i32_0 : i32, i32
  }
  func.func @transform_5(%arg0: i32) -> (i32, i32) {
    %c0_i32 = arith.constant 0 : i32
    %c0_i32_0 = arith.constant 0 : i32
    %c0_i32_1 = arith.constant 0 : i32
    return %c0_i32, %c0_i32_0 : i32, i32
  }
  func.func @transform_6(%arg0: i32) -> (i32, i32) {
    %c0_i32 = arith.constant 0 : i32
    %c0_i32_0 = arith.constant 0 : i32
    %c0_i32_1 = arith.constant 0 : i32
    return %c0_i32, %c0_i32_0 : i32, i32
  }
  func.func @transform_7(%arg0: i32) -> (i32, i32, i32) {
    %c0_i32 = arith.constant 0 : i32
    %c0_i32_0 = arith.constant 0 : i32
    %c0_i32_1 = arith.constant 0 : i32
    return %arg0, %c0_i32, %c0_i32_0 : i32, i32, i32
  }
}

module attributes {stable_mosaic.version = 11 : i64} {
  func.func @_conv_gn_kernel(%arg0: i32, %arg1: memref<1x81x128xbf16, #tpu.memory_space<vmem>>, %arg2: memref<128x8xbf16, #tpu.memory_space<vmem>>, %arg3: memref<1x8xf32, #tpu.memory_space<vmem>>, %arg4: memref<1x8xf32, #tpu.memory_space<vmem>>, %arg5: memref<1x8xf32, #tpu.memory_space<vmem>>, %arg6: memref<8x4xf32, #tpu.memory_space<vmem>>, %arg7: memref<4x8xf32, #tpu.memory_space<vmem>>, %arg8: memref<1x81x8xbf16, #tpu.memory_space<vmem>>) attributes {dimension_semantics = [#tpu.dimension_semantics<parallel>], iteration_bounds = array<i64: 6>, scalar_prefetch = 0 : i64, scratch_operands = 0 : i64, tpu.core_type = #tpu.core_type<tc>, window_params = [{transform_indices = @transform_0, window_bounds = array<i64: 1, 81, 128>}, {pipeline_mode = #tpu.pipeline_mode<synchronous>, transform_indices = @transform_1, window_bounds = array<i64: 128, 8>}, {pipeline_mode = #tpu.pipeline_mode<synchronous>, transform_indices = @transform_2, window_bounds = array<i64: 1, 8>}, {pipeline_mode = #tpu.pipeline_mode<synchronous>, transform_indices = @transform_3, window_bounds = array<i64: 1, 8>}, {pipeline_mode = #tpu.pipeline_mode<synchronous>, transform_indices = @transform_4, window_bounds = array<i64: 1, 8>}, {pipeline_mode = #tpu.pipeline_mode<synchronous>, transform_indices = @transform_5, window_bounds = array<i64: 8, 4>}, {pipeline_mode = #tpu.pipeline_mode<synchronous>, transform_indices = @transform_6, window_bounds = array<i64: 4, 8>}, {transform_indices = @transform_7, window_bounds = array<i64: 1, 81, 8>}]} {
    %c0 = arith.constant 0 : index
    %c0_0 = arith.constant 0 : index
    %c0_1 = arith.constant 0 : index
    %0 = vector.load %arg1[%c0, %c0_0, %c0_1] : memref<1x81x128xbf16, #tpu.memory_space<vmem>>, vector<1x81x128xbf16>
    %1 = vector.shape_cast %0 : vector<1x81x128xbf16> to vector<81x128xbf16>
    %c0_2 = arith.constant 0 : index
    %c0_3 = arith.constant 0 : index
    %2 = vector.load %arg2[%c0_2, %c0_3] : memref<128x8xbf16, #tpu.memory_space<vmem>>, vector<128x8xbf16>
    %cst = arith.constant dense<0.000000e+00> : vector<81x8xf32>
    %3 = tpu.matmul %1, %2, %cst {dimension_numbers = #tpu.dot_dimension_numbers<[1], [0], [0], [1], [0, 0, 1, 1], [], []>} : vector<81x128xbf16>, vector<128x8xbf16>, vector<81x8xf32> -> vector<81x8xf32>
    %c0_4 = arith.constant 0 : index
    %c0_5 = arith.constant 0 : index
    %4 = vector.load %arg3[%c0_4, %c0_5] : memref<1x8xf32, #tpu.memory_space<vmem>>, vector<1x8xf32>
    %5 = vector.broadcast %4 : vector<1x8xf32> to vector<81x8xf32>
    %6 = arith.addf %3, %5 : vector<81x8xf32>
    %cst_6 = arith.constant 0.000000e+00 : f32
    %7 = vector.broadcast %cst_6 : f32 to vector<81x8xf32>
    %8 = arith.maximumf %6, %7 : vector<81x8xf32>
    %cst_7 = arith.constant dense<0.000000e+00> : vector<8xf32>
    %9 = vector.multi_reduction <add>, %8, %cst_7 [0] : vector<81x8xf32> to vector<8xf32>
    %10 = vector.shape_cast %9 : vector<8xf32> to vector<1x8xf32>
    %c0_8 = arith.constant 0 : index
    %c0_9 = arith.constant 0 : index
    %11 = vector.load %arg6[%c0_8, %c0_9] : memref<8x4xf32, #tpu.memory_space<vmem>>, vector<8x4xf32>
    %cst_10 = arith.constant dense<0.000000e+00> : vector<1x4xf32>
    %12 = tpu.matmul %10, %11, %cst_10 {dimension_numbers = #tpu.dot_dimension_numbers<[1], [0], [0], [1], [0, 0, 1, 1], [], []>} : vector<1x8xf32>, vector<8x4xf32>, vector<1x4xf32> -> vector<1x4xf32>
    %cst_11 = arith.constant 0.00617283955 : f32
    %13 = vector.broadcast %cst_11 : f32 to vector<1x4xf32>
    %14 = arith.mulf %12, %13 : vector<1x4xf32>
    %c0_12 = arith.constant 0 : index
    %c0_13 = arith.constant 0 : index
    %15 = vector.load %arg7[%c0_12, %c0_13] : memref<4x8xf32, #tpu.memory_space<vmem>>, vector<4x8xf32>
    %cst_14 = arith.constant dense<0.000000e+00> : vector<1x8xf32>
    %16 = tpu.matmul %14, %15, %cst_14 {dimension_numbers = #tpu.dot_dimension_numbers<[1], [0], [0], [1], [0, 0, 1, 1], [], []>} : vector<1x4xf32>, vector<4x8xf32>, vector<1x8xf32> -> vector<1x8xf32>
    %17 = vector.broadcast %16 : vector<1x8xf32> to vector<81x8xf32>
    %18 = arith.subf %8, %17 : vector<81x8xf32>
    %19 = arith.mulf %18, %18 : vector<81x8xf32>
    %cst_15 = arith.constant dense<0.000000e+00> : vector<8xf32>
    %20 = vector.multi_reduction <add>, %19, %cst_15 [0] : vector<81x8xf32> to vector<8xf32>
    %21 = vector.shape_cast %20 : vector<8xf32> to vector<1x8xf32>
    %c0_16 = arith.constant 0 : index
    %c0_17 = arith.constant 0 : index
    %22 = vector.load %arg6[%c0_16, %c0_17] : memref<8x4xf32, #tpu.memory_space<vmem>>, vector<8x4xf32>
    %cst_18 = arith.constant dense<0.000000e+00> : vector<1x4xf32>
    %23 = tpu.matmul %21, %22, %cst_18 {dimension_numbers = #tpu.dot_dimension_numbers<[1], [0], [0], [1], [0, 0, 1, 1], [], []>} : vector<1x8xf32>, vector<8x4xf32>, vector<1x4xf32> -> vector<1x4xf32>
    %cst_19 = arith.constant 0.00617283955 : f32
    %24 = vector.broadcast %cst_19 : f32 to vector<1x4xf32>
    %25 = arith.mulf %23, %24 : vector<1x4xf32>
    %c0_20 = arith.constant 0 : index
    %c0_21 = arith.constant 0 : index
    %26 = vector.load %arg7[%c0_20, %c0_21] : memref<4x8xf32, #tpu.memory_space<vmem>>, vector<4x8xf32>
    %cst_22 = arith.constant dense<0.000000e+00> : vector<1x8xf32>
    %27 = tpu.matmul %25, %26, %cst_22 {dimension_numbers = #tpu.dot_dimension_numbers<[1], [0], [0], [1], [0, 0, 1, 1], [], []>} : vector<1x4xf32>, vector<4x8xf32>, vector<1x8xf32> -> vector<1x8xf32>
    %cst_23 = arith.constant 9.99999974E-6 : f32
    %28 = vector.broadcast %cst_23 : f32 to vector<1x8xf32>
    %29 = arith.addf %27, %28 : vector<1x8xf32>
    %30 = math.rsqrt %29 : vector<1x8xf32>
    %31 = vector.broadcast %30 : vector<1x8xf32> to vector<81x8xf32>
    %32 = arith.mulf %18, %31 : vector<81x8xf32>
    %c0_24 = arith.constant 0 : index
    %c0_25 = arith.constant 0 : index
    %33 = vector.load %arg4[%c0_24, %c0_25] : memref<1x8xf32, #tpu.memory_space<vmem>>, vector<1x8xf32>
    %34 = vector.broadcast %33 : vector<1x8xf32> to vector<81x8xf32>
    %35 = arith.mulf %32, %34 : vector<81x8xf32>
    %c0_26 = arith.constant 0 : index
    %c0_27 = arith.constant 0 : index
    %36 = vector.load %arg5[%c0_26, %c0_27] : memref<1x8xf32, #tpu.memory_space<vmem>>, vector<1x8xf32>
    %37 = vector.broadcast %36 : vector<1x8xf32> to vector<81x8xf32>
    %38 = arith.addf %35, %37 : vector<81x8xf32>
    %39 = arith.truncf %38 : vector<81x8xf32> to vector<81x8xbf16>
    %c0_28 = arith.constant 0 : index
    %c0_29 = arith.constant 0 : index
    %c0_30 = arith.constant 0 : index
    %40 = vector.load %arg8[%c0_28, %c0_29, %c0_30] : memref<1x81x8xbf16, #tpu.memory_space<vmem>>, vector<1x81x8xbf16>
    %41 = vector.shape_cast %40 : vector<1x81x8xbf16> to vector<81x8xbf16>
    %42 = vector.shape_cast %39 : vector<81x8xbf16> to vector<1x81x8xbf16>
    tpu.vector_store %arg8[%c0_28, %c0_29, %c0_30], %42 {strides = array<i32>} : memref<1x81x8xbf16, #tpu.memory_space<vmem>>, vector<1x81x8xbf16>,
    return
  }
  func.func @transform_0(%arg0: i32) -> (i32, i32, i32) {
    %c0_i32 = arith.constant 0 : i32
    %c0_i32_0 = arith.constant 0 : i32
    %c0_i32_1 = arith.constant 0 : i32
    return %arg0, %c0_i32, %c0_i32_0 : i32, i32, i32
  }
  func.func @transform_1(%arg0: i32) -> (i32, i32) {
    %c0_i32 = arith.constant 0 : i32
    %c0_i32_0 = arith.constant 0 : i32
    %c0_i32_1 = arith.constant 0 : i32
    return %c0_i32, %c0_i32_0 : i32, i32
  }
  func.func @transform_2(%arg0: i32) -> (i32, i32) {
    %c0_i32 = arith.constant 0 : i32
    %c0_i32_0 = arith.constant 0 : i32
    %c0_i32_1 = arith.constant 0 : i32
    return %c0_i32, %c0_i32_0 : i32, i32
  }
  func.func @transform_3(%arg0: i32) -> (i32, i32) {
    %c0_i32 = arith.constant 0 : i32
    %c0_i32_0 = arith.constant 0 : i32
    %c0_i32_1 = arith.constant 0 : i32
    return %c0_i32, %c0_i32_0 : i32, i32
  }
  func.func @transform_4(%arg0: i32) -> (i32, i32) {
    %c0_i32 = arith.constant 0 : i32
    %c0_i32_0 = arith.constant 0 : i32
    %c0_i32_1 = arith.constant 0 : i32
    return %c0_i32, %c0_i32_0 : i32, i32
  }
  func.func @transform_5(%arg0: i32) -> (i32, i32) {
    %c0_i32 = arith.constant 0 : i32
    %c0_i32_0 = arith.constant 0 : i32
    %c0_i32_1 = arith.constant 0 : i32
    return %c0_i32, %c0_i32_0 : i32, i32
  }
  func.func @transform_6(%arg0: i32) -> (i32, i32) {
    %c0_i32 = arith.constant 0 : i32
    %c0_i32_0 = arith.constant 0 : i32
    %c0_i32_1 = arith.constant 0 : i32
    return %c0_i32, %c0_i32_0 : i32, i32
  }
  func.func @transform_7(%arg0: i32) -> (i32, i32, i32) {
    %c0_i32 = arith.constant 0 : i32
    %c0_i32_0 = arith.constant 0 : i32
    %c0_i32_1 = arith.constant 0 : i32
    return %arg0, %c0_i32, %c0_i32_0 : i32, i32, i32
  }
}

module attributes {stable_mosaic.version = 11 : i64} {
  func.func @_tail_kernel(%arg0: i32, %arg1: memref<6x648xbf16, #tpu.memory_space<vmem>>, %arg2: memref<648x32xbf16, #tpu.memory_space<vmem>>, %arg3: memref<1x32xf32, #tpu.memory_space<vmem>>, %arg4: memref<32x48xbf16, #tpu.memory_space<vmem>>, %arg5: memref<1x48xf32, #tpu.memory_space<vmem>>, %arg6: memref<16x48xf32, #tpu.memory_space<vmem>>, %arg7: memref<1x48xf32, #tpu.memory_space<vmem>>, %arg8: memref<16x200xbf16, #tpu.memory_space<vmem>>, %arg9: memref<1x200xf32, #tpu.memory_space<vmem>>, %arg10: memref<200x100xbf16, #tpu.memory_space<vmem>>, %arg11: memref<1x100xf32, #tpu.memory_space<vmem>>, %arg12: memref<100x4xf32, #tpu.memory_space<vmem>>, %arg13: memref<1x4xf32, #tpu.memory_space<vmem>>, %arg14: memref<3x2x4xf32, #tpu.memory_space<vmem>>, %arg15: memref<2x16xf32, #tpu.memory_space<vmem>>) attributes {dimension_semantics = [#tpu.dimension_semantics<arbitrary>], iteration_bounds = array<i64: 1>, scalar_prefetch = 0 : i64, scratch_operands = 0 : i64, tpu.core_type = #tpu.core_type<tc>, window_params = [{pipeline_mode = #tpu.pipeline_mode<synchronous>, transform_indices = @transform_0, window_bounds = array<i64: 6, 648>}, {pipeline_mode = #tpu.pipeline_mode<synchronous>, transform_indices = @transform_1, window_bounds = array<i64: 648, 32>}, {pipeline_mode = #tpu.pipeline_mode<synchronous>, transform_indices = @transform_2, window_bounds = array<i64: 1, 32>}, {pipeline_mode = #tpu.pipeline_mode<synchronous>, transform_indices = @transform_3, window_bounds = array<i64: 32, 48>}, {pipeline_mode = #tpu.pipeline_mode<synchronous>, transform_indices = @transform_4, window_bounds = array<i64: 1, 48>}, {pipeline_mode = #tpu.pipeline_mode<synchronous>, transform_indices = @transform_5, window_bounds = array<i64: 16, 48>}, {pipeline_mode = #tpu.pipeline_mode<synchronous>, transform_indices = @transform_6, window_bounds = array<i64: 1, 48>}, {pipeline_mode = #tpu.pipeline_mode<synchronous>, transform_indices = @transform_7, window_bounds = array<i64: 16, 200>}, {pipeline_mode = #tpu.pipeline_mode<synchronous>, transform_indices = @transform_8, window_bounds = array<i64: 1, 200>}, {pipeline_mode = #tpu.pipeline_mode<synchronous>, transform_indices = @transform_9, window_bounds = array<i64: 200, 100>}, {pipeline_mode = #tpu.pipeline_mode<synchronous>, transform_indices = @transform_10, window_bounds = array<i64: 1, 100>}, {pipeline_mode = #tpu.pipeline_mode<synchronous>, transform_indices = @transform_11, window_bounds = array<i64: 100, 4>}, {pipeline_mode = #tpu.pipeline_mode<synchronous>, transform_indices = @transform_12, window_bounds = array<i64: 1, 4>}, {pipeline_mode = #tpu.pipeline_mode<synchronous>, transform_indices = @transform_13, window_bounds = array<i64: 3, 2, 4>}, {pipeline_mode = #tpu.pipeline_mode<synchronous>, transform_indices = @transform_14, window_bounds = array<i64: 2, 16>}]} {
    %c0 = arith.constant 0 : index
    %c0_0 = arith.constant 0 : index
    %0 = vector.load %arg1[%c0, %c0_0] : memref<6x648xbf16, #tpu.memory_space<vmem>>, vector<6x648xbf16>
    %c0_1 = arith.constant 0 : index
    %c0_2 = arith.constant 0 : index
    %1 = vector.load %arg2[%c0_1, %c0_2] : memref<648x32xbf16, #tpu.memory_space<vmem>>, vector<648x32xbf16>
    %cst = arith.constant dense<0.000000e+00> : vector<6x32xf32>
    %2 = tpu.matmul %0, %1, %cst {dimension_numbers = #tpu.dot_dimension_numbers<[1], [0], [0], [1], [0, 0, 1, 1], [], []>} : vector<6x648xbf16>, vector<648x32xbf16>, vector<6x32xf32> -> vector<6x32xf32>
    %c0_3 = arith.constant 0 : index
    %c0_4 = arith.constant 0 : index
    %3 = vector.load %arg3[%c0_3, %c0_4] : memref<1x32xf32, #tpu.memory_space<vmem>>, vector<1x32xf32>
    %4 = vector.broadcast %3 : vector<1x32xf32> to vector<6x32xf32>
    %5 = arith.addf %2, %4 : vector<6x32xf32>
    %cst_5 = arith.constant 0.000000e+00 : f32
    %6 = vector.broadcast %cst_5 : f32 to vector<6x32xf32>
    %7 = arith.maximumf %5, %6 : vector<6x32xf32>
    %8 = arith.truncf %7 : vector<6x32xf32> to vector<6x32xbf16>
    %c0_6 = arith.constant 0 : index
    %c0_7 = arith.constant 0 : index
    %9 = vector.load %arg4[%c0_6, %c0_7] : memref<32x48xbf16, #tpu.memory_space<vmem>>, vector<32x48xbf16>
    %cst_8 = arith.constant dense<0.000000e+00> : vector<6x48xf32>
    %10 = tpu.matmul %8, %9, %cst_8 {dimension_numbers = #tpu.dot_dimension_numbers<[1], [0], [0], [1], [0, 0, 1, 1], [], []>} : vector<6x32xbf16>, vector<32x48xbf16>, vector<6x48xf32> -> vector<6x48xf32>
    %c0_9 = arith.constant 0 : index
    %c0_10 = arith.constant 0 : index
    %11 = vector.load %arg5[%c0_9, %c0_10] : memref<1x48xf32, #tpu.memory_space<vmem>>, vector<1x48xf32>
    %12 = vector.broadcast %11 : vector<1x48xf32> to vector<6x48xf32>
    %13 = arith.addf %10, %12 : vector<6x48xf32>
    %c0_11 = arith.constant 0 : index
    %c0_12 = arith.constant 0 : index
    %14 = vector.load %arg6[%c0_11, %c0_12] : memref<16x48xf32, #tpu.memory_space<vmem>>, vector<16x48xf32>
    %c0_13 = arith.constant 0 : index
    %c0_14 = arith.constant 0 : index
    %15 = vector.load %arg7[%c0_13, %c0_14] : memref<1x48xf32, #tpu.memory_space<vmem>>, vector<1x48xf32>
    %c0_15 = arith.constant 0 : index
    %c0_16 = arith.constant 0 : index
    %16 = vector.load %arg8[%c0_15, %c0_16] : memref<16x200xbf16, #tpu.memory_space<vmem>>, vector<16x200xbf16>
    %c0_17 = arith.constant 0 : index
    %c0_18 = arith.constant 0 : index
    %17 = vector.load %arg9[%c0_17, %c0_18] : memref<1x200xf32, #tpu.memory_space<vmem>>, vector<1x200xf32>
    %c0_19 = arith.constant 0 : index
    %c0_20 = arith.constant 0 : index
    %18 = vector.load %arg10[%c0_19, %c0_20] : memref<200x100xbf16, #tpu.memory_space<vmem>>, vector<200x100xbf16>
    %c0_21 = arith.constant 0 : index
    %c0_22 = arith.constant 0 : index
    %19 = vector.load %arg11[%c0_21, %c0_22] : memref<1x100xf32, #tpu.memory_space<vmem>>, vector<1x100xf32>
    %c0_23 = arith.constant 0 : index
    %c0_24 = arith.constant 0 : index
    %20 = vector.load %arg12[%c0_23, %c0_24] : memref<100x4xf32, #tpu.memory_space<vmem>>, vector<100x4xf32>
    %c0_25 = arith.constant 0 : index
    %c0_26 = arith.constant 0 : index
    %21 = vector.load %arg13[%c0_25, %c0_26] : memref<1x4xf32, #tpu.memory_space<vmem>>, vector<1x4xf32>
    %cst_27 = arith.constant 0.000000e+00 : f32
    %22 = vector.broadcast %cst_27 : f32 to vector<2x16xf32>
    %23 = vector.extract_strided_slice %13 {offsets = [0, 0], sizes = [2, 48], strides = [1, 1]} : vector<6x48xf32> to vector<2x48xf32>
    %cst_28 = arith.constant dense<0.000000e+00> : vector<2x48xf32>
    %24 = tpu.matmul %22, %14, %cst_28 {dimension_numbers = #tpu.dot_dimension_numbers<[1], [0], [0], [1], [0, 0, 1, 1], [], []>} : vector<2x16xf32>, vector<16x48xf32>, vector<2x48xf32> -> vector<2x48xf32>
    %25 = vector.broadcast %15 : vector<1x48xf32> to vector<2x48xf32>
    %26 = arith.addf %24, %25 : vector<2x48xf32>
    %27 = vector.extract_strided_slice %23 {offsets = [0, 0], sizes = [2, 16], strides = [1, 1]} : vector<2x48xf32> to vector<2x16xf32>
    %28 = vector.extract_strided_slice %26 {offsets = [0, 0], sizes = [2, 16], strides = [1, 1]} : vector<2x48xf32> to vector<2x16xf32>
    %29 = arith.addf %27, %28 : vector<2x16xf32>
    %30 = arith.negf %29 : vector<2x16xf32>
    %31 = math.exp %30 : vector<2x16xf32>
    %cst_29 = arith.constant 1.000000e+00 : f32
    %32 = vector.broadcast %cst_29 : f32 to vector<2x16xf32>
    %33 = arith.addf %32, %31 : vector<2x16xf32>
    %34 = arith.divf %32, %33 : vector<2x16xf32>
    %35 = vector.extract_strided_slice %23 {offsets = [0, 16], sizes = [2, 16], strides = [1, 1]} : vector<2x48xf32> to vector<2x16xf32>
    %36 = vector.extract_strided_slice %26 {offsets = [0, 16], sizes = [2, 16], strides = [1, 1]} : vector<2x48xf32> to vector<2x16xf32>
    %37 = arith.addf %35, %36 : vector<2x16xf32>
    %38 = arith.negf %37 : vector<2x16xf32>
    %39 = math.exp %38 : vector<2x16xf32>
    %cst_30 = arith.constant 1.000000e+00 : f32
    %40 = vector.broadcast %cst_30 : f32 to vector<2x16xf32>
    %41 = arith.addf %40, %39 : vector<2x16xf32>
    %42 = arith.divf %40, %41 : vector<2x16xf32>
    %43 = vector.extract_strided_slice %23 {offsets = [0, 32], sizes = [2, 16], strides = [1, 1]} : vector<2x48xf32> to vector<2x16xf32>
    %44 = vector.extract_strided_slice %26 {offsets = [0, 32], sizes = [2, 16], strides = [1, 1]} : vector<2x48xf32> to vector<2x16xf32>
    %45 = arith.mulf %34, %44 : vector<2x16xf32>
    %46 = arith.addf %43, %45 : vector<2x16xf32>
    %47 = math.tanh %46 : vector<2x16xf32>
    %cst_31 = arith.constant 1.000000e+00 : f32
    %48 = vector.broadcast %cst_31 : f32 to vector<2x16xf32>
    %49 = arith.subf %48, %42 : vector<2x16xf32>
    %50 = arith.mulf %49, %47 : vector<2x16xf32>
    %51 = arith.mulf %42, %22 : vector<2x16xf32>
    %52 = arith.addf %50, %51 : vector<2x16xf32>
    %cst_32 = arith.constant 0.000000e+00 : f32
    %53 = vector.broadcast %cst_32 : f32 to vector<2x16xf32>
    %54 = arith.maximumf %52, %53 : vector<2x16xf32>
    %55 = arith.truncf %54 : vector<2x16xf32> to vector<2x16xbf16>
    %cst_33 = arith.constant dense<0.000000e+00> : vector<2x200xf32>
    %56 = tpu.matmul %55, %16, %cst_33 {dimension_numbers = #tpu.dot_dimension_numbers<[1], [0], [0], [1], [0, 0, 1, 1], [], []>} : vector<2x16xbf16>, vector<16x200xbf16>, vector<2x200xf32> -> vector<2x200xf32>
    %57 = vector.broadcast %17 : vector<1x200xf32> to vector<2x200xf32>
    %58 = arith.addf %56, %57 : vector<2x200xf32>
    %cst_34 = arith.constant 0.000000e+00 : f32
    %59 = vector.broadcast %cst_34 : f32 to vector<2x200xf32>
    %60 = arith.maximumf %58, %59 : vector<2x200xf32>
    %61 = arith.truncf %60 : vector<2x200xf32> to vector<2x200xbf16>
    %cst_35 = arith.constant dense<0.000000e+00> : vector<2x100xf32>
    %62 = tpu.matmul %61, %18, %cst_35 {dimension_numbers = #tpu.dot_dimension_numbers<[1], [0], [0], [1], [0, 0, 1, 1], [], []>} : vector<2x200xbf16>, vector<200x100xbf16>, vector<2x100xf32> -> vector<2x100xf32>
    %63 = vector.broadcast %19 : vector<1x100xf32> to vector<2x100xf32>
    %64 = arith.addf %62, %63 : vector<2x100xf32>
    %cst_36 = arith.constant 0.000000e+00 : f32
    %65 = vector.broadcast %cst_36 : f32 to vector<2x100xf32>
    %66 = arith.maximumf %64, %65 : vector<2x100xf32>
    %cst_37 = arith.constant dense<0.000000e+00> : vector<2x4xf32>
    %67 = tpu.matmul %66, %20, %cst_37 {dimension_numbers = #tpu.dot_dimension_numbers<[1], [0], [0], [1], [0, 0, 1, 1], [], []>} : vector<2x100xf32>, vector<100x4xf32>, vector<2x4xf32> -> vector<2x4xf32>
    %68 = vector.broadcast %21 : vector<1x4xf32> to vector<2x4xf32>
    %69 = arith.addf %67, %68 : vector<2x4xf32>
    %70 = math.tanh %69 : vector<2x4xf32>
    %c0_38 = arith.constant 0 : index
    %c0_39 = arith.constant 0 : index
    %c0_40 = arith.constant 0 : index
    %71 = vector.load %arg14[%c0_38, %c0_39, %c0_40] : memref<3x2x4xf32, #tpu.memory_space<vmem>>, vector<1x2x4xf32>
    %72 = vector.shape_cast %71 : vector<1x2x4xf32> to vector<2x4xf32>
    %73 = vector.shape_cast %70 : vector<2x4xf32> to vector<1x2x4xf32>
    tpu.vector_store %arg14[%c0_38, %c0_39, %c0_40], %73 {strides = array<i32>} : memref<3x2x4xf32, #tpu.memory_space<vmem>>, vector<1x2x4xf32>,
    %74 = vector.extract_strided_slice %13 {offsets = [2, 0], sizes = [2, 48], strides = [1, 1]} : vector<6x48xf32> to vector<2x48xf32>
    %cst_41 = arith.constant dense<0.000000e+00> : vector<2x48xf32>
    %75 = tpu.matmul %52, %14, %cst_41 {dimension_numbers = #tpu.dot_dimension_numbers<[1], [0], [0], [1], [0, 0, 1, 1], [], []>} : vector<2x16xf32>, vector<16x48xf32>, vector<2x48xf32> -> vector<2x48xf32>
    %76 = vector.broadcast %15 : vector<1x48xf32> to vector<2x48xf32>
    %77 = arith.addf %75, %76 : vector<2x48xf32>
    %78 = vector.extract_strided_slice %74 {offsets = [0, 0], sizes = [2, 16], strides = [1, 1]} : vector<2x48xf32> to vector<2x16xf32>
    %79 = vector.extract_strided_slice %77 {offsets = [0, 0], sizes = [2, 16], strides = [1, 1]} : vector<2x48xf32> to vector<2x16xf32>
    %80 = arith.addf %78, %79 : vector<2x16xf32>
    %81 = arith.negf %80 : vector<2x16xf32>
    %82 = math.exp %81 : vector<2x16xf32>
    %cst_42 = arith.constant 1.000000e+00 : f32
    %83 = vector.broadcast %cst_42 : f32 to vector<2x16xf32>
    %84 = arith.addf %83, %82 : vector<2x16xf32>
    %85 = arith.divf %83, %84 : vector<2x16xf32>
    %86 = vector.extract_strided_slice %74 {offsets = [0, 16], sizes = [2, 16], strides = [1, 1]} : vector<2x48xf32> to vector<2x16xf32>
    %87 = vector.extract_strided_slice %77 {offsets = [0, 16], sizes = [2, 16], strides = [1, 1]} : vector<2x48xf32> to vector<2x16xf32>
    %88 = arith.addf %86, %87 : vector<2x16xf32>
    %89 = arith.negf %88 : vector<2x16xf32>
    %90 = math.exp %89 : vector<2x16xf32>
    %cst_43 = arith.constant 1.000000e+00 : f32
    %91 = vector.broadcast %cst_43 : f32 to vector<2x16xf32>
    %92 = arith.addf %91, %90 : vector<2x16xf32>
    %93 = arith.divf %91, %92 : vector<2x16xf32>
    %94 = vector.extract_strided_slice %74 {offsets = [0, 32], sizes = [2, 16], strides = [1, 1]} : vector<2x48xf32> to vector<2x16xf32>
    %95 = vector.extract_strided_slice %77 {offsets = [0, 32], sizes = [2, 16], strides = [1, 1]} : vector<2x48xf32> to vector<2x16xf32>
    %96 = arith.mulf %85, %95 : vector<2x16xf32>
    %97 = arith.addf %94, %96 : vector<2x16xf32>
    %98 = math.tanh %97 : vector<2x16xf32>
    %cst_44 = arith.constant 1.000000e+00 : f32
    %99 = vector.broadcast %cst_44 : f32 to vector<2x16xf32>
    %100 = arith.subf %99, %93 : vector<2x16xf32>
    %101 = arith.mulf %100, %98 : vector<2x16xf32>
    %102 = arith.mulf %93, %52 : vector<2x16xf32>
    %103 = arith.addf %101, %102 : vector<2x16xf32>
    %cst_45 = arith.constant 0.000000e+00 : f32
    %104 = vector.broadcast %cst_45 : f32 to vector<2x16xf32>
    %105 = arith.maximumf %103, %104 : vector<2x16xf32>
    %106 = arith.truncf %105 : vector<2x16xf32> to vector<2x16xbf16>
    %cst_46 = arith.constant dense<0.000000e+00> : vector<2x200xf32>
    %107 = tpu.matmul %106, %16, %cst_46 {dimension_numbers = #tpu.dot_dimension_numbers<[1], [0], [0], [1], [0, 0, 1, 1], [], []>} : vector<2x16xbf16>, vector<16x200xbf16>, vector<2x200xf32> -> vector<2x200xf32>
    %108 = vector.broadcast %17 : vector<1x200xf32> to vector<2x200xf32>
    %109 = arith.addf %107, %108 : vector<2x200xf32>
    %cst_47 = arith.constant 0.000000e+00 : f32
    %110 = vector.broadcast %cst_47 : f32 to vector<2x200xf32>
    %111 = arith.maximumf %109, %110 : vector<2x200xf32>
    %112 = arith.truncf %111 : vector<2x200xf32> to vector<2x200xbf16>
    %cst_48 = arith.constant dense<0.000000e+00> : vector<2x100xf32>
    %113 = tpu.matmul %112, %18, %cst_48 {dimension_numbers = #tpu.dot_dimension_numbers<[1], [0], [0], [1], [0, 0, 1, 1], [], []>} : vector<2x200xbf16>, vector<200x100xbf16>, vector<2x100xf32> -> vector<2x100xf32>
    %114 = vector.broadcast %19 : vector<1x100xf32> to vector<2x100xf32>
    %115 = arith.addf %113, %114 : vector<2x100xf32>
    %cst_49 = arith.constant 0.000000e+00 : f32
    %116 = vector.broadcast %cst_49 : f32 to vector<2x100xf32>
    %117 = arith.maximumf %115, %116 : vector<2x100xf32>
    %cst_50 = arith.constant dense<0.000000e+00> : vector<2x4xf32>
    %118 = tpu.matmul %117, %20, %cst_50 {dimension_numbers = #tpu.dot_dimension_numbers<[1], [0], [0], [1], [0, 0, 1, 1], [], []>} : vector<2x100xf32>, vector<100x4xf32>, vector<2x4xf32> -> vector<2x4xf32>
    %119 = vector.broadcast %21 : vector<1x4xf32> to vector<2x4xf32>
    %120 = arith.addf %118, %119 : vector<2x4xf32>
    %121 = math.tanh %120 : vector<2x4xf32>
    %c1 = arith.constant 1 : index
    %c0_51 = arith.constant 0 : index
    %c0_52 = arith.constant 0 : index
    %122 = vector.load %arg14[%c1, %c0_51, %c0_52] : memref<3x2x4xf32, #tpu.memory_space<vmem>>, vector<1x2x4xf32>
    %123 = vector.shape_cast %122 : vector<1x2x4xf32> to vector<2x4xf32>
    %124 = vector.shape_cast %121 : vector<2x4xf32> to vector<1x2x4xf32>
    tpu.vector_store %arg14[%c1, %c0_51, %c0_52], %124 {strides = array<i32>} : memref<3x2x4xf32, #tpu.memory_space<vmem>>, vector<1x2x4xf32>,
    %125 = vector.extract_strided_slice %13 {offsets = [4, 0], sizes = [2, 48], strides = [1, 1]} : vector<6x48xf32> to vector<2x48xf32>
    %cst_53 = arith.constant dense<0.000000e+00> : vector<2x48xf32>
    %126 = tpu.matmul %103, %14, %cst_53 {dimension_numbers = #tpu.dot_dimension_numbers<[1], [0], [0], [1], [0, 0, 1, 1], [], []>} : vector<2x16xf32>, vector<16x48xf32>, vector<2x48xf32> -> vector<2x48xf32>
    %127 = vector.broadcast %15 : vector<1x48xf32> to vector<2x48xf32>
    %128 = arith.addf %126, %127 : vector<2x48xf32>
    %129 = vector.extract_strided_slice %125 {offsets = [0, 0], sizes = [2, 16], strides = [1, 1]} : vector<2x48xf32> to vector<2x16xf32>
    %130 = vector.extract_strided_slice %128 {offsets = [0, 0], sizes = [2, 16], strides = [1, 1]} : vector<2x48xf32> to vector<2x16xf32>
    %131 = arith.addf %129, %130 : vector<2x16xf32>
    %132 = arith.negf %131 : vector<2x16xf32>
    %133 = math.exp %132 : vector<2x16xf32>
    %cst_54 = arith.constant 1.000000e+00 : f32
    %134 = vector.broadcast %cst_54 : f32 to vector<2x16xf32>
    %135 = arith.addf %134, %133 : vector<2x16xf32>
    %136 = arith.divf %134, %135 : vector<2x16xf32>
    %137 = vector.extract_strided_slice %125 {offsets = [0, 16], sizes = [2, 16], strides = [1, 1]} : vector<2x48xf32> to vector<2x16xf32>
    %138 = vector.extract_strided_slice %128 {offsets = [0, 16], sizes = [2, 16], strides = [1, 1]} : vector<2x48xf32> to vector<2x16xf32>
    %139 = arith.addf %137, %138 : vector<2x16xf32>
    %140 = arith.negf %139 : vector<2x16xf32>
    %141 = math.exp %140 : vector<2x16xf32>
    %cst_55 = arith.constant 1.000000e+00 : f32
    %142 = vector.broadcast %cst_55 : f32 to vector<2x16xf32>
    %143 = arith.addf %142, %141 : vector<2x16xf32>
    %144 = arith.divf %142, %143 : vector<2x16xf32>
    %145 = vector.extract_strided_slice %125 {offsets = [0, 32], sizes = [2, 16], strides = [1, 1]} : vector<2x48xf32> to vector<2x16xf32>
    %146 = vector.extract_strided_slice %128 {offsets = [0, 32], sizes = [2, 16], strides = [1, 1]} : vector<2x48xf32> to vector<2x16xf32>
    %147 = arith.mulf %136, %146 : vector<2x16xf32>
    %148 = arith.addf %145, %147 : vector<2x16xf32>
    %149 = math.tanh %148 : vector<2x16xf32>
    %cst_56 = arith.constant 1.000000e+00 : f32
    %150 = vector.broadcast %cst_56 : f32 to vector<2x16xf32>
    %151 = arith.subf %150, %144 : vector<2x16xf32>
    %152 = arith.mulf %151, %149 : vector<2x16xf32>
    %153 = arith.mulf %144, %103 : vector<2x16xf32>
    %154 = arith.addf %152, %153 : vector<2x16xf32>
    %cst_57 = arith.constant 0.000000e+00 : f32
    %155 = vector.broadcast %cst_57 : f32 to vector<2x16xf32>
    %156 = arith.maximumf %154, %155 : vector<2x16xf32>
    %157 = arith.truncf %156 : vector<2x16xf32> to vector<2x16xbf16>
    %cst_58 = arith.constant dense<0.000000e+00> : vector<2x200xf32>
    %158 = tpu.matmul %157, %16, %cst_58 {dimension_numbers = #tpu.dot_dimension_numbers<[1], [0], [0], [1], [0, 0, 1, 1], [], []>} : vector<2x16xbf16>, vector<16x200xbf16>, vector<2x200xf32> -> vector<2x200xf32>
    %159 = vector.broadcast %17 : vector<1x200xf32> to vector<2x200xf32>
    %160 = arith.addf %158, %159 : vector<2x200xf32>
    %cst_59 = arith.constant 0.000000e+00 : f32
    %161 = vector.broadcast %cst_59 : f32 to vector<2x200xf32>
    %162 = arith.maximumf %160, %161 : vector<2x200xf32>
    %163 = arith.truncf %162 : vector<2x200xf32> to vector<2x200xbf16>
    %cst_60 = arith.constant dense<0.000000e+00> : vector<2x100xf32>
    %164 = tpu.matmul %163, %18, %cst_60 {dimension_numbers = #tpu.dot_dimension_numbers<[1], [0], [0], [1], [0, 0, 1, 1], [], []>} : vector<2x200xbf16>, vector<200x100xbf16>, vector<2x100xf32> -> vector<2x100xf32>
    %165 = vector.broadcast %19 : vector<1x100xf32> to vector<2x100xf32>
    %166 = arith.addf %164, %165 : vector<2x100xf32>
    %cst_61 = arith.constant 0.000000e+00 : f32
    %167 = vector.broadcast %cst_61 : f32 to vector<2x100xf32>
    %168 = arith.maximumf %166, %167 : vector<2x100xf32>
    %cst_62 = arith.constant dense<0.000000e+00> : vector<2x4xf32>
    %169 = tpu.matmul %168, %20, %cst_62 {dimension_numbers = #tpu.dot_dimension_numbers<[1], [0], [0], [1], [0, 0, 1, 1], [], []>} : vector<2x100xf32>, vector<100x4xf32>, vector<2x4xf32> -> vector<2x4xf32>
    %170 = vector.broadcast %21 : vector<1x4xf32> to vector<2x4xf32>
    %171 = arith.addf %169, %170 : vector<2x4xf32>
    %172 = math.tanh %171 : vector<2x4xf32>
    %c2 = arith.constant 2 : index
    %c0_63 = arith.constant 0 : index
    %c0_64 = arith.constant 0 : index
    %173 = vector.load %arg14[%c2, %c0_63, %c0_64] : memref<3x2x4xf32, #tpu.memory_space<vmem>>, vector<1x2x4xf32>
    %174 = vector.shape_cast %173 : vector<1x2x4xf32> to vector<2x4xf32>
    %175 = vector.shape_cast %172 : vector<2x4xf32> to vector<1x2x4xf32>
    tpu.vector_store %arg14[%c2, %c0_63, %c0_64], %175 {strides = array<i32>} : memref<3x2x4xf32, #tpu.memory_space<vmem>>, vector<1x2x4xf32>,
    %c0_65 = arith.constant 0 : index
    %c0_66 = arith.constant 0 : index
    %176 = vector.load %arg15[%c0_65, %c0_66] : memref<2x16xf32, #tpu.memory_space<vmem>>, vector<2x16xf32>
    tpu.vector_store %arg15[%c0_65, %c0_66], %154 {strides = array<i32>} : memref<2x16xf32, #tpu.memory_space<vmem>>, vector<2x16xf32>,
    return
  }
  func.func @transform_0(%arg0: i32) -> (i32, i32) {
    %c0_i32 = arith.constant 0 : i32
    %c0_i32_0 = arith.constant 0 : i32
    %c0_i32_1 = arith.constant 0 : i32
    return %c0_i32, %c0_i32_0 : i32, i32
  }
  func.func @transform_1(%arg0: i32) -> (i32, i32) {
    %c0_i32 = arith.constant 0 : i32
    %c0_i32_0 = arith.constant 0 : i32
    %c0_i32_1 = arith.constant 0 : i32
    return %c0_i32, %c0_i32_0 : i32, i32
  }
  func.func @transform_2(%arg0: i32) -> (i32, i32) {
    %c0_i32 = arith.constant 0 : i32
    %c0_i32_0 = arith.constant 0 : i32
    %c0_i32_1 = arith.constant 0 : i32
    return %c0_i32, %c0_i32_0 : i32, i32
  }
  func.func @transform_3(%arg0: i32) -> (i32, i32) {
    %c0_i32 = arith.constant 0 : i32
    %c0_i32_0 = arith.constant 0 : i32
    %c0_i32_1 = arith.constant 0 : i32
    return %c0_i32, %c0_i32_0 : i32, i32
  }
  func.func @transform_4(%arg0: i32) -> (i32, i32) {
    %c0_i32 = arith.constant 0 : i32
    %c0_i32_0 = arith.constant 0 : i32
    %c0_i32_1 = arith.constant 0 : i32
    return %c0_i32, %c0_i32_0 : i32, i32
  }
  func.func @transform_5(%arg0: i32) -> (i32, i32) {
    %c0_i32 = arith.constant 0 : i32
    %c0_i32_0 = arith.constant 0 : i32
    %c0_i32_1 = arith.constant 0 : i32
    return %c0_i32, %c0_i32_0 : i32, i32
  }
  func.func @transform_6(%arg0: i32) -> (i32, i32) {
    %c0_i32 = arith.constant 0 : i32
    %c0_i32_0 = arith.constant 0 : i32
    %c0_i32_1 = arith.constant 0 : i32
    return %c0_i32, %c0_i32_0 : i32, i32
  }
  func.func @transform_7(%arg0: i32) -> (i32, i32) {
    %c0_i32 = arith.constant 0 : i32
    %c0_i32_0 = arith.constant 0 : i32
    %c0_i32_1 = arith.constant 0 : i32
    return %c0_i32, %c0_i32_0 : i32, i32
  }
  func.func @transform_8(%arg0: i32) -> (i32, i32) {
    %c0_i32 = arith.constant 0 : i32
    %c0_i32_0 = arith.constant 0 : i32
    %c0_i32_1 = arith.constant 0 : i32
    return %c0_i32, %c0_i32_0 : i32, i32
  }
  func.func @transform_9(%arg0: i32) -> (i32, i32) {
    %c0_i32 = arith.constant 0 : i32
    %c0_i32_0 = arith.constant 0 : i32
    %c0_i32_1 = arith.constant 0 : i32
    return %c0_i32, %c0_i32_0 : i32, i32
  }
  func.func @transform_10(%arg0: i32) -> (i32, i32) {
    %c0_i32 = arith.constant 0 : i32
    %c0_i32_0 = arith.constant 0 : i32
    %c0_i32_1 = arith.constant 0 : i32
    return %c0_i32, %c0_i32_0 : i32, i32
  }
  func.func @transform_11(%arg0: i32) -> (i32, i32) {
    %c0_i32 = arith.constant 0 : i32
    %c0_i32_0 = arith.constant 0 : i32
    %c0_i32_1 = arith.constant 0 : i32
    return %c0_i32, %c0_i32_0 : i32, i32
  }
  func.func @transform_12(%arg0: i32) -> (i32, i32) {
    %c0_i32 = arith.constant 0 : i32
    %c0_i32_0 = arith.constant 0 : i32
    %c0_i32_1 = arith.constant 0 : i32
    return %c0_i32, %c0_i32_0 : i32, i32
  }
  func.func @transform_13(%arg0: i32) -> (i32, i32, i32) {
    %c0_i32 = arith.constant 0 : i32
    %c0_i32_0 = arith.constant 0 : i32
    %c0_i32_1 = arith.constant 0 : i32
    %c0_i32_2 = arith.constant 0 : i32
    return %c0_i32, %c0_i32_0, %c0_i32_1 : i32, i32, i32
  }
  func.func @transform_14(%arg0: i32) -> (i32, i32) {
    %c0_i32 = arith.constant 0 : i32
    %c0_i32_0 = arith.constant 0 : i32
    %c0_i32_1 = arith.constant 0 : i32
    return %c0_i32, %c0_i32_0 : i32, i32
  }
}

</mosaic_0001>

<llo_original>
// kernel: actor_rgb_forward.3
$region0: #{actor_rgb_forward.3}
  #allocation0 [shape = 'u32[]', space=smem, size = 0x4, offset = 0x4, fixed_abs, tag = 'smem constant byte address 0x4 - core index']
  #allocation1 [shape = 'u32[72,128]{1,0:T(1,128)}', space=vmem, size = 0x9000, scoped, tag = 'internal scratch']
  %s0 = inlined_call_operand.vmem [shape: bf16[6,400,192], index: 0, kind: input, shape index: {}]
  %s1 = inlined_call_operand.vmem [shape: bf16[192,8], index: 1, kind: input, shape index: {}]
  %s2 = inlined_call_operand.vmem [shape: f32[1,8], index: 2, kind: input, shape index: {}]
  %s3 = inlined_call_operand.vmem [shape: f32[1,8], index: 3, kind: input, shape index: {}]
  %s4 = inlined_call_operand.vmem [shape: f32[1,8], index: 4, kind: input, shape index: {}]
  %s5 = inlined_call_operand.vmem [shape: f32[8,4], index: 5, kind: input, shape index: {}]
  %s6 = inlined_call_operand.vmem [shape: f32[4,8], index: 6, kind: input, shape index: {}]
  %s7 = inlined_call_operand.vmem [shape: bf16[6,400,8], index: 7, kind: output, shape index: {}]
  %s8 = sld [smem:[#allocation0]]
  $region61: #{actor_rgb_forward.3} parent=0
    _
  %s10 = ssub.s32 1, %s8
  %s11 = scalar_select 0, %s10, %s8
  loop: start=0, step=1, limit=8
  $region2: #{actor_rgb_forward.3} parent=0 // loop_pre_header
    _
  $region3: #{actor_rgb_forward.3} parent=0 // loop_header
    %s13 = sphi 0, %s17
    %p14 = scmp.ge.s32.totalorder %s13, 8
    %s23 = sphi 0, %s25
    %s26 = sphi 0, %s23
    %s27 = sphi 0, %s26
    %s43 = sphi 0, %s27
    %s47 = sphi 0, %s47
    %s49 = sphi 0, %s47
    %s50 = sphi 0, %s49
    %s64 = sphi 0, %s50
    %s68 = sphi 0, %s68
    %s70 = sphi 0, %s68
    %s71 = sphi 0, %s70
    %s85 = sphi 0, %s71
    %s89 = sphi 0, %s89
    %s91 = sphi 0, %s89
    %s92 = sphi 0, %s91
    %s106 = sphi 0, %s92
    %s110 = sphi 0, %s110
    %s112 = sphi 0, %s110
    %s113 = sphi 0, %s112
    %s127 = sphi 0, %s113
    %s131 = sphi 0, %s131
    %s133 = sphi 0, %s131
    %s134 = sphi 0, %s133
    %s148 = sphi 0, %s134
    %s152 = sphi 0, %s152
    %s154 = sphi 0, %s152
    %s155 = sphi 0, %s154
    %s169 = sphi 0, %s155
    %s175 = sphi 0, %s177
    %s178 = sphi 0, %s175
    %s179 = sphi 0, %s178
    %s195 = sphi 0, %s179
  $region4: #{actor_rgb_forward.3} parent=0 // loop_header_branch
    %16 = sbr.rel (%p14) target = $region8
  $region5: #{actor_rgb_forward.3} parent=0 // loop_body
    %s18 = ssub.s32 %s13, 1
    %s19 = ssub.s32 %s13, 2
    %s20 = sadd.s32 %s13, 1
    %s21 = ssub.s32 %s13, %s20
    %p22 = scmp.eq.s32.totalorder %s21, 0
    %s24 = sadd.s32 %s23, 1
    %s25 = scalar_select %p22, %s23, %s24
    %p28 = pneg %p22
    %p29 = scmp.eq.s32.totalorder %s13, 5
    %p30 = por %p28, %p29
    %p31 = scmp.ne.s32.totalorder %s23, %s26
    %p32 = scmp.eq.s32.totalorder %s13, 0
    %p33 = por %p31, %p32
    %p34 = scmp.ne.s32.totalorder %s23, %s26
    %p35 = scmp.eq.s32.totalorder %s18, 5
    %p36 = por %p34, %p35
    %p37 = scmp.ne.s32.totalorder %s26, %s27
    %p38 = scmp.eq.s32.totalorder %s18, 0
    %p39 = por %p37, %p38
    %p40 = scmp.ne.s32.totalorder %s26, %s27
    %p41 = scmp.eq.s32.totalorder %s19, 5
    %p42 = por %p40, %p41
    %p44 = scmp.ne.s32.totalorder %s27, %s43
    %p45 = scmp.eq.s32.totalorder %s19, 0
    %p46 = por %p44, %p45
    %s48 = sadd.s32 %s47, 1
    %p51 = scmp.eq.s32.totalorder %s13, 5
    %p52 = scmp.ne.s32.totalorder %s47, %s49
    %p53 = scmp.eq.s32.totalorder %s13, 0
    %p54 = por %p52, %p53
    %p55 = scmp.ne.s32.totalorder %s47, %s49
    %p56 = scmp.eq.s32.totalorder %s18, 5
    %p57 = por %p55, %p56
    %p58 = scmp.ne.s32.totalorder %s49, %s50
    %p59 = scmp.eq.s32.totalorder %s18, 0
    %p60 = por %p58, %p59
    %p61 = scmp.ne.s32.totalorder %s49, %s50
    %p62 = scmp.eq.s32.totalorder %s19, 5
    %p63 = por %p61, %p62
    %p65 = scmp.ne.s32.totalorder %s50, %s64
    %p66 = scmp.eq.s32.totalorder %s19, 0
    %p67 = por %p65, %p66
    %s69 = sadd.s32 %s68, 1
    %p72 = scmp.eq.s32.totalorder %s13, 5
    %p73 = scmp.ne.s32.totalorder %s68, %s70
    %p74 = scmp.eq.s32.totalorder %s13, 0
    %p75 = por %p73, %p74
    %p76 = scmp.ne.s32.totalorder %s68, %s70
    %p77 = scmp.eq.s32.totalorder %s18, 5
    %p78 = por %p76, %p77
    %p79 = scmp.ne.s32.totalorder %s70, %s71
    %p80 = scmp.eq.s32.totalorder %s18, 0
    %p81 = por %p79, %p80
    %p82 = scmp.ne.s32.totalorder %s70, %s71
    %p83 = scmp.eq.s32.totalorder %s19, 5
    %p84 = por %p82, %p83
    %p86 = scmp.ne.s32.totalorder %s71, %s85
    %p87 = scmp.eq.s32.totalorder %s19, 0
    %p88 = por %p86, %p87
    %s90 = sadd.s32 %s89, 1
    %p93 = scmp.eq.s32.totalorder %s13, 5
    %p94 = scmp.ne.s32.totalorder %s89, %s91
    %p95 = scmp.eq.s32.totalorder %s13, 0
    %p96 = por %p94, %p95
    %p97 = scmp.ne.s32.totalorder %s89, %s91
    %p98 = scmp.eq.s32.totalorder %s18, 5
    %p99 = por %p97, %p98
    %p100 = scmp.ne.s32.totalorder %s91, %s92
    %p101 = scmp.eq.s32.totalorder %s18, 0
    %p102 = por %p100, %p101
    %p103 = scmp.ne.s32.totalorder %s91, %s92
    %p104 = scmp.eq.s32.totalorder %s19, 5
    %p105 = por %p103, %p104
    %p107 = scmp.ne.s32.totalorder %s92, %s106
    %p108 = scmp.eq.s32.totalorder %s19, 0
    %p109 = por %p107, %p108
    %s111 = sadd.s32 %s110, 1
    %p114 = scmp.eq.s32.totalorder %s13, 5
    %p115 = scmp.ne.s32.totalorder %s110, %s112
    %p116 = scmp.eq.s32.totalorder %s13, 0
    %p117 = por %p115, %p116
    %p118 = scmp.ne.s32.totalorder %s110, %s112
    %p119 = scmp.eq.s32.totalorder %s18, 5
    %p120 = por %p118, %p119
    %p121 = scmp.ne.s32.totalorder %s112, %s113
    %p122 = scmp.eq.s32.totalorder %s18, 0
    %p123 = por %p121, %p122
    %p124 = scmp.ne.s32.totalorder %s112, %s113
    %p125 = scmp.eq.s32.totalorder %s19, 5
    %p126 = por %p124, %p125
    %p128 = scmp.ne.s32.totalorder %s113, %s127
    %p129 = scmp.eq.s32.totalorder %s19, 0
    %p130 = por %p128, %p129
    %s132 = sadd.s32 %s131, 1
    %p135 = scmp.eq.s32.totalorder %s13, 5
    %p136 = scmp.ne.s32.totalorder %s131, %s133
    %p137 = scmp.eq.s32.totalorder %s13, 0
    %p138 = por %p136, %p137
    %p139 = scmp.ne.s32.totalorder %s131, %s133
    %p140 = scmp.eq.s32.totalorder %s18, 5
    %p141 = por %p139, %p140
    %p142 = scmp.ne.s32.totalorder %s133, %s134
    %p143 = scmp.eq.s32.totalorder %s18, 0
    %p144 = por %p142, %p143
    %p145 = scmp.ne.s32.totalorder %s133, %s134
    %p146 = scmp.eq.s32.totalorder %s19, 5
    %p147 = por %p145, %p146
    %p149 = scmp.ne.s32.totalorder %s134, %s148
    %p150 = scmp.eq.s32.totalorder %s19, 0
    %p151 = por %p149, %p150
    %s153 = sadd.s32 %s152, 1
    %p156 = scmp.eq.s32.totalorder %s13, 5
    %p157 = scmp.ne.s32.totalorder %s152, %s154
    %p158 = scmp.eq.s32.totalorder %s13, 0
    %p159 = por %p157, %p158
    %p160 = scmp.ne.s32.totalorder %s152, %s154
    %p161 = scmp.eq.s32.totalorder %s18, 5
    %p162 = por %p160, %p161
    %p163 = scmp.ne.s32.totalorder %s154, %s155
    %p164 = scmp.eq.s32.totalorder %s18, 0
    %p165 = por %p163, %p164
    %p166 = scmp.ne.s32.totalorder %s154, %s155
    %p167 = scmp.eq.s32.totalorder %s19, 5
    %p168 = por %p166, %p167
    %p170 = scmp.ne.s32.totalorder %s155, %s169
    %p171 = scmp.eq.s32.totalorder %s19, 0
    %p172 = por %p170, %p171
    %s173 = ssub.s32 %s13, %s20
    %p174 = scmp.eq.s32.totalorder %s173, 0
    %s176 = sadd.s32 %s175, 1
    %s177 = scalar_select %p174, %s175, %s176
    %p180 = pneg %p174
    %p181 = scmp.eq.s32.totalorder %s13, 5
    %p182 = por %p180, %p181
    %p183 = scmp.ne.s32.totalorder %s175, %s178
    %p184 = scmp.eq.s32.totalorder %s13, 0
    %p185 = por %p183, %p184
    %p186 = scmp.ne.s32.totalorder %s175, %s178
    %p187 = scmp.eq.s32.totalorder %s18, 5
    %p188 = por %p186, %p187
    %p189 = scmp.ne.s32.totalorder %s178, %s179
    %p190 = scmp.eq.s32.totalorder %s18, 0
    %p191 = por %p189, %p190
    %p192 = scmp.ne.s32.totalorder %s178, %s179
    %p193 = scmp.eq.s32.totalorder %s19, 5
    %p194 = por %p192, %p193
    %p196 = scmp.ne.s32.totalorder %s179, %s195
    %p197 = scmp.eq.s32.totalorder %s19, 0
    %p198 = por %p196, %p197
    %p199 = scmp.le.s32.totalorder 1, %s13
    %p200 = scmp.lt.s32.totalorder %s13, 7
    %p201 = pnand %p199, %p200
    %p202 = pneg %p201
    // Predicated region
    $region9: #{actor_rgb_forward.3} parent=5 // pred_check
      _
    $region10: #{actor_rgb_forward.3} parent=5 // pred_check_branch
      %204 = sbr.rel (%p201) target = $region12
    $region11: #{actor_rgb_forward.3} parent=5 // pred_region
      %s205 = ssub.s32 %s13, 1
      // Predicated region
      $region13: #{actor_rgb_forward.3} parent=11 // pred_check
        %p206 = pneg %p60
      $region14: #{actor_rgb_forward.3} parent=11 // pred_check_branch
        %208 = sbr.rel (%p206) target = $region16
      $region15: #{actor_rgb_forward.3} parent=11 // pred_region
        _
      $region16: #{actor_rgb_forward.3} parent=11 // pred_fallthru
        _
      // Predicated region
      $region17: #{actor_rgb_forward.3} parent=11 // pred_check
        %p209 = pneg %p81
      $region18: #{actor_rgb_forward.3} parent=11 // pred_check_branch
        %211 = sbr.rel (%p209) target = $region20
      $region19: #{actor_rgb_forward.3} parent=11 // pred_region
        _
      $region20: #{actor_rgb_forward.3} parent=11 // pred_fallthru
        _
      // Predicated region
      $region21: #{actor_rgb_forward.3} parent=11 // pred_check
        %p212 = pneg %p102
      $region22: #{actor_rgb_forward.3} parent=11 // pred_check_branch
        %214 = sbr.rel (%p212) target = $region24
      $region23: #{actor_rgb_forward.3} parent=11 // pred_region
        _
      $region24: #{actor_rgb_forward.3} parent=11 // pred_fallthru
        _
      // Predicated region
      $region25: #{actor_rgb_forward.3} parent=11 // pred_check
        %p215 = pneg %p123
      $region26: #{actor_rgb_forward.3} parent=11 // pred_check_branch
        %217 = sbr.rel (%p215) target = $region28
      $region27: #{actor_rgb_forward.3} parent=11 // pred_region
        _
      $region28: #{actor_rgb_forward.3} parent=11 // pred_fallthru
        _
      // Predicated region
      $region29: #{actor_rgb_forward.3} parent=11 // pred_check
        %p218 = pneg %p144
      $region30: #{actor_rgb_forward.3} parent=11 // pred_check_branch
        %220 = sbr.rel (%p218) target = $region32
      $region31: #{actor_rgb_forward.3} parent=11 // pred_region
        _
      $region32: #{actor_rgb_forward.3} parent=11 // pred_fallthru
        _
      // Predicated region
      $region33: #{actor_rgb_forward.3} parent=11 // pred_check
        %p221 = pneg %p165
      $region34: #{actor_rgb_forward.3} parent=11 // pred_check_branch
        %223 = sbr.rel (%p221) target = $region36
      $region35: #{actor_rgb_forward.3} parent=11 // pred_region
        _
      $region36: #{actor_rgb_forward.3} parent=11 // pred_fallthru
        _
    $region12: #{actor_rgb_forward.3} parent=5 // pred_fallthru
      _
    %p224 = scmp.lt.s32.totalorder %s13, 6
    // Predicated region
    $region37: #{actor_rgb_forward.3} parent=5 // pred_check
      %p225 = pneg %p224
    $region38: #{actor_rgb_forward.3} parent=5 // pred_check_branch
      %227 = sbr.rel (%p225) target = $region40
    $region39: #{actor_rgb_forward.3} parent=5 // pred_region
      // Predicated region
      $region41: #{actor_rgb_forward.3} parent=39 // pred_check
        %p228 = pneg %p33
      $region42: #{actor_rgb_forward.3} parent=39 // pred_check_branch
        %230 = sbr.rel (%p228) target = $region44
      $region43: #{actor_rgb_forward.3} parent=39 // pred_region
        %p231 = scmp.lt.s32.totalorder %s13, 5
        %s232 = scalar_select %p231, %s13, 5
        %s233 = smul.addr %s232, 100
        %s234 = smul.addr %s233, 4
        %s235 = scalar_lea.vmem %s0, %s234
      $region44: #{actor_rgb_forward.3} parent=39 // pred_fallthru
        _
    $region40: #{actor_rgb_forward.3} parent=5 // pred_fallthru
      _
    %p236 = scmp.le.s32.totalorder 1, %s13
    %p237 = scmp.lt.s32.totalorder %s13, 7
    %p238 = pnand %p236, %p237
    %p239 = pneg %p238
    // Predicated region
    $region45: #{actor_rgb_forward.3} parent=5 // pred_check
      _
    $region46: #{actor_rgb_forward.3} parent=5 // pred_check_branch
      %241 = sbr.rel (%p238) target = $region48
    $region47: #{actor_rgb_forward.3} parent=5 // pred_region
      %s242 = ssub.s32 %s13, 1
      %p243 = scmp.lt.s32.totalorder %s18, 5
      %s244 = scalar_select %p243, %s18, 5
      %s245 = smul.addr %s244, 100
      %s246 = smul.addr %s245, 4
      %s247 = scalar_lea.vmem %s0, %s246
      %p248 = pneg %p39
      %p249 = pneg %p36
      %p250 = pneg %p60
      %p251 = pneg %p57
      %p252 = pneg %p81
      %p253 = pneg %p78
      %p254 = pneg %p102
      %p255 = pneg %p99
      %p256 = pneg %p123
      %p257 = pneg %p120
      %p258 = pneg %p144
      %p259 = pneg %p141
      %p260 = pneg %p165
      %p261 = pneg %p162
      %p262 = pneg %p191
      %p263 = pneg %p188
      %p264 = scmp.lt.s32.totalorder %s18, 5
      %s265 = scalar_select %p264, %s18, 5
      %s266 = smul.addr %s265, 50
      %s267 = smul.addr %s266, 4
      %s268 = scalar_lea.vmem %s7, %s267
      %p269 = scmp.lt.s32.totalorder %s18, 5
      %s270 = scalar_select %p269, %s18, 5
      %s271 = smul.addr %s270, 100
      %s272 = smul.addr %s271, 4
      %s273 = scalar_lea.vmem %s0, %s272
      %p274 = scmp.lt.s32.totalorder %s18, 5
      %s275 = scalar_select %p274, %s18, 5
      %s276 = smul.addr %s275, 50
      %s277 = smul.addr %s276, 4
      %s278 = scalar_lea.vmem %s7, %s277
      %v280 = vld [vmem:[%s273] sm:$0xff]
      %v281 = vld [vmem:[%s273 + $0x8] sm:$0xff]
      %v282 = vld [vmem:[%s273 + $0x10] sm:$0xff]
      %v283 = vld [vmem:[%s273 + $0x18] sm:$0xff]
      %v284 = vld [vmem:[%s273 + $0x20] sm:$0xff]
      %v285 = vld [vmem:[%s273 + $0x28] sm:$0xff]
      %v286 = vld [vmem:[%s273 + $0x30] sm:$0xff]
      %v287 = vld [vmem:[%s273 + $0x38] sm:$0xff]
      %v288 = vld [vmem:[%s273 + $0x40] sm:$0xff]
      %v289 = vld [vmem:[%s273 + $0x48] sm:$0xff]
      %v290 = vld [vmem:[%s273 + $0x50] sm:$0xff]
      %v291 = vld [vmem:[%s273 + $0x58] sm:$0xff]
      %v292 = vld [vmem:[%s273 + $0x60] sm:$0xff]
      %v293 = vld [vmem:[%s273 + $0x68] sm:$0xff]
      %v294 = vld [vmem:[%s273 + $0x70] sm:$0xff]
      %v295 = vld [vmem:[%s273 + $0x78] sm:$0xff]
      %v296 = vld [vmem:[%s273 + $0x80] sm:$0xff]
      %v297 = vld [vmem:[%s273 + $0x88] sm:$0xff]
      %v298 = vld [vmem:[%s273 + $0x90] sm:$0xff]
      %v299 = vld [vmem:[%s273 + $0x98] sm:$0xff]
      %v300 = vld [vmem:[%s273 + $0xa0] sm:$0xff]
      %v301 = vld [vmem:[%s273 + $0xa8] sm:$0xff]
      %v302 = vld [vmem:[%s273 + $0xb0] sm:$0xff]
      %v303 = vld [vmem:[%s273 + $0xb8] sm:$0xff]
      %v304 = vld [vmem:[%s273 + $0xc0] sm:$0xff]
      %v305 = vld [vmem:[%s273 + $0xc8] sm:$0xff]
      %v306 = vld [vmem:[%s273 + $0xd0] sm:$0xff]
      %v307 = vld [vmem:[%s273 + $0xd8] sm:$0xff]
      %v308 = vld [vmem:[%s273 + $0xe0] sm:$0xff]
      %v309 = vld [vmem:[%s273 + $0xe8] sm:$0xff]
      %v310 = vld [vmem:[%s273 + $0xf0] sm:$0xff]
      %v311 = vld [vmem:[%s273 + $0xf8] sm:$0xff]
      %v312 = vld [vmem:[%s273 + $0x100] sm:$0xff]
      %v313 = vld [vmem:[%s273 + $0x108] sm:$0xff]
      %v314 = vld [vmem:[%s273 + $0x110] sm:$0xff]
      %v315 = vld [vmem:[%s273 + $0x118] sm:$0xff]
      %v316 = vld [vmem:[%s273 + $0x120] sm:$0xff]
      %v317 = vld [vmem:[%s273 + $0x128] sm:$0xff]
      %v318 = vld [vmem:[%s273 + $0x130] sm:$0xff]
      %v319 = vld [vmem:[%s273 + $0x138] sm:$0xff]
      %v320 = vld [vmem:[%s273 + $0x140] sm:$0xff]
      %v321 = vld [vmem:[%s273 + $0x148] sm:$0xff]
      %v322 = vld [vmem:[%s273 + $0x150] sm:$0xff]
      %v323 = vld [vmem:[%s273 + $0x158] sm:$0xff]
      %v324 = vld [vmem:[%s273 + $0x160] sm:$0xff]
      %v325 = vld [vmem:[%s273 + $0x168] sm:$0xff]
      %v326 = vld [vmem:[%s273 + $0x170] sm:$0xff]
      %v327 = vld [vmem:[%s273 + $0x178] sm:$0xff]
      %v328 = vld [vmem:[%s273 + $0x180] sm:$0xff]
      %v329 = vld [vmem:[%s273 + $0x188] sm:$0xff]
      %v330 = vld [vmem:[%s1] sm:$0xf]
      %v331 = vld [vmem:[%s1 + $0x4] sm:$0xf]
      %v332 = vld [vmem:[%s1 + $0x8] sm:$0xf]
      %v333 = vld [vmem:[%s1 + $0xc] sm:$0xf]
      %v334 = vld [vmem:[%s1 + $0x10] sm:$0xf]
      %v335 = vld [vmem:[%s1 + $0x14] sm:$0xf]
      %v336 = vld [vmem:[%s1 + $0x18] sm:$0xf]
      %v337 = vld [vmem:[%s1 + $0x1c] sm:$0xf]
      %v338 = vld [vmem:[%s1 + $0x20] sm:$0xf]
      %v339 = vld [vmem:[%s1 + $0x24] sm:$0xf]
      %v340 = vld [vmem:[%s1 + $0x28] sm:$0xf]
      %v341 = vld [vmem:[%s1 + $0x2c] sm:$0xf]
      %v342 = vld [vmem:[%s1 + $0x30] sm:$0xf]
      %v343 = vld [vmem:[%s1 + $0x34] sm:$0xf]
      %v344 = vld [vmem:[%s1 + $0x38] sm:$0xf]
      %v345 = vld [vmem:[%s1 + $0x3c] sm:$0xf]
      %v346 = vld [vmem:[%s1 + $0x40] sm:$0xf]
      %v347 = vld [vmem:[%s1 + $0x44] sm:$0xf]
      %v348 = vld [vmem:[%s1 + $0x48] sm:$0xf]
      %v349 = vld [vmem:[%s1 + $0x4c] sm:$0xf]
      %v350 = vld [vmem:[%s1 + $0x50] sm:$0xf]
      %v351 = vld [vmem:[%s1 + $0x54] sm:$0xf]
      %v352 = vld [vmem:[%s1 + $0x58] sm:$0xf]
      %v353 = vld [vmem:[%s1 + $0x5c] sm:$0xf]
      %v354 = vld [vmem:[%s2] sm:$0x1]
      %v356 = vperm.slane %v354, 0
      %v408 = vunpack.c.l.b16 %v280
      %v409 = vunpack.c.h.b16 %v280
      %v410 = vunpack.c.l.b16 %v281
      %v411 = vunpack.c.h.b16 %v281
      %v412 = vunpack.c.l.b16 %v282
      %v413 = vunpack.c.h.b16 %v282
      %v414 = vunpack.c.l.b16 %v283
      %v415 = vunpack.c.h.b16 %v283
      %v416 = vunpack.c.l.b16 %v284
      %v417 = vunpack.c.h.b16 %v284
      %v418 = vunpack.c.l.b16 %v285
      %v419 = vunpack.c.h.b16 %v285
      %v420 = vunpack.c.l.b16 %v286
      %v421 = vunpack.c.h.b16 %v286
      %v422 = vunpack.c.l.b16 %v287
      %v423 = vunpack.c.h.b16 %v287
      %v424 = vunpack.c.l.b16 %v288
      %v425 = vunpack.c.h.b16 %v288
      %v426 = vunpack.c.l.b16 %v289
      %v427 = vunpack.c.h.b16 %v289
      %v428 = vunpack.c.l.b16 %v290
      %v429 = vunpack.c.h.b16 %v290
      %v430 = vunpack.c.l.b16 %v291
      %v431 = vunpack.c.h.b16 %v291
      %v432 = vunpack.c.l.b16 %v292
      %v433 = vunpack.c.h.b16 %v292
      %v434 = vunpack.c.l.b16 %v293
      %v435 = vunpack.c.h.b16 %v293
      %v436 = vunpack.c.l.b16 %v294
      %v437 = vunpack.c.h.b16 %v294
      %v438 = vunpack.c.l.b16 %v295
      %v439 = vunpack.c.h.b16 %v295
      %v440 = vunpack.c.l.b16 %v296
      %v441 = vunpack.c.h.b16 %v296
      %v442 = vunpack.c.l.b16 %v297
      %v443 = vunpack.c.h.b16 %v297
      %v444 = vunpack.c.l.b16 %v298
      %v445 = vunpack.c.h.b16 %v298
      %v446 = vunpack.c.l.b16 %v299
      %v447 = vunpack.c.h.b16 %v299
      %v448 = vunpack.c.l.b16 %v300
      %v449 = vunpack.c.h.b16 %v300
      %v450 = vunpack.c.l.b16 %v301
      %v451 = vunpack.c.h.b16 %v301
      %v452 = vunpack.c.l.b16 %v302
      %v453 = vunpack.c.h.b16 %v302
      %v454 = vunpack.c.l.b16 %v303
      %v455 = vunpack.c.h.b16 %v303
      %v456 = vunpack.c.l.b16 %v304
      %v457 = vunpack.c.h.b16 %v304
      %v458 = vunpack.c.l.b16 %v305
      %v459 = vunpack.c.h.b16 %v305
      %v460 = vunpack.c.l.b16 %v306
      %v461 = vunpack.c.h.b16 %v306
      %v462 = vunpack.c.l.b16 %v307
      %v463 = vunpack.c.h.b16 %v307
      %v464 = vunpack.c.l.b16 %v308
      %v465 = vunpack.c.h.b16 %v308
      %v466 = vunpack.c.l.b16 %v309
      %v467 = vunpack.c.h.b16 %v309
      %v468 = vunpack.c.l.b16 %v310
      %v469 = vunpack.c.h.b16 %v310
      %v470 = vunpack.c.l.b16 %v311
      %v471 = vunpack.c.h.b16 %v311
      %v472 = vunpack.c.l.b16 %v312
      %v473 = vunpack.c.h.b16 %v312
      %v474 = vunpack.c.l.b16 %v313
      %v475 = vunpack.c.h.b16 %v313
      %v476 = vunpack.c.l.b16 %v314
      %v477 = vunpack.c.h.b16 %v314
      %v478 = vunpack.c.l.b16 %v315
      %v479 = vunpack.c.h.b16 %v315
      %v480 = vunpack.c.l.b16 %v316
      %v481 = vunpack.c.h.b16 %v316
      %v482 = vunpack.c.l.b16 %v317
      %v483 = vunpack.c.h.b16 %v317
      %v484 = vunpack.c.l.b16 %v318
      %v485 = vunpack.c.h.b16 %v318
      %v486 = vunpack.c.l.b16 %v319
      %v487 = vunpack.c.h.b16 %v319
      %v488 = vunpack.c.l.b16 %v320
      %v489 = vunpack.c.h.b16 %v320
      %v490 = vunpack.c.l.b16 %v321
      %v491 = vunpack.c.h.b16 %v321
      %v492 = vunpack.c.l.b16 %v322
      %v493 = vunpack.c.h.b16 %v322
      %v494 = vunpack.c.l.b16 %v323
      %v495 = vunpack.c.h.b16 %v323
      %v496 = vunpack.c.l.b16 %v324
      %v497 = vunpack.c.h.b16 %v324
      %v498 = vunpack.c.l.b16 %v325
      %v499 = vunpack.c.h.b16 %v325
      %v500 = vunpack.c.l.b16 %v326
      %v501 = vunpack.c.h.b16 %v326
      %v502 = vunpack.c.l.b16 %v327
      %v503 = vunpack.c.h.b16 %v327
      %v504 = vunpack.c.l.b16 %v328
      %v505 = vunpack.c.h.b16 %v328
      %v506 = vunpack.c.l.b16 %v329
      %v507 = vunpack.c.h.b16 %v329
      %v508 = vpack.c.b16 %v410, %v408
      %v509 = vpack.c.b16 %v411, %v409
      %v510 = vpack.c.b16 %v414, %v412
      %v511 = vpack.c.b16 %v415, %v413
      %v512 = vpack.c.b16 %v418, %v416
      %v513 = vpack.c.b16 %v419, %v417
      %v514 = vpack.c.b16 %v422, %v420
      %v515 = vpack.c.b16 %v423, %v421
      %v516 = vpack.c.b16 %v426, %v424
      %v517 = vpack.c.b16 %v427, %v425
      %v518 = vpack.c.b16 %v430, %v428
      %v519 = vpack.c.b16 %v431, %v429
      %v520 = vpack.c.b16 %v434, %v432
      %v521 = vpack.c.b16 %v435, %v433
      %v522 = vpack.c.b16 %v438, %v436
      %v523 = vpack.c.b16 %v439, %v437
      %v524 = vpack.c.b16 %v442, %v440
      %v525 = vpack.c.b16 %v443, %v441
      %v526 = vpack.c.b16 %v446, %v444
      %v527 = vpack.c.b16 %v447, %v445
      %v528 = vpack.c.b16 %v450, %v448
      %v529 = vpack.c.b16 %v451, %v449
      %v530 = vpack.c.b16 %v454, %v452
      %v531 = vpack.c.b16 %v455, %v453
      %v532 = vpack.c.b16 %v458, %v456
      %v533 = vpack.c.b16 %v459, %v457
      %v534 = vpack.c.b16 %v462, %v460
      %v535 = vpack.c.b16 %v463, %v461
      %v536 = vpack.c.b16 %v466, %v464
      %v537 = vpack.c.b16 %v467, %v465
      %v538 = vpack.c.b16 %v470, %v468
      %v539 = vpack.c.b16 %v471, %v469
      %v540 = vpack.c.b16 %v474, %v472
      %v541 = vpack.c.b16 %v475, %v473
      %v542 = vpack.c.b16 %v478, %v476
      %v543 = vpack.c.b16 %v479, %v477
      %v544 = vpack.c.b16 %v482, %v480
      %v545 = vpack.c.b16 %v483, %v481
      %v546 = vpack.c.b16 %v486, %v484
      %v547 = vpack.c.b16 %v487, %v485
      %v548 = vpack.c.b16 %v490, %v488
      %v549 = vpack.c.b16 %v491, %v489
      %v550 = vpack.c.b16 %v494, %v492
      %v551 = vpack.c.b16 %v495, %v493
      %v552 = vpack.c.b16 %v498, %v496
      %v553 = vpack.c.b16 %v499, %v497
      %v554 = vpack.c.b16 %v502, %v500
      %v555 = vpack.c.b16 %v503, %v501
      %v556 = vpack.c.b16 %v506, %v504
      %v557 = vpack.c.b16 %v507, %v505
      %v607 = vunpack.c.l.b16 %v330
      %v608 = vunpack.c.l.b16 %v331
      %v609 = vunpack.c.l.b16 %v332
      %v610 = vunpack.c.l.b16 %v333
      %v611 = vunpack.c.l.b16 %v334
      %v612 = vunpack.c.l.b16 %v335
      %v613 = vunpack.c.l.b16 %v336
      %v614 = vunpack.c.l.b16 %v337
      %v615 = vunpack.c.l.b16 %v338
      %v616 = vunpack.c.l.b16 %v339
      %v617 = vunpack.c.l.b16 %v340
      %v618 = vunpack.c.l.b16 %v341
      %v619 = vunpack.c.l.b16 %v342
      %v620 = vunpack.c.l.b16 %v343
      %v621 = vunpack.c.l.b16 %v344
      %v622 = vunpack.c.l.b16 %v345
      %v623 = vunpack.c.l.b16 %v346
      %v624 = vunpack.c.l.b16 %v347
      %v625 = vunpack.c.l.b16 %v348
      %v626 = vunpack.c.l.b16 %v349
      %v627 = vunpack.c.l.b16 %v350
      %v628 = vunpack.c.l.b16 %v351
      %v629 = vunpack.c.l.b16 %v352
      %v630 = vunpack.c.l.b16 %v353
      %v631 = vpack.c.b16 %v608, %v607
      %v632 = vpack.c.b16 %v610, %v609
      %v633 = vpack.c.b16 %v612, %v611
      %v634 = vpack.c.b16 %v614, %v613
      %v635 = vpack.c.b16 %v616, %v615
      %v636 = vpack.c.b16 %v618, %v617
      %v637 = vpack.c.b16 %v620, %v619
      %v638 = vpack.c.b16 %v622, %v621
      %v639 = vpack.c.b16 %v624, %v623
      %v640 = vpack.c.b16 %v626, %v625
      %v641 = vpack.c.b16 %v628, %v627
      %v642 = vpack.c.b16 %v630, %v629
      %vm655 = vcmask 523264
      %v657 = vsel %vm655, %v509, 0
      %v660 = vsel %vm655, %v511, 0
      %v663 = vsel %vm655, %v513, 0
      %v666 = vsel %vm655, %v515, 0
      %v669 = vsel %vm655, %v517, 0
      %v672 = vsel %vm655, %v519, 0
      %v675 = vsel %vm655, %v521, 0
      %v678 = vsel %vm655, %v523, 0
      %v681 = vsel %vm655, %v525, 0
      %v684 = vsel %vm655, %v527, 0
      %v687 = vsel %vm655, %v529, 0
      %v690 = vsel %vm655, %v531, 0
      %v693 = vsel %vm655, %v533, 0
      %v696 = vsel %vm655, %v535, 0
      %v699 = vsel %vm655, %v537, 0
      %v702 = vsel %vm655, %v539, 0
      %v705 = vsel %vm655, %v541, 0
      %v708 = vsel %vm655, %v543, 0
      %v711 = vsel %vm655, %v545, 0
      %v714 = vsel %vm655, %v547, 0
      %v717 = vsel %vm655, %v549, 0
      %v720 = vsel %vm655, %v551, 0
      %v723 = vsel %vm655, %v553, 0
      %v726 = vsel %vm655, %v555, 0
      %v729 = vsel %vm655, %v557, 0
      %731 = vmatpush.bf16.msra.mxu0 %v638
      %732 = vmatpush.bf16.msra.mxu0 %v637
      %733 = vmatpush.bf16.msra.mxu0 %v636
      %734 = vmatpush.bf16.msra.mxu0 %v635
      %735 = vmatpush.bf16.msra.mxu0 %v634
      %736 = vmatpush.bf16.msra.mxu0 %v633
      %737 = vmatpush.bf16.msra.mxu0 %v632
      %738 = vmatpush.bf16.msra.mxu0 %v631
      %739 = vmatmul.bf16.gmra.mxu0 %v508
      %v740 = vpop.f32.mrf.mxu0
      %v741 = vadd.f32 %v356, %v740
      %v742 = vpop.f32.mrf.mxu0
      %v743 = vadd.f32 %v356, %v742
      %744 = vmatmul.bf16.gmra.mxu0 %v510
      %v745 = vpop.f32.mrf.mxu0
      %v746 = vadd.f32 %v356, %v745
      %v747 = vpop.f32.mrf.mxu0
      %v748 = vadd.f32 %v356, %v747
      %749 = vmatmul.bf16.gmra.mxu0 %v512
      %v750 = vpop.f32.mrf.mxu0
      %v751 = vadd.f32 %v356, %v750
      %v752 = vpop.f32.mrf.mxu0
      %v753 = vadd.f32 %v356, %v752
      %754 = vmatmul.bf16.gmra.mxu0 %v514
      %v755 = vpop.f32.mrf.mxu0
      %v756 = vadd.f32 %v356, %v755
      %v757 = vpop.f32.mrf.mxu0
      %v758 = vadd.f32 %v356, %v757
      %759 = vmatmul.bf16.gmra.mxu0 %v516
      %v760 = vpop.f32.mrf.mxu0
      %v761 = vadd.f32 %v356, %v760
      %v762 = vpop.f32.mrf.mxu0
      %v763 = vadd.f32 %v356, %v762
      %764 = vmatmul.bf16.gmra.mxu0 %v518
      %v765 = vpop.f32.mrf.mxu0
      %v766 = vadd.f32 %v356, %v765
      %v767 = vpop.f32.mrf.mxu0
      %v768 = vadd.f32 %v356, %v767
      %769 = vmatmul.bf16.gmra.mxu0 %v520
      %v770 = vpop.f32.mrf.mxu0
      %v771 = vadd.f32 %v356, %v770
      %v772 = vpop.f32.mrf.mxu0
      %v773 = vadd.f32 %v356, %v772
      %774 = vmatmul.bf16.gmra.mxu0 %v522
      %v775 = vpop.f32.mrf.mxu0
      %v776 = vadd.f32 %v356, %v775
      %v777 = vpop.f32.mrf.mxu0
      %v778 = vadd.f32 %v356, %v777
      %779 = vmatmul.bf16.gmra.mxu0 %v524
      %v780 = vpop.f32.mrf.mxu0
      %v781 = vadd.f32 %v356, %v780
      %v782 = vpop.f32.mrf.mxu0
      %v783 = vadd.f32 %v356, %v782
      %784 = vmatmul.bf16.gmra.mxu0 %v526
      %v785 = vpop.f32.mrf.mxu0
      %v786 = vadd.f32 %v356, %v785
      %v787 = vpop.f32.mrf.mxu0
      %v788 = vadd.f32 %v356, %v787
      %789 = vmatmul.bf16.gmra.mxu0 %v528
      %v790 = vpop.f32.mrf.mxu0
      %v791 = vadd.f32 %v356, %v790
      %v792 = vpop.f32.mrf.mxu0
      %v793 = vadd.f32 %v356, %v792
      %794 = vmatmul.bf16.gmra.mxu0 %v530
      %v795 = vpop.f32.mrf.mxu0
      %v796 = vadd.f32 %v356, %v795
      %v797 = vpop.f32.mrf.mxu0
      %v798 = vadd.f32 %v356, %v797
      %799 = vmatmul.bf16.gmra.mxu0 %v532
      %v800 = vpop.f32.mrf.mxu0
      %v801 = vadd.f32 %v356, %v800
      %v802 = vpop.f32.mrf.mxu0
      %v803 = vadd.f32 %v356, %v802
      %804 = vmatmul.bf16.gmra.mxu0 %v534
      %v805 = vpop.f32.mrf.mxu0
      %v806 = vadd.f32 %v356, %v805
      %v807 = vpop.f32.mrf.mxu0
      %v808 = vadd.f32 %v356, %v807
      %809 = vmatmul.bf16.gmra.mxu0 %v536
      %v810 = vpop.f32.mrf.mxu0
      %v811 = vadd.f32 %v356, %v810
      %v812 = vpop.f32.mrf.mxu0
      %v813 = vadd.f32 %v356, %v812
      %814 = vmatmul.bf16.gmra.mxu0 %v538
      %v815 = vpop.f32.mrf.mxu0
      %v816 = vadd.f32 %v356, %v815
      %v817 = vpop.f32.mrf.mxu0
      %v818 = vadd.f32 %v356, %v817
      %819 = vmatmul.bf16.gmra.mxu0 %v540
      %v820 = vpop.f32.mrf.mxu0
      %v821 = vadd.f32 %v356, %v820
      %v822 = vpop.f32.mrf.mxu0
      %v823 = vadd.f32 %v356, %v822
      %824 = vmatmul.bf16.gmra.mxu0 %v542
      %v825 = vpop.f32.mrf.mxu0
      %v826 = vadd.f32 %v356, %v825
      %v827 = vpop.f32.mrf.mxu0
      %v828 = vadd.f32 %v356, %v827
      %829 = vmatmul.bf16.gmra.mxu0 %v544
      %v830 = vpop.f32.mrf.mxu0
      %v831 = vadd.f32 %v356, %v830
      %v832 = vpop.f32.mrf.mxu0
      %v833 = vadd.f32 %v356, %v832
      %834 = vmatmul.bf16.gmra.mxu0 %v546
      %v835 = vpop.f32.mrf.mxu0
      %v836 = vadd.f32 %v356, %v835
      %v837 = vpop.f32.mrf.mxu0
      %v838 = vadd.f32 %v356, %v837
      %839 = vmatmul.bf16.gmra.mxu0 %v548
      %v840 = vpop.f32.mrf.mxu0
      %v841 = vadd.f32 %v356, %v840
      %v842 = vpop.f32.mrf.mxu0
      %v843 = vadd.f32 %v356, %v842
      %844 = vmatmul.bf16.gmra.mxu0 %v550
      %v845 = vpop.f32.mrf.mxu0
      %v846 = vadd.f32 %v356, %v845
      %v847 = vpop.f32.mrf.mxu0
      %v848 = vadd.f32 %v356, %v847
      %849 = vmatmul.bf16.gmra.mxu0 %v552
      %v850 = vpop.f32.mrf.mxu0
      %v851 = vadd.f32 %v356, %v850
      %v852 = vpop.f32.mrf.mxu0
      %v853 = vadd.f32 %v356, %v852
      %854 = vmatmul.bf16.gmra.mxu0 %v554
      %v855 = vpop.f32.mrf.mxu0
      %v856 = vadd.f32 %v356, %v855
      %v857 = vpop.f32.mrf.mxu0
      %v858 = vadd.f32 %v356, %v857
      %859 = vmatmul.bf16.gmra.mxu0 %v556
      %v860 = vpop.f32.mrf.mxu0
      %v861 = vadd.f32 %v356, %v860
      %v862 = vpop.f32.mrf.mxu0
      %v863 = vadd.f32 %v356, %v862
      %864 = vdwg.mxu0
      %865 = vmatpush.bf16.msra.mxu0 0
      %866 = vmatpush.bf16.msra.mxu0 0
      %867 = vmatpush.bf16.msra.mxu0 0
      %868 = vmatpush.bf16.msra.mxu0 0
      %869 = vmatpush.bf16.msra.mxu0 %v642
      %870 = vmatpush.bf16.msra.mxu0 %v641
      %871 = vmatpush.bf16.msra.mxu0 %v640
      %872 = vmatpush.bf16.msra.mxu0 %v639
      %873 = vmatmul.bf16.gmra.mxu0 %v657
      %v874 = vpop.f32.mrf.mxu0
      %v875 = vadd.f32 %v741, %v874
      %v876 = vpop.f32.mrf.mxu0
      %v877 = vadd.f32 %v743, %v876
      %878 = vmatmul.bf16.gmra.mxu0 %v660
      %v879 = vpop.f32.mrf.mxu0
      %v880 = vadd.f32 %v746, %v879
      %v881 = vpop.f32.mrf.mxu0
      %v882 = vadd.f32 %v748, %v881
      %883 = vmatmul.bf16.gmra.mxu0 %v663
      %v884 = vpop.f32.mrf.mxu0
      %v885 = vadd.f32 %v751, %v884
      %v886 = vpop.f32.mrf.mxu0
      %v887 = vadd.f32 %v753, %v886
      %888 = vmatmul.bf16.gmra.mxu0 %v666
      %v889 = vpop.f32.mrf.mxu0
      %v890 = vadd.f32 %v756, %v889
      %v891 = vpop.f32.mrf.mxu0
      %v892 = vadd.f32 %v758, %v891
      %893 = vmatmul.bf16.gmra.mxu0 %v669
      %v894 = vpop.f32.mrf.mxu0
      %v895 = vadd.f32 %v761, %v894
      %v896 = vpop.f32.mrf.mxu0
      %v897 = vadd.f32 %v763, %v896
      %898 = vmatmul.bf16.gmra.mxu0 %v672
      %v899 = vpop.f32.mrf.mxu0
      %v900 = vadd.f32 %v766, %v899
      %v901 = vpop.f32.mrf.mxu0
      %v902 = vadd.f32 %v768, %v901
      %903 = vmatmul.bf16.gmra.mxu0 %v675
      %v904 = vpop.f32.mrf.mxu0
      %v905 = vadd.f32 %v771, %v904
      %v906 = vpop.f32.mrf.mxu0
      %v907 = vadd.f32 %v773, %v906
      %908 = vmatmul.bf16.gmra.mxu0 %v678
      %v909 = vpop.f32.mrf.mxu0
      %v910 = vadd.f32 %v776, %v909
      %v911 = vpop.f32.mrf.mxu0
      %v912 = vadd.f32 %v778, %v911
      %913 = vmatmul.bf16.gmra.mxu0 %v681
      %v914 = vpop.f32.mrf.mxu0
      %v915 = vadd.f32 %v781, %v914
      %v916 = vpop.f32.mrf.mxu0
      %v917 = vadd.f32 %v783, %v916
      %918 = vmatmul.bf16.gmra.mxu0 %v684
      %v919 = vpop.f32.mrf.mxu0
      %v920 = vadd.f32 %v786, %v919
      %v921 = vpop.f32.mrf.mxu0
      %v922 = vadd.f32 %v788, %v921
      %923 = vmatmul.bf16.gmra.mxu0 %v687
      %v924 = vpop.f32.mrf.mxu0
      %v925 = vadd.f32 %v791, %v924
      %v926 = vpop.f32.mrf.mxu0
      %v927 = vadd.f32 %v793, %v926
      %928 = vmatmul.bf16.gmra.mxu0 %v690
      %v929 = vpop.f32.mrf.mxu0
      %v930 = vadd.f32 %v796, %v929
      %v931 = vpop.f32.mrf.mxu0
      %v932 = vadd.f32 %v798, %v931
      %933 = vmatmul.bf16.gmra.mxu0 %v693
      %v934 = vpop.f32.mrf.mxu0
      %v935 = vadd.f32 %v801, %v934
      %v936 = vpop.f32.mrf.mxu0
      %v937 = vadd.f32 %v803, %v936
      %938 = vmatmul.bf16.gmra.mxu0 %v696
      %v939 = vpop.f32.mrf.mxu0
      %v940 = vadd.f32 %v806, %v939
      %v941 = vpop.f32.mrf.mxu0
      %v942 = vadd.f32 %v808, %v941
      %943 = vmatmul.bf16.gmra.mxu0 %v699
      %v944 = vpop.f32.mrf.mxu0
      %v945 = vadd.f32 %v811, %v944
      %v946 = vpop.f32.mrf.mxu0
      %v947 = vadd.f32 %v813, %v946
      %948 = vmatmul.bf16.gmra.mxu0 %v702
      %v949 = vpop.f32.mrf.mxu0
      %v950 = vadd.f32 %v816, %v949
      %v951 = vpop.f32.mrf.mxu0
      %v952 = vadd.f32 %v818, %v951
      %953 = vmatmul.bf16.gmra.mxu0 %v705
      %v954 = vpop.f32.mrf.mxu0
      %v955 = vadd.f32 %v821, %v954
      %v956 = vpop.f32.mrf.mxu0
      %v957 = vadd.f32 %v823, %v956
      %958 = vmatmul.bf16.gmra.mxu0 %v708
      %v959 = vpop.f32.mrf.mxu0
      %v960 = vadd.f32 %v826, %v959
      %v961 = vpop.f32.mrf.mxu0
      %v962 = vadd.f32 %v828, %v961
      %963 = vmatmul.bf16.gmra.mxu0 %v711
      %v964 = vpop.f32.mrf.mxu0
      %v965 = vadd.f32 %v831, %v964
      %v966 = vpop.f32.mrf.mxu0
      %v967 = vadd.f32 %v833, %v966
      %968 = vmatmul.bf16.gmra.mxu0 %v714
      %v969 = vpop.f32.mrf.mxu0
      %v970 = vadd.f32 %v836, %v969
      %v971 = vpop.f32.mrf.mxu0
      %v972 = vadd.f32 %v838, %v971
      %973 = vmatmul.bf16.gmra.mxu0 %v717
      %v974 = vpop.f32.mrf.mxu0
      %v975 = vadd.f32 %v841, %v974
      %v976 = vpop.f32.mrf.mxu0
      %v977 = vadd.f32 %v843, %v976
      %978 = vmatmul.bf16.gmra.mxu0 %v720
      %v979 = vpop.f32.mrf.mxu0
      %v980 = vadd.f32 %v846, %v979
      %v981 = vpop.f32.mrf.mxu0
      %v982 = vadd.f32 %v848, %v981
      %983 = vmatmul.bf16.gmra.mxu0 %v723
      %v984 = vpop.f32.mrf.mxu0
      %v985 = vadd.f32 %v851, %v984
      %v986 = vpop.f32.mrf.mxu0
      %v987 = vadd.f32 %v853, %v986
      %988 = vmatmul.bf16.gmra.mxu0 %v726
      %v989 = vpop.f32.mrf.mxu0
      %v990 = vadd.f32 %v856, %v989
      %v991 = vpop.f32.mrf.mxu0
      %v992 = vadd.f32 %v858, %v991
      %993 = vmatmul.bf16.gmra.mxu0 %v729
      %v994 = vpop.f32.mrf.mxu0
      %v995 = vadd.f32 %v861, %v994
      %v996 = vpop.f32.mrf.mxu0
      %v997 = vadd.f32 %v863, %v996
      %998 = vdwg.mxu0
      %v999 = vmax.f32 %v875, 0.0
      %v1000 = vmax.f32 %v877, 0.0
      %v1001 = vmax.f32 %v880, 0.0
      %v1002 = vmax.f32 %v882, 0.0
      %v1003 = vmax.f32 %v885, 0.0
      %v1004 = vmax.f32 %v887, 0.0
      %v1005 = vmax.f32 %v890, 0.0
      %v1006 = vmax.f32 %v892, 0.0
      %v1007 = vmax.f32 %v895, 0.0
      %v1008 = vmax.f32 %v897, 0.0
      %v1009 = vmax.f32 %v900, 0.0
      %v1010 = vmax.f32 %v902, 0.0
      %v1011 = vmax.f32 %v905, 0.0
      %v1012 = vmax.f32 %v907, 0.0
      %v1013 = vmax.f32 %v910, 0.0
      %v1014 = vmax.f32 %v912, 0.0
      %v1015 = vmax.f32 %v915, 0.0
      %v1016 = vmax.f32 %v917, 0.0
      %v1017 = vmax.f32 %v920, 0.0
      %v1018 = vmax.f32 %v922, 0.0
      %v1019 = vmax.f32 %v925, 0.0
      %v1020 = vmax.f32 %v927, 0.0
      %v1021 = vmax.f32 %v930, 0.0
      %v1022 = vmax.f32 %v932, 0.0
      %v1023 = vmax.f32 %v935, 0.0
      %v1024 = vmax.f32 %v937, 0.0
      %v1025 = vmax.f32 %v940, 0.0
      %v1026 = vmax.f32 %v942, 0.0
      %v1027 = vmax.f32 %v945, 0.0
      %v1028 = vmax.f32 %v947, 0.0
      %v1029 = vmax.f32 %v950, 0.0
      %v1030 = vmax.f32 %v952, 0.0
      %v1031 = vmax.f32 %v955, 0.0
      %v1032 = vmax.f32 %v957, 0.0
      %v1033 = vmax.f32 %v960, 0.0
      %v1034 = vmax.f32 %v962, 0.0
      %v1035 = vmax.f32 %v965, 0.0
      %v1036 = vmax.f32 %v967, 0.0
      %v1037 = vmax.f32 %v970, 0.0
      %v1038 = vmax.f32 %v972, 0.0
      %v1039 = vmax.f32 %v975, 0.0
      %v1040 = vmax.f32 %v977, 0.0
      %v1041 = vmax.f32 %v980, 0.0
      %v1042 = vmax.f32 %v982, 0.0
      %v1043 = vmax.f32 %v985, 0.0
      %v1044 = vmax.f32 %v987, 0.0
      %v1045 = vmax.f32 %v990, 0.0
      %v1046 = vmax.f32 %v992, 0.0
      %v1047 = vmax.f32 %v995, 0.0
      %v1048 = vmax.f32 %v997, 0.0
      %vm1049 = vcmask 64512
      %v1050 = vsel %vm1049, %v999, 0.0
      %v1051 = vsel %vm1049, %v1000, 0.0
      %v1052 = vadd.f32 %v1050, %v1051
      %v1053 = vsel %vm1049, %v1001, 0.0
      %v1054 = vadd.f32 %v1052, %v1053
      %v1055 = vsel %vm1049, %v1002, 0.0
      %v1056 = vadd.f32 %v1054, %v1055
      %v1057 = vsel %vm1049, %v1003, 0.0
      %v1058 = vadd.f32 %v1056, %v1057
      %v1059 = vsel %vm1049, %v1004, 0.0
      %v1060 = vadd.f32 %v1058, %v1059
      %v1061 = vsel %vm1049, %v1005, 0.0
      %v1062 = vadd.f32 %v1060, %v1061
      %v1063 = vsel %vm1049, %v1006, 0.0
      %v1064 = vadd.f32 %v1062, %v1063
      %v1065 = vsel %vm1049, %v1007, 0.0
      %v1066 = vadd.f32 %v1064, %v1065
      %v1067 = vsel %vm1049, %v1008, 0.0
      %v1068 = vadd.f32 %v1066, %v1067
      %v1069 = vsel %vm1049, %v1009, 0.0
      %v1070 = vadd.f32 %v1068, %v1069
      %v1071 = vsel %vm1049, %v1010, 0.0
      %v1072 = vadd.f32 %v1070, %v1071
      %v1073 = vsel %vm1049, %v1011, 0.0
      %v1074 = vadd.f32 %v1072, %v1073
      %v1075 = vsel %vm1049, %v1012, 0.0
      %v1076 = vadd.f32 %v1074, %v1075
      %v1077 = vsel %vm1049, %v1013, 0.0
      %v1078 = vadd.f32 %v1076, %v1077
      %v1079 = vsel %vm1049, %v1014, 0.0
      %v1080 = vadd.f32 %v1078, %v1079
      %v1081 = vsel %vm1049, %v1015, 0.0
      %v1082 = vadd.f32 %v1080, %v1081
      %v1083 = vsel %vm1049, %v1016, 0.0
      %v1084 = vadd.f32 %v1082, %v1083
      %v1085 = vsel %vm1049, %v1017, 0.0
      %v1086 = vadd.f32 %v1084, %v1085
      %v1087 = vsel %vm1049, %v1018, 0.0
      %v1088 = vadd.f32 %v1086, %v1087
      %v1089 = vsel %vm1049, %v1019, 0.0
      %v1090 = vadd.f32 %v1088, %v1089
      %v1091 = vsel %vm1049, %v1020, 0.0
      %v1092 = vadd.f32 %v1090, %v1091
      %v1093 = vsel %vm1049, %v1021, 0.0
      %v1094 = vadd.f32 %v1092, %v1093
      %v1095 = vsel %vm1049, %v1022, 0.0
      %v1096 = vadd.f32 %v1094, %v1095
      %v1097 = vsel %vm1049, %v1023, 0.0
      %v1098 = vadd.f32 %v1096, %v1097
      %v1099 = vsel %vm1049, %v1024, 0.0
      %v1100 = vadd.f32 %v1098, %v1099
      %v1101 = vsel %vm1049, %v1025, 0.0
      %v1102 = vadd.f32 %v1100, %v1101
      %v1103 = vsel %vm1049, %v1026, 0.0
      %v1104 = vadd.f32 %v1102, %v1103
      %v1105 = vsel %vm1049, %v1027, 0.0
      %v1106 = vadd.f32 %v1104, %v1105
      %v1107 = vsel %vm1049, %v1028, 0.0
      %v1108 = vadd.f32 %v1106, %v1107
      %v1109 = vsel %vm1049, %v1029, 0.0
      %v1110 = vadd.f32 %v1108, %v1109
      %v1111 = vsel %vm1049, %v1030, 0.0
      %v1112 = vadd.f32 %v1110, %v1111
      %v1113 = vsel %vm1049, %v1031, 0.0
      %v1114 = vadd.f32 %v1112, %v1113
      %v1115 = vsel %vm1049, %v1032, 0.0
      %v1116 = vadd.f32 %v1114, %v1115
      %v1117 = vsel %vm1049, %v1033, 0.0
      %v1118 = vadd.f32 %v1116, %v1117
      %v1119 = vsel %vm1049, %v1034, 0.0
      %v1120 = vadd.f32 %v1118, %v1119
      %v1121 = vsel %vm1049, %v1035, 0.0
      %v1122 = vadd.f32 %v1120, %v1121
      %v1123 = vsel %vm1049, %v1036, 0.0
      %v1124 = vadd.f32 %v1122, %v1123
      %v1125 = vsel %vm1049, %v1037, 0.0
      %v1126 = vadd.f32 %v1124, %v1125
      %v1127 = vsel %vm1049, %v1038, 0.0
      %v1128 = vadd.f32 %v1126, %v1127
      %v1129 = vsel %vm1049, %v1039, 0.0
      %v1130 = vadd.f32 %v1128, %v1129
      %v1131 = vsel %vm1049, %v1040, 0.0
      %v1132 = vadd.f32 %v1130, %v1131
      %v1133 = vsel %vm1049, %v1041, 0.0
      %v1134 = vadd.f32 %v1132, %v1133
      %v1135 = vsel %vm1049, %v1042, 0.0
      %v1136 = vadd.f32 %v1134, %v1135
      %v1137 = vsel %vm1049, %v1043, 0.0
      %v1138 = vadd.f32 %v1136, %v1137
      %v1139 = vsel %vm1049, %v1044, 0.0
      %v1140 = vadd.f32 %v1138, %v1139
      %v1141 = vsel %vm1049, %v1045, 0.0
      %v1142 = vadd.f32 %v1140, %v1141
      %v1143 = vsel %vm1049, %v1046, 0.0
      %v1144 = vadd.f32 %v1142, %v1143
      %v1145 = vsel %vm1049, %v1047, 0.0
      %v1146 = vadd.f32 %v1144, %v1145
      %v1147 = vsel %vm1049, %v1048, 0.0
      %v1148 = vadd.f32 %v1146, %v1147
      %v1149 = vrot.slane %v1148, 4
      %v1150 = vadd.f32 %v1148, %v1149
      %v1151 = vrot.slane %v1150, 2
      %v1152 = vadd.f32 %v1150, %v1151
      %v1153 = vrot.slane %v1152, 1
      %v1154 = vadd.f32 %v1152, %v1153
      %v1155 = vld [vmem:[%s5] sm:$0xff]
      %v1157 = vsel %vm1049, %v1154, 0
      %1159 = vmatpush.msra.mxu0 0.0
      %1160 = vmatpush.msra.mxu0 0.0
      %1161 = vmatpush.msra.mxu0 0.0
      %1162 = vmatpush.msra.mxu0 0.0
      %1163 = vmatpush.msra.mxu0 0.0
      %1164 = vmatpush.msra.mxu0 0.0
      %1165 = vmatpush.msra.mxu0 0.0
      %1166 = vmatpush.msra.mxu0 0.0
      %1167 = vmatpush.msra.mxu0 0.0
      %1168 = vmatpush.msra.mxu0 0.0
      %1169 = vmatpush.msra.mxu0 0.0
      %1170 = vmatpush.msra.mxu0 0.0
      %1171 = vmatpush.msra.mxu0 0.0
      %1172 = vmatpush.msra.mxu0 0.0
      %1173 = vmatpush.msra.mxu0 0.0
      %1174 = vmatpush.msra.mxu0 %v1155
      %1175 = vmatmul.f32.gmra.mxu0 %v1157
      %v1176 = vpop.f32.mrf.mxu0
      %v1177 = vadd.f32 0.0, %v1176
      %1178 = vdwg.mxu0
      %v1179 = vmul.f32 %v1177, 0.00125
      %v1180 = vld [vmem:[%s6] sm:$0xf]
      %vm1181 = vcmask 31744
      %v1183 = vsel %vm1181, %v1179, 0
      %vm1185 = vcmask 1043456
      %v1187 = vsel %vm1185, %v1180, 0
      %1189 = vmatpush.msra.mxu0 0.0
      %1190 = vmatpush.msra.mxu0 0.0
      %1191 = vmatpush.msra.mxu0 0.0
      %1192 = vmatpush.msra.mxu0 0.0
      %1193 = vmatpush.msra.mxu0 0.0
      %1194 = vmatpush.msra.mxu0 0.0
      %1195 = vmatpush.msra.mxu0 0.0
      %1196 = vmatpush.msra.mxu0 0.0
      %1197 = vmatpush.msra.mxu0 0.0
      %1198 = vmatpush.msra.mxu0 0.0
      %1199 = vmatpush.msra.mxu0 0.0
      %1200 = vmatpush.msra.mxu0 0.0
      %1201 = vmatpush.msra.mxu0 0.0
      %1202 = vmatpush.msra.mxu0 0.0
      %1203 = vmatpush.msra.mxu0 0.0
      %1204 = vmatpush.msra.mxu0 %v1187
      %1205 = vmatmul.f32.gmra.mxu0 %v1183
      %v1206 = vpop.f32.mrf.mxu0
      %v1207 = vadd.f32 0.0, %v1206
      %1208 = vdwg.mxu0
      %v1209 = vperm.slane %v1207, 0
      %v1210 = vsub.f32 %v999, %v1209
      %v1211 = vsub.f32 %v1000, %v1209
      %v1212 = vsub.f32 %v1001, %v1209
      %v1213 = vsub.f32 %v1002, %v1209
      %v1214 = vsub.f32 %v1003, %v1209
      %v1215 = vsub.f32 %v1004, %v1209
      %v1216 = vsub.f32 %v1005, %v1209
      %v1217 = vsub.f32 %v1006, %v1209
      %v1218 = vsub.f32 %v1007, %v1209
      %v1219 = vsub.f32 %v1008, %v1209
      %v1220 = vsub.f32 %v1009, %v1209
      %v1221 = vsub.f32 %v1010, %v1209
      %v1222 = vsub.f32 %v1011, %v1209
      %v1223 = vsub.f32 %v1012, %v1209
      %v1224 = vsub.f32 %v1013, %v1209
      %v1225 = vsub.f32 %v1014, %v1209
      %v1226 = vsub.f32 %v1015, %v1209
      %v1227 = vsub.f32 %v1016, %v1209
      %v1228 = vsub.f32 %v1017, %v1209
      %v1229 = vsub.f32 %v1018, %v1209
      %v1230 = vsub.f32 %v1019, %v1209
      %v1231 = vsub.f32 %v1020, %v1209
      %v1232 = vsub.f32 %v1021, %v1209
      %v1233 = vsub.f32 %v1022, %v1209
      %v1234 = vsub.f32 %v1023, %v1209
      %v1235 = vsub.f32 %v1024, %v1209
      %v1236 = vsub.f32 %v1025, %v1209
      %v1237 = vsub.f32 %v1026, %v1209
      %v1238 = vsub.f32 %v1027, %v1209
      %v1239 = vsub.f32 %v1028, %v1209
      %v1240 = vsub.f32 %v1029, %v1209
      %v1241 = vsub.f32 %v1030, %v1209
      %v1242 = vsub.f32 %v1031, %v1209
      %v1243 = vsub.f32 %v1032, %v1209
      %v1244 = vsub.f32 %v1033, %v1209
      %v1245 = vsub.f32 %v1034, %v1209
      %v1246 = vsub.f32 %v1035, %v1209
      %v1247 = vsub.f32 %v1036, %v1209
      %v1248 = vsub.f32 %v1037, %v1209
      %v1249 = vsub.f32 %v1038, %v1209
      %v1250 = vsub.f32 %v1039, %v1209
      %v1251 = vsub.f32 %v1040, %v1209
      %v1252 = vsub.f32 %v1041, %v1209
      %v1253 = vsub.f32 %v1042, %v1209
      %v1254 = vsub.f32 %v1043, %v1209
      %v1255 = vsub.f32 %v1044, %v1209
      %v1256 = vsub.f32 %v1045, %v1209
      %v1257 = vsub.f32 %v1046, %v1209
      %v1258 = vsub.f32 %v1047, %v1209
      %v1259 = vsub.f32 %v1048, %v1209
      %v1260 = vmul.f32 %v1210, %v1210
      %v1261 = vmul.f32 %v1211, %v1211
      %v1262 = vmul.f32 %v1212, %v1212
      %v1263 = vmul.f32 %v1213, %v1213
      %v1264 = vmul.f32 %v1214, %v1214
      %v1265 = vmul.f32 %v1215, %v1215
      %v1266 = vmul.f32 %v1216, %v1216
      %v1267 = vmul.f32 %v1217, %v1217
      %v1268 = vmul.f32 %v1218, %v1218
      %v1269 = vmul.f32 %v1219, %v1219
      %v1270 = vmul.f32 %v1220, %v1220
      %v1271 = vmul.f32 %v1221, %v1221
      %v1272 = vmul.f32 %v1222, %v1222
      %v1273 = vmul.f32 %v1223, %v1223
      %v1274 = vmul.f32 %v1224, %v1224
      %v1275 = vmul.f32 %v1225, %v1225
      %v1276 = vmul.f32 %v1226, %v1226
      %v1277 = vmul.f32 %v1227, %v1227
      %v1278 = vmul.f32 %v1228, %v1228
      %v1279 = vmul.f32 %v1229, %v1229
      %v1280 = vmul.f32 %v1230, %v1230
      %v1281 = vmul.f32 %v1231, %v1231
      %v1282 = vmul.f32 %v1232, %v1232
      %v1283 = vmul.f32 %v1233, %v1233
      %v1284 = vmul.f32 %v1234, %v1234
      %v1285 = vmul.f32 %v1235, %v1235
      %v1286 = vmul.f32 %v1236, %v1236
      %v1287 = vmul.f32 %v1237, %v1237
      %v1288 = vmul.f32 %v1238, %v1238
      %v1289 = vmul.f32 %v1239, %v1239
      %v1290 = vmul.f32 %v1240, %v1240
      %v1291 = vmul.f32 %v1241, %v1241
      %v1292 = vmul.f32 %v1242, %v1242
      %v1293 = vmul.f32 %v1243, %v1243
      %v1294 = vmul.f32 %v1244, %v1244
      %v1295 = vmul.f32 %v1245, %v1245
      %v1296 = vmul.f32 %v1246, %v1246
      %v1297 = vmul.f32 %v1247, %v1247
      %v1298 = vmul.f32 %v1248, %v1248
      %v1299 = vmul.f32 %v1249, %v1249
      %v1300 = vmul.f32 %v1250, %v1250
      %v1301 = vmul.f32 %v1251, %v1251
      %v1302 = vmul.f32 %v1252, %v1252
      %v1303 = vmul.f32 %v1253, %v1253
      %v1304 = vmul.f32 %v1254, %v1254
      %v1305 = vmul.f32 %v1255, %v1255
      %v1306 = vmul.f32 %v1256, %v1256
      %v1307 = vmul.f32 %v1257, %v1257
      %v1308 = vmul.f32 %v1258, %v1258
      %v1309 = vmul.f32 %v1259, %v1259
      %v1310 = vsel %vm1049, %v1260, 0.0
      %v1311 = vsel %vm1049, %v1261, 0.0
      %v1312 = vadd.f32 %v1310, %v1311
      %v1313 = vsel %vm1049, %v1262, 0.0
      %v1314 = vadd.f32 %v1312, %v1313
      %v1315 = vsel %vm1049, %v1263, 0.0
      %v1316 = vadd.f32 %v1314, %v1315
      %v1317 = vsel %vm1049, %v1264, 0.0
      %v1318 = vadd.f32 %v1316, %v1317
      %v1319 = vsel %vm1049, %v1265, 0.0
      %v1320 = vadd.f32 %v1318, %v1319
      %v1321 = vsel %vm1049, %v1266, 0.0
      %v1322 = vadd.f32 %v1320, %v1321
      %v1323 = vsel %vm1049, %v1267, 0.0
      %v1324 = vadd.f32 %v1322, %v1323
      %v1325 = vsel %vm1049, %v1268, 0.0
      %v1326 = vadd.f32 %v1324, %v1325
      %v1327 = vsel %vm1049, %v1269, 0.0
      %v1328 = vadd.f32 %v1326, %v1327
      %v1329 = vsel %vm1049, %v1270, 0.0
      %v1330 = vadd.f32 %v1328, %v1329
      %v1331 = vsel %vm1049, %v1271, 0.0
      %v1332 = vadd.f32 %v1330, %v1331
      %v1333 = vsel %vm1049, %v1272, 0.0
      %v1334 = vadd.f32 %v1332, %v1333
      %v1335 = vsel %vm1049, %v1273, 0.0
      %v1336 = vadd.f32 %v1334, %v1335
      %v1337 = vsel %vm1049, %v1274, 0.0
      %v1338 = vadd.f32 %v1336, %v1337
      %v1339 = vsel %vm1049, %v1275, 0.0
      %v1340 = vadd.f32 %v1338, %v1339
      %v1341 = vsel %vm1049, %v1276, 0.0
      %v1342 = vadd.f32 %v1340, %v1341
      %v1343 = vsel %vm1049, %v1277, 0.0
      %v1344 = vadd.f32 %v1342, %v1343
      %v1345 = vsel %vm1049, %v1278, 0.0
      %v1346 = vadd.f32 %v1344, %v1345
      %v1347 = vsel %vm1049, %v1279, 0.0
      %v1348 = vadd.f32 %v1346, %v1347
      %v1349 = vsel %vm1049, %v1280, 0.0
      %v1350 = vadd.f32 %v1348, %v1349
      %v1351 = vsel %vm1049, %v1281, 0.0
      %v1352 = vadd.f32 %v1350, %v1351
      %v1353 = vsel %vm1049, %v1282, 0.0
      %v1354 = vadd.f32 %v1352, %v1353
      %v1355 = vsel %vm1049, %v1283, 0.0
      %v1356 = vadd.f32 %v1354, %v1355
      %v1357 = vsel %vm1049, %v1284, 0.0
      %v1358 = vadd.f32 %v1356, %v1357
      %v1359 = vsel %vm1049, %v1285, 0.0
      %v1360 = vadd.f32 %v1358, %v1359
      %v1361 = vsel %vm1049, %v1286, 0.0
      %v1362 = vadd.f32 %v1360, %v1361
      %v1363 = vsel %vm1049, %v1287, 0.0
      %v1364 = vadd.f32 %v1362, %v1363
      %v1365 = vsel %vm1049, %v1288, 0.0
      %v1366 = vadd.f32 %v1364, %v1365
      %v1367 = vsel %vm1049, %v1289, 0.0
      %v1368 = vadd.f32 %v1366, %v1367
      %v1369 = vsel %vm1049, %v1290, 0.0
      %v1370 = vadd.f32 %v1368, %v1369
      %v1371 = vsel %vm1049, %v1291, 0.0
      %v1372 = vadd.f32 %v1370, %v1371
      %v1373 = vsel %vm1049, %v1292, 0.0
      %v1374 = vadd.f32 %v1372, %v1373
      %v1375 = vsel %vm1049, %v1293, 0.0
      %v1376 = vadd.f32 %v1374, %v1375
      %v1377 = vsel %vm1049, %v1294, 0.0
      %v1378 = vadd.f32 %v1376, %v1377
      %v1379 = vsel %vm1049, %v1295, 0.0
      %v1380 = vadd.f32 %v1378, %v1379
      %v1381 = vsel %vm1049, %v1296, 0.0
      %v1382 = vadd.f32 %v1380, %v1381
      %v1383 = vsel %vm1049, %v1297, 0.0
      %v1384 = vadd.f32 %v1382, %v1383
      %v1385 = vsel %vm1049, %v1298, 0.0
      %v1386 = vadd.f32 %v1384, %v1385
      %v1387 = vsel %vm1049, %v1299, 0.0
      %v1388 = vadd.f32 %v1386, %v1387
      %v1389 = vsel %vm1049, %v1300, 0.0
      %v1390 = vadd.f32 %v1388, %v1389
      %v1391 = vsel %vm1049, %v1301, 0.0
      %v1392 = vadd.f32 %v1390, %v1391
      %v1393 = vsel %vm1049, %v1302, 0.0
      %v1394 = vadd.f32 %v1392, %v1393
      %v1395 = vsel %vm1049, %v1303, 0.0
      %v1396 = vadd.f32 %v1394, %v1395
      %v1397 = vsel %vm1049, %v1304, 0.0
      %v1398 = vadd.f32 %v1396, %v1397
      %v1399 = vsel %vm1049, %v1305, 0.0
      %v1400 = vadd.f32 %v1398, %v1399
      %v1401 = vsel %vm1049, %v1306, 0.0
      %v1402 = vadd.f32 %v1400, %v1401
      %v1403 = vsel %vm1049, %v1307, 0.0
      %v1404 = vadd.f32 %v1402, %v1403
      %v1405 = vsel %vm1049, %v1308, 0.0
      %v1406 = vadd.f32 %v1404, %v1405
      %v1407 = vsel %vm1049, %v1309, 0.0
      %v1408 = vadd.f32 %v1406, %v1407
      %v1409 = vrot.slane %v1408, 4
      %v1410 = vadd.f32 %v1408, %v1409
      %v1411 = vrot.slane %v1410, 2
      %v1412 = vadd.f32 %v1410, %v1411
      %v1413 = vrot.slane %v1412, 1
      %v1414 = vadd.f32 %v1412, %v1413
      %v1416 = vsel %vm1049, %v1414, 0
      %1418 = vmatpush.msra.mxu0 0.0
      %1419 = vmatpush.msra.mxu0 0.0
      %1420 = vmatpush.msra.mxu0 0.0
      %1421 = vmatpush.msra.mxu0 0.0
      %1422 = vmatpush.msra.mxu0 0.0
      %1423 = vmatpush.msra.mxu0 0.0
      %1424 = vmatpush.msra.mxu0 0.0
      %1425 = vmatpush.msra.mxu0 0.0
      %1426 = vmatpush.msra.mxu0 0.0
      %1427 = vmatpush.msra.mxu0 0.0
      %1428 = vmatpush.msra.mxu0 0.0
      %1429 = vmatpush.msra.mxu0 0.0
      %1430 = vmatpush.msra.mxu0 0.0
      %1431 = vmatpush.msra.mxu0 0.0
      %1432 = vmatpush.msra.mxu0 0.0
      %1433 = vmatpush.msra.mxu0 %v1155
      %1434 = vmatmul.f32.gmra.mxu0 %v1416
      %v1435 = vpop.f32.mrf.mxu0
      %v1436 = vadd.f32 0.0, %v1435
      %1437 = vdwg.mxu0
      %v1438 = vmul.f32 %v1436, 0.00125
      %v1440 = vsel %vm1181, %v1438, 0
      %1442 = vmatpush.msra.mxu0 0.0
      %1443 = vmatpush.msra.mxu0 0.0
      %1444 = vmatpush.msra.mxu0 0.0
      %1445 = vmatpush.msra.mxu0 0.0
      %1446 = vmatpush.msra.mxu0 0.0
      %1447 = vmatpush.msra.mxu0 0.0
      %1448 = vmatpush.msra.mxu0 0.0
      %1449 = vmatpush.msra.mxu0 0.0
      %1450 = vmatpush.msra.mxu0 0.0
      %1451 = vmatpush.msra.mxu0 0.0
      %1452 = vmatpush.msra.mxu0 0.0
      %1453 = vmatpush.msra.mxu0 0.0
      %1454 = vmatpush.msra.mxu0 0.0
      %1455 = vmatpush.msra.mxu0 0.0
      %1456 = vmatpush.msra.mxu0 0.0
      %1457 = vmatpush.msra.mxu0 %v1187
      %1458 = vmatmul.f32.gmra.mxu0 %v1440
      %v1459 = vpop.f32.mrf.mxu0
      %v1460 = vadd.f32 1e-05, %v1459
      %1461 = vdwg.mxu0
      %v1462 = vrsqrt.pop %v1460
      %v1463 = vmul.f32 %v1462, %v1460
      %v1464 = vmul.f32 %v1463, %v1462
      %v1465 = vmul.f32 0.5, %v1464
      %v1466 = vsub.f32 1.5, %v1465
      %v1467 = vmul.f32 %v1462, %v1466
      %vm1468 = vweird.f32 %v1460
      %vm1469 = vweird.f32 %v1462
      %vm1470 = vmor %vm1468, %vm1469
      %v1471 = vsel %vm1470, %v1462, %v1467
      %v1472 = vperm.slane %v1471, 0
      %v1473 = vmul.f32 %v1210, %v1472
      %v1474 = vmul.f32 %v1211, %v1472
      %v1475 = vmul.f32 %v1212, %v1472
      %v1476 = vmul.f32 %v1213, %v1472
      %v1477 = vmul.f32 %v1214, %v1472
      %v1478 = vmul.f32 %v1215, %v1472
      %v1479 = vmul.f32 %v1216, %v1472
      %v1480 = vmul.f32 %v1217, %v1472
      %v1481 = vmul.f32 %v1218, %v1472
      %v1482 = vmul.f32 %v1219, %v1472
      %v1483 = vmul.f32 %v1220, %v1472
      %v1484 = vmul.f32 %v1221, %v1472
      %v1485 = vmul.f32 %v1222, %v1472
      %v1486 = vmul.f32 %v1223, %v1472
      %v1487 = vmul.f32 %v1224, %v1472
      %v1488 = vmul.f32 %v1225, %v1472
      %v1489 = vmul.f32 %v1226, %v1472
      %v1490 = vmul.f32 %v1227, %v1472
      %v1491 = vmul.f32 %v1228, %v1472
      %v1492 = vmul.f32 %v1229, %v1472
      %v1493 = vmul.f32 %v1230, %v1472
      %v1494 = vmul.f32 %v1231, %v1472
      %v1495 = vmul.f32 %v1232, %v1472
      %v1496 = vmul.f32 %v1233, %v1472
      %v1497 = vmul.f32 %v1234, %v1472
      %v1498 = vmul.f32 %v1235, %v1472
      %v1499 = vmul.f32 %v1236, %v1472
      %v1500 = vmul.f32 %v1237, %v1472
      %v1501 = vmul.f32 %v1238, %v1472
      %v1502 = vmul.f32 %v1239, %v1472
      %v1503 = vmul.f32 %v1240, %v1472
      %v1504 = vmul.f32 %v1241, %v1472
      %v1505 = vmul.f32 %v1242, %v1472
      %v1506 = vmul.f32 %v1243, %v1472
      %v1507 = vmul.f32 %v1244, %v1472
      %v1508 = vmul.f32 %v1245, %v1472
      %v1509 = vmul.f32 %v1246, %v1472
      %v1510 = vmul.f32 %v1247, %v1472
      %v1511 = vmul.f32 %v1248, %v1472
      %v1512 = vmul.f32 %v1249, %v1472
      %v1513 = vmul.f32 %v1250, %v1472
      %v1514 = vmul.f32 %v1251, %v1472
      %v1515 = vmul.f32 %v1252, %v1472
      %v1516 = vmul.f32 %v1253, %v1472
      %v1517 = vmul.f32 %v1254, %v1472
      %v1518 = vmul.f32 %v1255, %v1472
      %v1519 = vmul.f32 %v1256, %v1472
      %v1520 = vmul.f32 %v1257, %v1472
      %v1521 = vmul.f32 %v1258, %v1472
      %v1522 = vmul.f32 %v1259, %v1472
      %v1523 = vld [vmem:[%s3] sm:$0x1]
      %v1525 = vperm.slane %v1523, 0
      %v1527 = vmul.f32 %v1473, %v1525
      %v1528 = vmul.f32 %v1474, %v1525
      %v1529 = vmul.f32 %v1475, %v1525
      %v1530 = vmul.f32 %v1476, %v1525
      %v1531 = vmul.f32 %v1477, %v1525
      %v1532 = vmul.f32 %v1478, %v1525
      %v1533 = vmul.f32 %v1479, %v1525
      %v1534 = vmul.f32 %v1480, %v1525
      %v1535 = vmul.f32 %v1481, %v1525
      %v1536 = vmul.f32 %v1482, %v1525
      %v1537 = vmul.f32 %v1483, %v1525
      %v1538 = vmul.f32 %v1484, %v1525
      %v1539 = vmul.f32 %v1485, %v1525
      %v1540 = vmul.f32 %v1486, %v1525
      %v1541 = vmul.f32 %v1487, %v1525
      %v1542 = vmul.f32 %v1488, %v1525
      %v1543 = vmul.f32 %v1489, %v1525
      %v1544 = vmul.f32 %v1490, %v1525
      %v1545 = vmul.f32 %v1491, %v1525
      %v1546 = vmul.f32 %v1492, %v1525
      %v1547 = vmul.f32 %v1493, %v1525
      %v1548 = vmul.f32 %v1494, %v1525
      %v1549 = vmul.f32 %v1495, %v1525
      %v1550 = vmul.f32 %v1496, %v1525
      %v1551 = vmul.f32 %v1497, %v1525
      %v1552 = vmul.f32 %v1498, %v1525
      %v1553 = vmul.f32 %v1499, %v1525
      %v1554 = vmul.f32 %v1500, %v1525
      %v1555 = vmul.f32 %v1501, %v1525
      %v1556 = vmul.f32 %v1502, %v1525
      %v1557 = vmul.f32 %v1503, %v1525
      %v1558 = vmul.f32 %v1504, %v1525
      %v1559 = vmul.f32 %v1505, %v1525
      %v1560 = vmul.f32 %v1506, %v1525
      %v1561 = vmul.f32 %v1507, %v1525
      %v1562 = vmul.f32 %v1508, %v1525
      %v1563 = vmul.f32 %v1509, %v1525
      %v1564 = vmul.f32 %v1510, %v1525
      %v1565 = vmul.f32 %v1511, %v1525
      %v1566 = vmul.f32 %v1512, %v1525
      %v1567 = vmul.f32 %v1513, %v1525
      %v1568 = vmul.f32 %v1514, %v1525
      %v1569 = vmul.f32 %v1515, %v1525
      %v1570 = vmul.f32 %v1516, %v1525
      %v1571 = vmul.f32 %v1517, %v1525
      %v1572 = vmul.f32 %v1518, %v1525
      %v1573 = vmul.f32 %v1519, %v1525
      %v1574 = vmul.f32 %v1520, %v1525
      %v1575 = vmul.f32 %v1521, %v1525
      %v1576 = vmul.f32 %v1522, %v1525
      %v1577 = vld [vmem:[%s4] sm:$0x1]
      %v1579 = vperm.slane %v1577, 0
      %v1581 = vadd.f32 %v1527, %v1579
      %v1582 = vadd.f32 %v1528, %v1579
      %v1583 = vadd.f32 %v1529, %v1579
      %v1584 = vadd.f32 %v1530, %v1579
      %v1585 = vadd.f32 %v1531, %v1579
      %v1586 = vadd.f32 %v1532, %v1579
      %v1587 = vadd.f32 %v1533, %v1579
      %v1588 = vadd.f32 %v1534, %v1579
      %v1589 = vadd.f32 %v1535, %v1579
      %v1590 = vadd.f32 %v1536, %v1579
      %v1591 = vadd.f32 %v1537, %v1579
      %v1592 = vadd.f32 %v1538, %v1579
      %v1593 = vadd.f32 %v1539, %v1579
      %v1594 = vadd.f32 %v1540, %v1579
      %v1595 = vadd.f32 %v1541, %v1579
      %v1596 = vadd.f32 %v1542, %v1579
      %v1597 = vadd.f32 %v1543, %v1579
      %v1598 = vadd.f32 %v1544, %v1579
      %v1599 = vadd.f32 %v1545, %v1579
      %v1600 = vadd.f32 %v1546, %v1579
      %v1601 = vadd.f32 %v1547, %v1579
      %v1602 = vadd.f32 %v1548, %v1579
      %v1603 = vadd.f32 %v1549, %v1579
      %v1604 = vadd.f32 %v1550, %v1579
      %v1605 = vadd.f32 %v1551, %v1579
      %v1606 = vadd.f32 %v1552, %v1579
      %v1607 = vadd.f32 %v1553, %v1579
      %v1608 = vadd.f32 %v1554, %v1579
      %v1609 = vadd.f32 %v1555, %v1579
      %v1610 = vadd.f32 %v1556, %v1579
      %v1611 = vadd.f32 %v1557, %v1579
      %v1612 = vadd.f32 %v1558, %v1579
      %v1613 = vadd.f32 %v1559, %v1579
      %v1614 = vadd.f32 %v1560, %v1579
      %v1615 = vadd.f32 %v1561, %v1579
      %v1616 = vadd.f32 %v1562, %v1579
      %v1617 = vadd.f32 %v1563, %v1579
      %v1618 = vadd.f32 %v1564, %v1579
      %v1619 = vadd.f32 %v1565, %v1579
      %v1620 = vadd.f32 %v1566, %v1579
      %v1621 = vadd.f32 %v1567, %v1579
      %v1622 = vadd.f32 %v1568, %v1579
      %v1623 = vadd.f32 %v1569, %v1579
      %v1624 = vadd.f32 %v1570, %v1579
      %v1625 = vadd.f32 %v1571, %v1579
      %v1626 = vadd.f32 %v1572, %v1579
      %v1627 = vadd.f32 %v1573, %v1579
      %v1628 = vadd.f32 %v1574, %v1579
      %v1629 = vadd.f32 %v1575, %v1579
      %v1630 = vadd.f32 %v1576, %v1579
      %v1631 = vpack.c.bf16 %v1581, %v1581
      %v1632 = vpack.c.bf16 %v1582, %v1582
      %v1633 = vpack.c.bf16 %v1583, %v1583
      %v1634 = vpack.c.bf16 %v1584, %v1584
      %v1635 = vpack.c.bf16 %v1585, %v1585
      %v1636 = vpack.c.bf16 %v1586, %v1586
      %v1637 = vpack.c.bf16 %v1587, %v1587
      %v1638 = vpack.c.bf16 %v1588, %v1588
      %v1639 = vpack.c.bf16 %v1589, %v1589
      %v1640 = vpack.c.bf16 %v1590, %v1590
      %v1641 = vpack.c.bf16 %v1591, %v1591
      %v1642 = vpack.c.bf16 %v1592, %v1592
      %v1643 = vpack.c.bf16 %v1593, %v1593
      %v1644 = vpack.c.bf16 %v1594, %v1594
      %v1645 = vpack.c.bf16 %v1595, %v1595
      %v1646 = vpack.c.bf16 %v1596, %v1596
      %v1647 = vpack.c.bf16 %v1597, %v1597
      %v1648 = vpack.c.bf16 %v1598, %v1598
      %v1649 = vpack.c.bf16 %v1599, %v1599
      %v1650 = vpack.c.bf16 %v1600, %v1600
      %v1651 = vpack.c.bf16 %v1601, %v1601
      %v1652 = vpack.c.bf16 %v1602, %v1602
      %v1653 = vpack.c.bf16 %v1603, %v1603
      %v1654 = vpack.c.bf16 %v1604, %v1604
      %v1655 = vpack.c.bf16 %v1605, %v1605
      %v1656 = vpack.c.bf16 %v1606, %v1606
      %v1657 = vpack.c.bf16 %v1607, %v1607
      %v1658 = vpack.c.bf16 %v1608, %v1608
      %v1659 = vpack.c.bf16 %v1609, %v1609
      %v1660 = vpack.c.bf16 %v1610, %v1610
      %v1661 = vpack.c.bf16 %v1611, %v1611
      %v1662 = vpack.c.bf16 %v1612, %v1612
      %v1663 = vpack.c.bf16 %v1613, %v1613
      %v1664 = vpack.c.bf16 %v1614, %v1614
      %v1665 = vpack.c.bf16 %v1615, %v1615
      %v1666 = vpack.c.bf16 %v1616, %v1616
      %v1667 = vpack.c.bf16 %v1617, %v1617
      %v1668 = vpack.c.bf16 %v1618, %v1618
      %v1669 = vpack.c.bf16 %v1619, %v1619
      %v1670 = vpack.c.bf16 %v1620, %v1620
      %v1671 = vpack.c.bf16 %v1621, %v1621
      %v1672 = vpack.c.bf16 %v1622, %v1622
      %v1673 = vpack.c.bf16 %v1623, %v1623
      %v1674 = vpack.c.bf16 %v1624, %v1624
      %v1675 = vpack.c.bf16 %v1625, %v1625
      %v1676 = vpack.c.bf16 %v1626, %v1626
      %v1677 = vpack.c.bf16 %v1627, %v1627
      %v1678 = vpack.c.bf16 %v1628, %v1628
      %v1679 = vpack.c.bf16 %v1629, %v1629
      %v1680 = vpack.c.bf16 %v1630, %v1630
      %vm1681 = vcmask 60416
      %1682 = vst.msk [vmem:[%s278] sm:$0xf] %vm1681, %v1631
      %1683 = vst.msk [vmem:[%s278 + $0x4] sm:$0xf] %vm1681, %v1632
      %1684 = vst.msk [vmem:[%s278 + $0x8] sm:$0xf] %vm1681, %v1633
      %1685 = vst.msk [vmem:[%s278 + $0xc] sm:$0xf] %vm1681, %v1634
      %1686 = vst.msk [vmem:[%s278 + $0x10] sm:$0xf] %vm1681, %v1635
      %1687 = vst.msk [vmem:[%s278 + $0x14] sm:$0xf] %vm1681, %v1636
      %1688 = vst.msk [vmem:[%s278 + $0x18] sm:$0xf] %vm1681, %v1637
      %1689 = vst.msk [vmem:[%s278 + $0x1c] sm:$0xf] %vm1681, %v1638
      %1690 = vst.msk [vmem:[%s278 + $0x20] sm:$0xf] %vm1681, %v1639
      %1691 = vst.msk [vmem:[%s278 + $0x24] sm:$0xf] %vm1681, %v1640
      %1692 = vst.msk [vmem:[%s278 + $0x28] sm:$0xf] %vm1681, %v1641
      %1693 = vst.msk [vmem:[%s278 + $0x2c] sm:$0xf] %vm1681, %v1642
      %1694 = vst.msk [vmem:[%s278 + $0x30] sm:$0xf] %vm1681, %v1643
      %1695 = vst.msk [vmem:[%s278 + $0x34] sm:$0xf] %vm1681, %v1644
      %1696 = vst.msk [vmem:[%s278 + $0x38] sm:$0xf] %vm1681, %v1645
      %1697 = vst.msk [vmem:[%s278 + $0x3c] sm:$0xf] %vm1681, %v1646
      %1698 = vst.msk [vmem:[%s278 + $0x40] sm:$0xf] %vm1681, %v1647
      %1699 = vst.msk [vmem:[%s278 + $0x44] sm:$0xf] %vm1681, %v1648
      %1700 = vst.msk [vmem:[%s278 + $0x48] sm:$0xf] %vm1681, %v1649
      %1701 = vst.msk [vmem:[%s278 + $0x4c] sm:$0xf] %vm1681, %v1650
      %1702 = vst.msk [vmem:[%s278 + $0x50] sm:$0xf] %vm1681, %v1651
      %1703 = vst.msk [vmem:[%s278 + $0x54] sm:$0xf] %vm1681, %v1652
      %1704 = vst.msk [vmem:[%s278 + $0x58] sm:$0xf] %vm1681, %v1653
      %1705 = vst.msk [vmem:[%s278 + $0x5c] sm:$0xf] %vm1681, %v1654
      %1706 = vst.msk [vmem:[%s278 + $0x60] sm:$0xf] %vm1681, %v1655
      %1707 = vst.msk [vmem:[%s278 + $0x64] sm:$0xf] %vm1681, %v1656
      %1708 = vst.msk [vmem:[%s278 + $0x68] sm:$0xf] %vm1681, %v1657
      %1709 = vst.msk [vmem:[%s278 + $0x6c] sm:$0xf] %vm1681, %v1658
      %1710 = vst.msk [vmem:[%s278 + $0x70] sm:$0xf] %vm1681, %v1659
      %1711 = vst.msk [vmem:[%s278 + $0x74] sm:$0xf] %vm1681, %v1660
      %1712 = vst.msk [vmem:[%s278 + $0x78] sm:$0xf] %vm1681, %v1661
      %1713 = vst.msk [vmem:[%s278 + $0x7c] sm:$0xf] %vm1681, %v1662
      %1714 = vst.msk [vmem:[%s278 + $0x80] sm:$0xf] %vm1681, %v1663
      %1715 = vst.msk [vmem:[%s278 + $0x84] sm:$0xf] %vm1681, %v1664
      %1716 = vst.msk [vmem:[%s278 + $0x88] sm:$0xf] %vm1681, %v1665
      %1717 = vst.msk [vmem:[%s278 + $0x8c] sm:$0xf] %vm1681, %v1666
      %1718 = vst.msk [vmem:[%s278 + $0x90] sm:$0xf] %vm1681, %v1667
      %1719 = vst.msk [vmem:[%s278 + $0x94] sm:$0xf] %vm1681, %v1668
      %1720 = vst.msk [vmem:[%s278 + $0x98] sm:$0xf] %vm1681, %v1669
      %1721 = vst.msk [vmem:[%s278 + $0x9c] sm:$0xf] %vm1681, %v1670
      %1722 = vst.msk [vmem:[%s278 + $0xa0] sm:$0xf] %vm1681, %v1671
      %1723 = vst.msk [vmem:[%s278 + $0xa4] sm:$0xf] %vm1681, %v1672
      %1724 = vst.msk [vmem:[%s278 + $0xa8] sm:$0xf] %vm1681, %v1673
      %1725 = vst.msk [vmem:[%s278 + $0xac] sm:$0xf] %vm1681, %v1674
      %1726 = vst.msk [vmem:[%s278 + $0xb0] sm:$0xf] %vm1681, %v1675
      %1727 = vst.msk [vmem:[%s278 + $0xb4] sm:$0xf] %vm1681, %v1676
      %1728 = vst.msk [vmem:[%s278 + $0xb8] sm:$0xf] %vm1681, %v1677
      %1729 = vst.msk [vmem:[%s278 + $0xbc] sm:$0xf] %vm1681, %v1678
      %1730 = vst.msk [vmem:[%s278 + $0xc0] sm:$0xf] %vm1681, %v1679
      %1731 = vst.msk [vmem:[%s278 + $0xc4] sm:$0xf] %vm1681, %v1680
      %p1732 = scmp.lt.s32.totalorder %s18, 5
      %s1733 = scalar_select %p1732, %s18, 5
      %s1734 = smul.addr %s1733, 50
      %s1735 = smul.addr %s1734, 4
      %s1736 = scalar_lea.vmem %s7, %s1735
      // Predicated region
      $region49: #{actor_rgb_forward.3} parent=47 // pred_check
        %p1737 = pneg %p188
      $region50: #{actor_rgb_forward.3} parent=47 // pred_check_branch
        %1739 = sbr.rel (%p1737) target = $region52
      $region51: #{actor_rgb_forward.3} parent=47 // pred_region
        _
      $region52: #{actor_rgb_forward.3} parent=47 // pred_fallthru
        _
    $region48: #{actor_rgb_forward.3} parent=5 // pred_fallthru
      _
    %p1740 = scmp.le.s32.totalorder 2, %s13
    // Predicated region
    $region53: #{actor_rgb_forward.3} parent=5 // pred_check
      %p1741 = pneg %p1740
    $region54: #{actor_rgb_forward.3} parent=5 // pred_check_branch
      %1743 = sbr.rel (%p1741) target = $region56
    $region55: #{actor_rgb_forward.3} parent=5 // pred_region
      %s1744 = ssub.s32 %s13, 2
      // Predicated region
      $region57: #{actor_rgb_forward.3} parent=55 // pred_check
        %p1745 = pneg %p194
      $region58: #{actor_rgb_forward.3} parent=55 // pred_check_branch
        %1747 = sbr.rel (%p1745) target = $region60
      $region59: #{actor_rgb_forward.3} parent=55 // pred_region
        %p1748 = scmp.lt.s32.totalorder %s19, 5
        %s1749 = scalar_select %p1748, %s19, 5
        %s1750 = smul.addr %s1749, 50
        %s1751 = smul.addr %s1750, 4
        %s1752 = scalar_lea.vmem %s7, %s1751
      $region60: #{actor_rgb_forward.3} parent=55 // pred_fallthru
        _
    $region56: #{actor_rgb_forward.3} parent=5 // pred_fallthru
      _
  $region6: #{actor_rgb_forward.3} parent=0 // loop_footer
    %s17 = sadd.s32 1, %s13
  $region7: #{actor_rgb_forward.3} parent=0 // loop_footer_branch
    %12 = sbr.rel target = $region3
  $region8: #{actor_rgb_forward.3} parent=0 // loop_exit
    _

// kernel: actor_rgb_forward.4
$region0: #{actor_rgb_forward.4}
  #allocation0 [shape = 'u32[]', space=smem, size = 0x4, offset = 0x4, fixed_abs, tag = 'smem constant byte address 0x4 - core index']
  #allocation1 [shape = 'u32[72,128]{1,0:T(1,128)}', space=vmem, size = 0x9000, scoped, tag = 'internal scratch']
  %s0 = inlined_call_operand.vmem [shape: bf16[6,81,128], index: 0, kind: input, shape index: {}]
  %s1 = inlined_call_operand.vmem [shape: bf16[128,8], index: 1, kind: input, shape index: {}]
  %s2 = inlined_call_operand.vmem [shape: f32[1,8], index: 2, kind: input, shape index: {}]
  %s3 = inlined_call_operand.vmem [shape: f32[1,8], index: 3, kind: input, shape index: {}]
  %s4 = inlined_call_operand.vmem [shape: f32[1,8], index: 4, kind: input, shape index: {}]
  %s5 = inlined_call_operand.vmem [shape: f32[8,4], index: 5, kind: input, shape index: {}]
  %s6 = inlined_call_operand.vmem [shape: f32[4,8], index: 6, kind: input, shape index: {}]
  %s7 = inlined_call_operand.vmem [shape: bf16[6,81,8], index: 7, kind: output, shape index: {}]
  %s8 = sld [smem:[#allocation0]]
  $region61: #{actor_rgb_forward.4} parent=0
    _
  %s10 = ssub.s32 1, %s8
  %s11 = scalar_select 0, %s10, %s8
  loop: start=0, step=1, limit=8
  $region2: #{actor_rgb_forward.4} parent=0 // loop_pre_header
    _
  $region3: #{actor_rgb_forward.4} parent=0 // loop_header
    %s13 = sphi 0, %s17
    %p14 = scmp.ge.s32.totalorder %s13, 8
    %s23 = sphi 0, %s25
    %s26 = sphi 0, %s23
    %s27 = sphi 0, %s26
    %s43 = sphi 0, %s27
    %s47 = sphi 0, %s47
    %s49 = sphi 0, %s47
    %s50 = sphi 0, %s49
    %s64 = sphi 0, %s50
    %s68 = sphi 0, %s68
    %s70 = sphi 0, %s68
    %s71 = sphi 0, %s70
    %s85 = sphi 0, %s71
    %s89 = sphi 0, %s89
    %s91 = sphi 0, %s89
    %s92 = sphi 0, %s91
    %s106 = sphi 0, %s92
    %s110 = sphi 0, %s110
    %s112 = sphi 0, %s110
    %s113 = sphi 0, %s112
    %s127 = sphi 0, %s113
    %s131 = sphi 0, %s131
    %s133 = sphi 0, %s131
    %s134 = sphi 0, %s133
    %s148 = sphi 0, %s134
    %s152 = sphi 0, %s152
    %s154 = sphi 0, %s152
    %s155 = sphi 0, %s154
    %s169 = sphi 0, %s155
    %s175 = sphi 0, %s177
    %s178 = sphi 0, %s175
    %s179 = sphi 0, %s178
    %s195 = sphi 0, %s179
  $region4: #{actor_rgb_forward.4} parent=0 // loop_header_branch
    %16 = sbr.rel (%p14) target = $region8
  $region5: #{actor_rgb_forward.4} parent=0 // loop_body
    %s18 = ssub.s32 %s13, 1
    %s19 = ssub.s32 %s13, 2
    %s20 = sadd.s32 %s13, 1
    %s21 = ssub.s32 %s13, %s20
    %p22 = scmp.eq.s32.totalorder %s21, 0
    %s24 = sadd.s32 %s23, 1
    %s25 = scalar_select %p22, %s23, %s24
    %p28 = pneg %p22
    %p29 = scmp.eq.s32.totalorder %s13, 5
    %p30 = por %p28, %p29
    %p31 = scmp.ne.s32.totalorder %s23, %s26
    %p32 = scmp.eq.s32.totalorder %s13, 0
    %p33 = por %p31, %p32
    %p34 = scmp.ne.s32.totalorder %s23, %s26
    %p35 = scmp.eq.s32.totalorder %s18, 5
    %p36 = por %p34, %p35
    %p37 = scmp.ne.s32.totalorder %s26, %s27
    %p38 = scmp.eq.s32.totalorder %s18, 0
    %p39 = por %p37, %p38
    %p40 = scmp.ne.s32.totalorder %s26, %s27
    %p41 = scmp.eq.s32.totalorder %s19, 5
    %p42 = por %p40, %p41
    %p44 = scmp.ne.s32.totalorder %s27, %s43
    %p45 = scmp.eq.s32.totalorder %s19, 0
    %p46 = por %p44, %p45
    %s48 = sadd.s32 %s47, 1
    %p51 = scmp.eq.s32.totalorder %s13, 5
    %p52 = scmp.ne.s32.totalorder %s47, %s49
    %p53 = scmp.eq.s32.totalorder %s13, 0
    %p54 = por %p52, %p53
    %p55 = scmp.ne.s32.totalorder %s47, %s49
    %p56 = scmp.eq.s32.totalorder %s18, 5
    %p57 = por %p55, %p56
    %p58 = scmp.ne.s32.totalorder %s49, %s50
    %p59 = scmp.eq.s32.totalorder %s18, 0
    %p60 = por %p58, %p59
    %p61 = scmp.ne.s32.totalorder %s49, %s50
    %p62 = scmp.eq.s32.totalorder %s19, 5
    %p63 = por %p61, %p62
    %p65 = scmp.ne.s32.totalorder %s50, %s64
    %p66 = scmp.eq.s32.totalorder %s19, 0
    %p67 = por %p65, %p66
    %s69 = sadd.s32 %s68, 1
    %p72 = scmp.eq.s32.totalorder %s13, 5
    %p73 = scmp.ne.s32.totalorder %s68, %s70
    %p74 = scmp.eq.s32.totalorder %s13, 0
    %p75 = por %p73, %p74
    %p76 = scmp.ne.s32.totalorder %s68, %s70
    %p77 = scmp.eq.s32.totalorder %s18, 5
    %p78 = por %p76, %p77
    %p79 = scmp.ne.s32.totalorder %s70, %s71
    %p80 = scmp.eq.s32.totalorder %s18, 0
    %p81 = por %p79, %p80
    %p82 = scmp.ne.s32.totalorder %s70, %s71
    %p83 = scmp.eq.s32.totalorder %s19, 5
    %p84 = por %p82, %p83
    %p86 = scmp.ne.s32.totalorder %s71, %s85
    %p87 = scmp.eq.s32.totalorder %s19, 0
    %p88 = por %p86, %p87
    %s90 = sadd.s32 %s89, 1
    %p93 = scmp.eq.s32.totalorder %s13, 5
    %p94 = scmp.ne.s32.totalorder %s89, %s91
    %p95 = scmp.eq.s32.totalorder %s13, 0
    %p96 = por %p94, %p95
    %p97 = scmp.ne.s32.totalorder %s89, %s91
    %p98 = scmp.eq.s32.totalorder %s18, 5
    %p99 = por %p97, %p98
    %p100 = scmp.ne.s32.totalorder %s91, %s92
    %p101 = scmp.eq.s32.totalorder %s18, 0
    %p102 = por %p100, %p101
    %p103 = scmp.ne.s32.totalorder %s91, %s92
    %p104 = scmp.eq.s32.totalorder %s19, 5
    %p105 = por %p103, %p104
    %p107 = scmp.ne.s32.totalorder %s92, %s106
    %p108 = scmp.eq.s32.totalorder %s19, 0
    %p109 = por %p107, %p108
    %s111 = sadd.s32 %s110, 1
    %p114 = scmp.eq.s32.totalorder %s13, 5
    %p115 = scmp.ne.s32.totalorder %s110, %s112
    %p116 = scmp.eq.s32.totalorder %s13, 0
    %p117 = por %p115, %p116
    %p118 = scmp.ne.s32.totalorder %s110, %s112
    %p119 = scmp.eq.s32.totalorder %s18, 5
    %p120 = por %p118, %p119
    %p121 = scmp.ne.s32.totalorder %s112, %s113
    %p122 = scmp.eq.s32.totalorder %s18, 0
    %p123 = por %p121, %p122
    %p124 = scmp.ne.s32.totalorder %s112, %s113
    %p125 = scmp.eq.s32.totalorder %s19, 5
    %p126 = por %p124, %p125
    %p128 = scmp.ne.s32.totalorder %s113, %s127
    %p129 = scmp.eq.s32.totalorder %s19, 0
    %p130 = por %p128, %p129
    %s132 = sadd.s32 %s131, 1
    %p135 = scmp.eq.s32.totalorder %s13, 5
    %p136 = scmp.ne.s32.totalorder %s131, %s133
    %p137 = scmp.eq.s32.totalorder %s13, 0
    %p138 = por %p136, %p137
    %p139 = scmp.ne.s32.totalorder %s131, %s133
    %p140 = scmp.eq.s32.totalorder %s18, 5
    %p141 = por %p139, %p140
    %p142 = scmp.ne.s32.totalorder %s133, %s134
    %p143 = scmp.eq.s32.totalorder %s18, 0
    %p144 = por %p142, %p143
    %p145 = scmp.ne.s32.totalorder %s133, %s134
    %p146 = scmp.eq.s32.totalorder %s19, 5
    %p147 = por %p145, %p146
    %p149 = scmp.ne.s32.totalorder %s134, %s148
    %p150 = scmp.eq.s32.totalorder %s19, 0
    %p151 = por %p149, %p150
    %s153 = sadd.s32 %s152, 1
    %p156 = scmp.eq.s32.totalorder %s13, 5
    %p157 = scmp.ne.s32.totalorder %s152, %s154
    %p158 = scmp.eq.s32.totalorder %s13, 0
    %p159 = por %p157, %p158
    %p160 = scmp.ne.s32.totalorder %s152, %s154
    %p161 = scmp.eq.s32.totalorder %s18, 5
    %p162 = por %p160, %p161
    %p163 = scmp.ne.s32.totalorder %s154, %s155
    %p164 = scmp.eq.s32.totalorder %s18, 0
    %p165 = por %p163, %p164
    %p166 = scmp.ne.s32.totalorder %s154, %s155
    %p167 = scmp.eq.s32.totalorder %s19, 5
    %p168 = por %p166, %p167
    %p170 = scmp.ne.s32.totalorder %s155, %s169
    %p171 = scmp.eq.s32.totalorder %s19, 0
    %p172 = por %p170, %p171
    %s173 = ssub.s32 %s13, %s20
    %p174 = scmp.eq.s32.totalorder %s173, 0
    %s176 = sadd.s32 %s175, 1
    %s177 = scalar_select %p174, %s175, %s176
    %p180 = pneg %p174
    %p181 = scmp.eq.s32.totalorder %s13, 5
    %p182 = por %p180, %p181
    %p183 = scmp.ne.s32.totalorder %s175, %s178
    %p184 = scmp.eq.s32.totalorder %s13, 0
    %p185 = por %p183, %p184
    %p186 = scmp.ne.s32.totalorder %s175, %s178
    %p187 = scmp.eq.s32.totalorder %s18, 5
    %p188 = por %p186, %p187
    %p189 = scmp.ne.s32.totalorder %s178, %s179
    %p190 = scmp.eq.s32.totalorder %s18, 0
    %p191 = por %p189, %p190
    %p192 = scmp.ne.s32.totalorder %s178, %s179
    %p193 = scmp.eq.s32.totalorder %s19, 5
    %p194 = por %p192, %p193
    %p196 = scmp.ne.s32.totalorder %s179, %s195
    %p197 = scmp.eq.s32.totalorder %s19, 0
    %p198 = por %p196, %p197
    %p199 = scmp.le.s32.totalorder 1, %s13
    %p200 = scmp.lt.s32.totalorder %s13, 7
    %p201 = pnand %p199, %p200
    %p202 = pneg %p201
    // Predicated region
    $region9: #{actor_rgb_forward.4} parent=5 // pred_check
      _
    $region10: #{actor_rgb_forward.4} parent=5 // pred_check_branch
      %204 = sbr.rel (%p201) target = $region12
    $region11: #{actor_rgb_forward.4} parent=5 // pred_region
      %s205 = ssub.s32 %s13, 1
      // Predicated region
      $region13: #{actor_rgb_forward.4} parent=11 // pred_check
        %p206 = pneg %p60
      $region14: #{actor_rgb_forward.4} parent=11 // pred_check_branch
        %208 = sbr.rel (%p206) target = $region16
      $region15: #{actor_rgb_forward.4} parent=11 // pred_region
        _
      $region16: #{actor_rgb_forward.4} parent=11 // pred_fallthru
        _
      // Predicated region
      $region17: #{actor_rgb_forward.4} parent=11 // pred_check
        %p209 = pneg %p81
      $region18: #{actor_rgb_forward.4} parent=11 // pred_check_branch
        %211 = sbr.rel (%p209) target = $region20
      $region19: #{actor_rgb_forward.4} parent=11 // pred_region
        _
      $region20: #{actor_rgb_forward.4} parent=11 // pred_fallthru
        _
      // Predicated region
      $region21: #{actor_rgb_forward.4} parent=11 // pred_check
        %p212 = pneg %p102
      $region22: #{actor_rgb_forward.4} parent=11 // pred_check_branch
        %214 = sbr.rel (%p212) target = $region24
      $region23: #{actor_rgb_forward.4} parent=11 // pred_region
        _
      $region24: #{actor_rgb_forward.4} parent=11 // pred_fallthru
        _
      // Predicated region
      $region25: #{actor_rgb_forward.4} parent=11 // pred_check
        %p215 = pneg %p123
      $region26: #{actor_rgb_forward.4} parent=11 // pred_check_branch
        %217 = sbr.rel (%p215) target = $region28
      $region27: #{actor_rgb_forward.4} parent=11 // pred_region
        _
      $region28: #{actor_rgb_forward.4} parent=11 // pred_fallthru
        _
      // Predicated region
      $region29: #{actor_rgb_forward.4} parent=11 // pred_check
        %p218 = pneg %p144
      $region30: #{actor_rgb_forward.4} parent=11 // pred_check_branch
        %220 = sbr.rel (%p218) target = $region32
      $region31: #{actor_rgb_forward.4} parent=11 // pred_region
        _
      $region32: #{actor_rgb_forward.4} parent=11 // pred_fallthru
        _
      // Predicated region
      $region33: #{actor_rgb_forward.4} parent=11 // pred_check
        %p221 = pneg %p165
      $region34: #{actor_rgb_forward.4} parent=11 // pred_check_branch
        %223 = sbr.rel (%p221) target = $region36
      $region35: #{actor_rgb_forward.4} parent=11 // pred_region
        _
      $region36: #{actor_rgb_forward.4} parent=11 // pred_fallthru
        _
    $region12: #{actor_rgb_forward.4} parent=5 // pred_fallthru
      _
    %p224 = scmp.lt.s32.totalorder %s13, 6
    // Predicated region
    $region37: #{actor_rgb_forward.4} parent=5 // pred_check
      %p225 = pneg %p224
    $region38: #{actor_rgb_forward.4} parent=5 // pred_check_branch
      %227 = sbr.rel (%p225) target = $region40
    $region39: #{actor_rgb_forward.4} parent=5 // pred_region
      // Predicated region
      $region41: #{actor_rgb_forward.4} parent=39 // pred_check
        %p228 = pneg %p33
      $region42: #{actor_rgb_forward.4} parent=39 // pred_check_branch
        %230 = sbr.rel (%p228) target = $region44
      $region43: #{actor_rgb_forward.4} parent=39 // pred_region
        %p231 = scmp.lt.s32.totalorder %s13, 5
        %s232 = scalar_select %p231, %s13, 5
        %s233 = smul.addr %s232, 11
        %s234 = smul.addr %s233, 4
        %s235 = scalar_lea.vmem %s0, %s234
      $region44: #{actor_rgb_forward.4} parent=39 // pred_fallthru
        _
    $region40: #{actor_rgb_forward.4} parent=5 // pred_fallthru
      _
    %p236 = scmp.le.s32.totalorder 1, %s13
    %p237 = scmp.lt.s32.totalorder %s13, 7
    %p238 = pnand %p236, %p237
    %p239 = pneg %p238
    // Predicated region
    $region45: #{actor_rgb_forward.4} parent=5 // pred_check
      _
    $region46: #{actor_rgb_forward.4} parent=5 // pred_check_branch
      %241 = sbr.rel (%p238) target = $region48
    $region47: #{actor_rgb_forward.4} parent=5 // pred_region
      %s242 = ssub.s32 %s13, 1
      %p243 = scmp.lt.s32.totalorder %s18, 5
      %s244 = scalar_select %p243, %s18, 5
      %s245 = smul.addr %s244, 11
      %s246 = smul.addr %s245, 4
      %s247 = scalar_lea.vmem %s0, %s246
      %p248 = pneg %p39
      %p249 = pneg %p36
      %p250 = pneg %p60
      %p251 = pneg %p57
      %p252 = pneg %p81
      %p253 = pneg %p78
      %p254 = pneg %p102
      %p255 = pneg %p99
      %p256 = pneg %p123
      %p257 = pneg %p120
      %p258 = pneg %p144
      %p259 = pneg %p141
      %p260 = pneg %p165
      %p261 = pneg %p162
      %p262 = pneg %p191
      %p263 = pneg %p188
      %p264 = scmp.lt.s32.totalorder %s18, 5
      %s265 = scalar_select %p264, %s18, 5
      %s266 = smul.addr %s265, 11
      %s267 = smul.addr %s266, 4
      %s268 = scalar_lea.vmem %s7, %s267
      %p269 = scmp.lt.s32.totalorder %s18, 5
      %s270 = scalar_select %p269, %s18, 5
      %s271 = smul.addr %s270, 11
      %s272 = smul.addr %s271, 4
      %s273 = scalar_lea.vmem %s0, %s272
      %p274 = scmp.lt.s32.totalorder %s18, 5
      %s275 = scalar_select %p274, %s18, 5
      %s276 = smul.addr %s275, 11
      %s277 = smul.addr %s276, 4
      %s278 = scalar_lea.vmem %s7, %s277
      %v279 = vld [vmem:[%s273] sm:$0xf]
      %v280 = vld [vmem:[%s273 + $0x4] sm:$0xf]
      %v281 = vld [vmem:[%s273 + $0x8] sm:$0xf]
      %v282 = vld [vmem:[%s273 + $0xc] sm:$0xf]
      %v283 = vld [vmem:[%s273 + $0x10] sm:$0xf]
      %v284 = vld [vmem:[%s273 + $0x14] sm:$0xf]
      %v285 = vld [vmem:[%s273 + $0x18] sm:$0xf]
      %v286 = vld [vmem:[%s273 + $0x1c] sm:$0xf]
      %v287 = vld [vmem:[%s273 + $0x20] sm:$0xf]
      %v288 = vld [vmem:[%s273 + $0x24] sm:$0xf]
      %v289 = vld [vmem:[%s273 + $0x28] sm:$0x1]
      %v290 = vld [vmem:[%s1] sm:$0xf]
      %v291 = vld [vmem:[%s1 + $0x4] sm:$0xf]
      %v292 = vld [vmem:[%s1 + $0x8] sm:$0xf]
      %v293 = vld [vmem:[%s1 + $0xc] sm:$0xf]
      %v294 = vld [vmem:[%s1 + $0x10] sm:$0xf]
      %v295 = vld [vmem:[%s1 + $0x14] sm:$0xf]
      %v296 = vld [vmem:[%s1 + $0x18] sm:$0xf]
      %v297 = vld [vmem:[%s1 + $0x1c] sm:$0xf]
      %v298 = vld [vmem:[%s1 + $0x20] sm:$0xf]
      %v299 = vld [vmem:[%s1 + $0x24] sm:$0xf]
      %v300 = vld [vmem:[%s1 + $0x28] sm:$0xf]
      %v301 = vld [vmem:[%s1 + $0x2c] sm:$0xf]
      %v302 = vld [vmem:[%s1 + $0x30] sm:$0xf]
      %v303 = vld [vmem:[%s1 + $0x34] sm:$0xf]
      %v304 = vld [vmem:[%s1 + $0x38] sm:$0xf]
      %v305 = vld [vmem:[%s1 + $0x3c] sm:$0xf]
      %v306 = vld [vmem:[%s2] sm:$0x1]
      %v308 = vperm.slane %v306, 0
      %v321 = vunpack.c.l.b16 %v279
      %v322 = vunpack.c.l.b16 %v280
      %v323 = vunpack.c.l.b16 %v281
      %v324 = vunpack.c.l.b16 %v282
      %v325 = vunpack.c.l.b16 %v283
      %v326 = vunpack.c.l.b16 %v284
      %v327 = vunpack.c.l.b16 %v285
      %v328 = vunpack.c.l.b16 %v286
      %v329 = vunpack.c.l.b16 %v287
      %v330 = vunpack.c.l.b16 %v288
      %v331 = vunpack.c.l.b16 %v289
      %v332 = vpack.c.b16 %v322, %v321
      %v333 = vpack.c.b16 %v324, %v323
      %v334 = vpack.c.b16 %v326, %v325
      %v335 = vpack.c.b16 %v328, %v327
      %v336 = vpack.c.b16 %v330, %v329
      %v337 = vpack.c.b16 %v331, %v331
      %v360 = vunpack.c.l.b16 %v290
      %v361 = vunpack.c.l.b16 %v291
      %v362 = vunpack.c.l.b16 %v292
      %v363 = vunpack.c.l.b16 %v293
      %v364 = vunpack.c.l.b16 %v294
      %v365 = vunpack.c.l.b16 %v295
      %v366 = vunpack.c.l.b16 %v296
      %v367 = vunpack.c.l.b16 %v297
      %v368 = vunpack.c.l.b16 %v298
      %v369 = vunpack.c.l.b16 %v299
      %v370 = vunpack.c.l.b16 %v300
      %v371 = vunpack.c.l.b16 %v301
      %v372 = vunpack.c.l.b16 %v302
      %v373 = vunpack.c.l.b16 %v303
      %v374 = vunpack.c.l.b16 %v304
      %v375 = vunpack.c.l.b16 %v305
      %v376 = vpack.c.b16 %v361, %v360
      %v377 = vpack.c.b16 %v363, %v362
      %v378 = vpack.c.b16 %v365, %v364
      %v379 = vpack.c.b16 %v367, %v366
      %v380 = vpack.c.b16 %v369, %v368
      %v381 = vpack.c.b16 %v371, %v370
      %v382 = vpack.c.b16 %v373, %v372
      %v383 = vpack.c.b16 %v375, %v374
      %392 = vmatpush.bf16.msra.mxu0 %v383
      %393 = vmatpush.bf16.msra.mxu0 %v382
      %394 = vmatpush.bf16.msra.mxu0 %v381
      %395 = vmatpush.bf16.msra.mxu0 %v380
      %396 = vmatpush.bf16.msra.mxu0 %v379
      %397 = vmatpush.bf16.msra.mxu0 %v378
      %398 = vmatpush.bf16.msra.mxu0 %v377
      %399 = vmatpush.bf16.msra.mxu0 %v376
      %400 = vmatmul.bf16.gmra.mxu0 %v332
      %v401 = vpop.f32.mrf.mxu0
      %v402 = vadd.f32 %v308, %v401
      %v403 = vpop.f32.mrf.mxu0
      %v404 = vadd.f32 %v308, %v403
      %405 = vmatmul.bf16.gmra.mxu0 %v333
      %v406 = vpop.f32.mrf.mxu0
      %v407 = vadd.f32 %v308, %v406
      %v408 = vpop.f32.mrf.mxu0
      %v409 = vadd.f32 %v308, %v408
      %410 = vmatmul.bf16.gmra.mxu0 %v334
      %v411 = vpop.f32.mrf.mxu0
      %v412 = vadd.f32 %v308, %v411
      %v413 = vpop.f32.mrf.mxu0
      %v414 = vadd.f32 %v308, %v413
      %415 = vmatmul.bf16.gmra.mxu0 %v335
      %v416 = vpop.f32.mrf.mxu0
      %v417 = vadd.f32 %v308, %v416
      %v418 = vpop.f32.mrf.mxu0
      %v419 = vadd.f32 %v308, %v418
      %420 = vmatmul.bf16.gmra.mxu0 %v336
      %v421 = vpop.f32.mrf.mxu0
      %v422 = vadd.f32 %v308, %v421
      %v423 = vpop.f32.mrf.mxu0
      %v424 = vadd.f32 %v308, %v423
      %425 = vmatmul.bf16.gmra.mxu0 %v337
      %v426 = vpop.f32.mrf.mxu0
      %v427 = vadd.f32 %v308, %v426
      %v428 = vpop.f32.mrf.mxu0
      %429 = vdwg.mxu0
      %v430 = vmax.f32 %v402, 0.0
      %v431 = vmax.f32 %v404, 0.0
      %v432 = vmax.f32 %v407, 0.0
      %v433 = vmax.f32 %v409, 0.0
      %v434 = vmax.f32 %v412, 0.0
      %v435 = vmax.f32 %v414, 0.0
      %v436 = vmax.f32 %v417, 0.0
      %v437 = vmax.f32 %v419, 0.0
      %v438 = vmax.f32 %v422, 0.0
      %v439 = vmax.f32 %v424, 0.0
      %v440 = vmax.f32 %v427, 0.0
      %vm441 = vcmask 64512
      %v442 = vsel %vm441, %v430, 0.0
      %v443 = vsel %vm441, %v431, 0.0
      %v444 = vadd.f32 %v442, %v443
      %v445 = vsel %vm441, %v432, 0.0
      %v446 = vadd.f32 %v444, %v445
      %v447 = vsel %vm441, %v433, 0.0
      %v448 = vadd.f32 %v446, %v447
      %v449 = vsel %vm441, %v434, 0.0
      %v450 = vadd.f32 %v448, %v449
      %v451 = vsel %vm441, %v435, 0.0
      %v452 = vadd.f32 %v450, %v451
      %v453 = vsel %vm441, %v436, 0.0
      %v454 = vadd.f32 %v452, %v453
      %v455 = vsel %vm441, %v437, 0.0
      %v456 = vadd.f32 %v454, %v455
      %v457 = vsel %vm441, %v438, 0.0
      %v458 = vadd.f32 %v456, %v457
      %v459 = vsel %vm441, %v439, 0.0
      %v460 = vadd.f32 %v458, %v459
      %vm461 = vcmask 57344
      %v462 = vsel %vm461, %v440, 0.0
      %v463 = vadd.f32 %v460, %v462
      %v464 = vrot.slane %v463, 4
      %v465 = vadd.f32 %v463, %v464
      %v466 = vrot.slane %v465, 2
      %v467 = vadd.f32 %v465, %v466
      %v468 = vrot.slane %v467, 1
      %v469 = vadd.f32 %v467, %v468
      %v470 = vld [vmem:[%s5] sm:$0xff]
      %v472 = vsel %vm441, %v469, 0
      %474 = vmatpush.msra.mxu0 0.0
      %475 = vmatpush.msra.mxu0 0.0
      %476 = vmatpush.msra.mxu0 0.0
      %477 = vmatpush.msra.mxu0 0.0
      %478 = vmatpush.msra.mxu0 0.0
      %479 = vmatpush.msra.mxu0 0.0
      %480 = vmatpush.msra.mxu0 0.0
      %481 = vmatpush.msra.mxu0 0.0
      %482 = vmatpush.msra.mxu0 0.0
      %483 = vmatpush.msra.mxu0 0.0
      %484 = vmatpush.msra.mxu0 0.0
      %485 = vmatpush.msra.mxu0 0.0
      %486 = vmatpush.msra.mxu0 0.0
      %487 = vmatpush.msra.mxu0 0.0
      %488 = vmatpush.msra.mxu0 0.0
      %489 = vmatpush.msra.mxu0 %v470
      %490 = vmatmul.f32.gmra.mxu0 %v472
      %v491 = vpop.f32.mrf.mxu0
      %v492 = vadd.f32 0.0, %v491
      %493 = vdwg.mxu0
      %v494 = vmul.f32 %v492, 0.0061728396
      %v495 = vld [vmem:[%s6] sm:$0xf]
      %vm496 = vcmask 31744
      %v498 = vsel %vm496, %v494, 0
      %vm500 = vcmask 1043456
      %v502 = vsel %vm500, %v495, 0
      %504 = vmatpush.msra.mxu0 0.0
      %505 = vmatpush.msra.mxu0 0.0
      %506 = vmatpush.msra.mxu0 0.0
      %507 = vmatpush.msra.mxu0 0.0
      %508 = vmatpush.msra.mxu0 0.0
      %509 = vmatpush.msra.mxu0 0.0
      %510 = vmatpush.msra.mxu0 0.0
      %511 = vmatpush.msra.mxu0 0.0
      %512 = vmatpush.msra.mxu0 0.0
      %513 = vmatpush.msra.mxu0 0.0
      %514 = vmatpush.msra.mxu0 0.0
      %515 = vmatpush.msra.mxu0 0.0
      %516 = vmatpush.msra.mxu0 0.0
      %517 = vmatpush.msra.mxu0 0.0
      %518 = vmatpush.msra.mxu0 0.0
      %519 = vmatpush.msra.mxu0 %v502
      %520 = vmatmul.f32.gmra.mxu0 %v498
      %v521 = vpop.f32.mrf.mxu0
      %v522 = vadd.f32 0.0, %v521
      %523 = vdwg.mxu0
      %v524 = vperm.slane %v522, 0
      %v525 = vsub.f32 %v430, %v524
      %v526 = vsub.f32 %v431, %v524
      %v527 = vsub.f32 %v432, %v524
      %v528 = vsub.f32 %v433, %v524
      %v529 = vsub.f32 %v434, %v524
      %v530 = vsub.f32 %v435, %v524
      %v531 = vsub.f32 %v436, %v524
      %v532 = vsub.f32 %v437, %v524
      %v533 = vsub.f32 %v438, %v524
      %v534 = vsub.f32 %v439, %v524
      %v535 = vsub.f32 %v440, %v524
      %v536 = vmul.f32 %v525, %v525
      %v537 = vmul.f32 %v526, %v526
      %v538 = vmul.f32 %v527, %v527
      %v539 = vmul.f32 %v528, %v528
      %v540 = vmul.f32 %v529, %v529
      %v541 = vmul.f32 %v530, %v530
      %v542 = vmul.f32 %v531, %v531
      %v543 = vmul.f32 %v532, %v532
      %v544 = vmul.f32 %v533, %v533
      %v545 = vmul.f32 %v534, %v534
      %v546 = vmul.f32 %v535, %v535
      %v547 = vsel %vm441, %v536, 0.0
      %v548 = vsel %vm441, %v537, 0.0
      %v549 = vadd.f32 %v547, %v548
      %v550 = vsel %vm441, %v538, 0.0
      %v551 = vadd.f32 %v549, %v550
      %v552 = vsel %vm441, %v539, 0.0
      %v553 = vadd.f32 %v551, %v552
      %v554 = vsel %vm441, %v540, 0.0
      %v555 = vadd.f32 %v553, %v554
      %v556 = vsel %vm441, %v541, 0.0
      %v557 = vadd.f32 %v555, %v556
      %v558 = vsel %vm441, %v542, 0.0
      %v559 = vadd.f32 %v557, %v558
      %v560 = vsel %vm441, %v543, 0.0
      %v561 = vadd.f32 %v559, %v560
      %v562 = vsel %vm441, %v544, 0.0
      %v563 = vadd.f32 %v561, %v562
      %v564 = vsel %vm441, %v545, 0.0
      %v565 = vadd.f32 %v563, %v564
      %v566 = vsel %vm461, %v546, 0.0
      %v567 = vadd.f32 %v565, %v566
      %v568 = vrot.slane %v567, 4
      %v569 = vadd.f32 %v567, %v568
      %v570 = vrot.slane %v569, 2
      %v571 = vadd.f32 %v569, %v570
      %v572 = vrot.slane %v571, 1
      %v573 = vadd.f32 %v571, %v572
      %v575 = vsel %vm441, %v573, 0
      %577 = vmatpush.msra.mxu0 0.0
      %578 = vmatpush.msra.mxu0 0.0
      %579 = vmatpush.msra.mxu0 0.0
      %580 = vmatpush.msra.mxu0 0.0
      %581 = vmatpush.msra.mxu0 0.0
      %582 = vmatpush.msra.mxu0 0.0
      %583 = vmatpush.msra.mxu0 0.0
      %584 = vmatpush.msra.mxu0 0.0
      %585 = vmatpush.msra.mxu0 0.0
      %586 = vmatpush.msra.mxu0 0.0
      %587 = vmatpush.msra.mxu0 0.0
      %588 = vmatpush.msra.mxu0 0.0
      %589 = vmatpush.msra.mxu0 0.0
      %590 = vmatpush.msra.mxu0 0.0
      %591 = vmatpush.msra.mxu0 0.0
      %592 = vmatpush.msra.mxu0 %v470
      %593 = vmatmul.f32.gmra.mxu0 %v575
      %v594 = vpop.f32.mrf.mxu0
      %v595 = vadd.f32 0.0, %v594
      %596 = vdwg.mxu0
      %v597 = vmul.f32 %v595, 0.0061728396
      %v599 = vsel %vm496, %v597, 0
      %601 = vmatpush.msra.mxu0 0.0
      %602 = vmatpush.msra.mxu0 0.0
      %603 = vmatpush.msra.mxu0 0.0
      %604 = vmatpush.msra.mxu0 0.0
      %605 = vmatpush.msra.mxu0 0.0
      %606 = vmatpush.msra.mxu0 0.0
      %607 = vmatpush.msra.mxu0 0.0
      %608 = vmatpush.msra.mxu0 0.0
      %609 = vmatpush.msra.mxu0 0.0
      %610 = vmatpush.msra.mxu0 0.0
      %611 = vmatpush.msra.mxu0 0.0
      %612 = vmatpush.msra.mxu0 0.0
      %613 = vmatpush.msra.mxu0 0.0
      %614 = vmatpush.msra.mxu0 0.0
      %615 = vmatpush.msra.mxu0 0.0
      %616 = vmatpush.msra.mxu0 %v502
      %617 = vmatmul.f32.gmra.mxu0 %v599
      %v618 = vpop.f32.mrf.mxu0
      %v619 = vadd.f32 1e-05, %v618
      %620 = vdwg.mxu0
      %v621 = vrsqrt.pop %v619
      %v622 = vmul.f32 %v621, %v619
      %v623 = vmul.f32 %v622, %v621
      %v624 = vmul.f32 0.5, %v623
      %v625 = vsub.f32 1.5, %v624
      %v626 = vmul.f32 %v621, %v625
      %vm627 = vweird.f32 %v619
      %vm628 = vweird.f32 %v621
      %vm629 = vmor %vm627, %vm628
      %v630 = vsel %vm629, %v621, %v626
      %v631 = vperm.slane %v630, 0
      %v632 = vmul.f32 %v525, %v631
      %v633 = vmul.f32 %v526, %v631
      %v634 = vmul.f32 %v527, %v631
      %v635 = vmul.f32 %v528, %v631
      %v636 = vmul.f32 %v529, %v631
      %v637 = vmul.f32 %v530, %v631
      %v638 = vmul.f32 %v531, %v631
      %v639 = vmul.f32 %v532, %v631
      %v640 = vmul.f32 %v533, %v631
      %v641 = vmul.f32 %v534, %v631
      %v642 = vmul.f32 %v535, %v631
      %v643 = vld [vmem:[%s3] sm:$0x1]
      %v645 = vperm.slane %v643, 0
      %v647 = vmul.f32 %v632, %v645
      %v648 = vmul.f32 %v633, %v645
      %v649 = vmul.f32 %v634, %v645
      %v650 = vmul.f32 %v635, %v645
      %v651 = vmul.f32 %v636, %v645
      %v652 = vmul.f32 %v637, %v645
      %v653 = vmul.f32 %v638, %v645
      %v654 = vmul.f32 %v639, %v645
      %v655 = vmul.f32 %v640, %v645
      %v656 = vmul.f32 %v641, %v645
      %v657 = vmul.f32 %v642, %v645
      %v658 = vld [vmem:[%s4] sm:$0x1]
      %v660 = vperm.slane %v658, 0
      %v662 = vadd.f32 %v647, %v660
      %v663 = vadd.f32 %v648, %v660
      %v664 = vadd.f32 %v649, %v660
      %v665 = vadd.f32 %v650, %v660
      %v666 = vadd.f32 %v651, %v660
      %v667 = vadd.f32 %v652, %v660
      %v668 = vadd.f32 %v653, %v660
      %v669 = vadd.f32 %v654, %v660
      %v670 = vadd.f32 %v655, %v660
      %v671 = vadd.f32 %v656, %v660
      %v672 = vadd.f32 %v657, %v660
      %v673 = vpack.c.bf16 %v662, %v662
      %v674 = vpack.c.bf16 %v663, %v663
      %v675 = vpack.c.bf16 %v664, %v664
      %v676 = vpack.c.bf16 %v665, %v665
      %v677 = vpack.c.bf16 %v666, %v666
      %v678 = vpack.c.bf16 %v667, %v667
      %v679 = vpack.c.bf16 %v668, %v668
      %v680 = vpack.c.bf16 %v669, %v669
      %v681 = vpack.c.bf16 %v670, %v670
      %v682 = vpack.c.bf16 %v671, %v671
      %v683 = vpack.c.bf16 %v672, %v672
      %vm684 = vcmask 60416
      %685 = vst.msk [vmem:[%s278] sm:$0xf] %vm684, %v673
      %686 = vst.msk [vmem:[%s278 + $0x4] sm:$0xf] %vm684, %v674
      %687 = vst.msk [vmem:[%s278 + $0x8] sm:$0xf] %vm684, %v675
      %688 = vst.msk [vmem:[%s278 + $0xc] sm:$0xf] %vm684, %v676
      %689 = vst.msk [vmem:[%s278 + $0x10] sm:$0xf] %vm684, %v677
      %690 = vst.msk [vmem:[%s278 + $0x14] sm:$0xf] %vm684, %v678
      %691 = vst.msk [vmem:[%s278 + $0x18] sm:$0xf] %vm684, %v679
      %692 = vst.msk [vmem:[%s278 + $0x1c] sm:$0xf] %vm684, %v680
      %693 = vst.msk [vmem:[%s278 + $0x20] sm:$0xf] %vm684, %v681
      %694 = vst.msk [vmem:[%s278 + $0x24] sm:$0xf] %vm684, %v682
      %vm695 = vcmask 57344
      %vm696 = vsmask.f32 256
      %vm697 = vmand %vm695, %vm696
      %v698 = vld [vmem:[%s278 + $0x28] sm:$0x1]
      %v699 = vsel %vm697, %v683, %v698
      %700 = vst [vmem:[%s278 + $0x28] sm:$0x1] %v699
      %p701 = scmp.lt.s32.totalorder %s18, 5
      %s702 = scalar_select %p701, %s18, 5
      %s703 = smul.addr %s702, 11
      %s704 = smul.addr %s703, 4
      %s705 = scalar_lea.vmem %s7, %s704
      // Predicated region
      $region49: #{actor_rgb_forward.4} parent=47 // pred_check
        %p706 = pneg %p188
      $region50: #{actor_rgb_forward.4} parent=47 // pred_check_branch
        %708 = sbr.rel (%p706) target = $region52
      $region51: #{actor_rgb_forward.4} parent=47 // pred_region
        _
      $region52: #{actor_rgb_forward.4} parent=47 // pred_fallthru
        _
    $region48: #{actor_rgb_forward.4} parent=5 // pred_fallthru
      _
    %p709 = scmp.le.s32.totalorder 2, %s13
    // Predicated region
    $region53: #{actor_rgb_forward.4} parent=5 // pred_check
      %p710 = pneg %p709
    $region54: #{actor_rgb_forward.4} parent=5 // pred_check_branch
      %712 = sbr.rel (%p710) target = $region56
    $region55: #{actor_rgb_forward.4} parent=5 // pred_region
      %s713 = ssub.s32 %s13, 2
      // Predicated region
      $region57: #{actor_rgb_forward.4} parent=55 // pred_check
        %p714 = pneg %p194
      $region58: #{actor_rgb_forward.4} parent=55 // pred_check_branch
        %716 = sbr.rel (%p714) target = $region60
      $region59: #{actor_rgb_forward.4} parent=55 // pred_region
        %p717 = scmp.lt.s32.totalorder %s19, 5
        %s718 = scalar_select %p717, %s19, 5
        %s719 = smul.addr %s718, 11
        %s720 = smul.addr %s719, 4
        %s721 = scalar_lea.vmem %s7, %s720
      $region60: #{actor_rgb_forward.4} parent=55 // pred_fallthru
        _
    $region56: #{actor_rgb_forward.4} parent=5 // pred_fallthru
      _
  $region6: #{actor_rgb_forward.4} parent=0 // loop_footer
    %s17 = sadd.s32 1, %s13
  $region7: #{actor_rgb_forward.4} parent=0 // loop_footer_branch
    %12 = sbr.rel target = $region3
  $region8: #{actor_rgb_forward.4} parent=0 // loop_exit
    _

// kernel: actor_rgb_forward.5
$region0: #{actor_rgb_forward.5}
  #allocation0 [shape = 'u32[]', space=smem, size = 0x4, offset = 0x4, fixed_abs, tag = 'smem constant byte address 0x4 - core index']
  #allocation1 [shape = 'u32[72,128]{1,0:T(1,128)}', space=vmem, size = 0x9000, scoped, tag = 'internal scratch']
  %s0 = inlined_call_operand.vmem [shape: bf16[6,648], index: 0, kind: input, shape index: {}]
  %s1 = inlined_call_operand.vmem [shape: bf16[648,32], index: 1, kind: input, shape index: {}]
  %s2 = inlined_call_operand.vmem [shape: f32[1,32], index: 2, kind: input, shape index: {}]
  %s3 = inlined_call_operand.vmem [shape: bf16[32,48], index: 3, kind: input, shape index: {}]
  %s4 = inlined_call_operand.vmem [shape: f32[1,48], index: 4, kind: input, shape index: {}]
  %s5 = inlined_call_operand.vmem [shape: f32[16,48], index: 5, kind: input, shape index: {}]
  %s6 = inlined_call_operand.vmem [shape: f32[1,48], index: 6, kind: input, shape index: {}]
  %s7 = inlined_call_operand.vmem [shape: bf16[16,200], index: 7, kind: input, shape index: {}]
  %s8 = inlined_call_operand.vmem [shape: f32[1,200], index: 8, kind: input, shape index: {}]
  %s9 = inlined_call_operand.vmem [shape: bf16[200,100], index: 9, kind: input, shape index: {}]
  %s10 = inlined_call_operand.vmem [shape: f32[1,100], index: 10, kind: input, shape index: {}]
  %s11 = inlined_call_operand.vmem [shape: f32[100,4], index: 11, kind: input, shape index: {}]
  %s12 = inlined_call_operand.vmem [shape: f32[1,4], index: 12, kind: input, shape index: {}]
  %s13 = inlined_call_operand.hbm [shape: f32[3,2,4], index: 13, kind: output, shape index: {0}]
  %s14 = inlined_call_operand.hbm [shape: f32[2,16], index: 14, kind: output, shape index: {1}]
  %15 = xla_tuple %s13, %s14
  %s16 = sld [smem:[#allocation0]]
  $region70: #{actor_rgb_forward.5} parent=0
    _
  %s18 = ssub.s32 1, %s16
  %s19 = scalar_select 0, %s18, %s16
  $region1: #{actor_rgb_forward.5} parent=0
    #allocation2 [shape = 'u8[3072]{0}', space=vmem, size = 0xc00, scoped, tag = 'output window, operand 0, single buffered']
    #allocation3 [shape = 's32[1]{0}', space=sflag, size = 0x4, scoped, tag = 'scoped memory for actor_rgb_forward.5']
    #allocation4 [shape = 'u8[1024]{0}', space=vmem, size = 0x400, scoped, tag = 'output window, operand 1, single buffered']
    #allocation5 [shape = 's32[1]{0}', space=sflag, size = 0x4, scoped, tag = 'scoped memory for actor_rgb_forward.5']
    %20 = vsyncpa [#allocation3], 0
    %21 = vsyncpa [#allocation5], 0
    // Predicated region
    $region2: #{actor_rgb_forward.5} parent=1 // pred_check
      _
    $region3: #{actor_rgb_forward.5} parent=1 // pred_check_branch
      %23 = sbr.rel (0) target = $region5
    $region4: #{actor_rgb_forward.5} parent=1 // pred_region
      _
    $region5: #{actor_rgb_forward.5} parent=1 // pred_fallthru
      _
    // Predicated region
    $region6: #{actor_rgb_forward.5} parent=1 // pred_check
      _
    $region7: #{actor_rgb_forward.5} parent=1 // pred_check_branch
      %25 = sbr.rel (0) target = $region9
    $region8: #{actor_rgb_forward.5} parent=1 // pred_region
      _
    $region9: #{actor_rgb_forward.5} parent=1 // pred_fallthru
      _
    // Predicated region
    $region10: #{actor_rgb_forward.5} parent=1 // pred_check
      _
    $region11: #{actor_rgb_forward.5} parent=1 // pred_check_branch
      %27 = sbr.rel (0) target = $region13
    $region12: #{actor_rgb_forward.5} parent=1 // pred_region
      _
    $region13: #{actor_rgb_forward.5} parent=1 // pred_fallthru
      _
    // Predicated region
    $region14: #{actor_rgb_forward.5} parent=1 // pred_check
      _
    $region15: #{actor_rgb_forward.5} parent=1 // pred_check_branch
      %29 = sbr.rel (0) target = $region17
    $region16: #{actor_rgb_forward.5} parent=1 // pred_region
      _
    $region17: #{actor_rgb_forward.5} parent=1 // pred_fallthru
      _
    // Predicated region
    $region18: #{actor_rgb_forward.5} parent=1 // pred_check
      _
    $region19: #{actor_rgb_forward.5} parent=1 // pred_check_branch
      %31 = sbr.rel (0) target = $region21
    $region20: #{actor_rgb_forward.5} parent=1 // pred_region
      _
    $region21: #{actor_rgb_forward.5} parent=1 // pred_fallthru
      _
    // Predicated region
    $region22: #{actor_rgb_forward.5} parent=1 // pred_check
      _
    $region23: #{actor_rgb_forward.5} parent=1 // pred_check_branch
      %33 = sbr.rel (0) target = $region25
    $region24: #{actor_rgb_forward.5} parent=1 // pred_region
      _
    $region25: #{actor_rgb_forward.5} parent=1 // pred_fallthru
      _
    // Predicated region
    $region26: #{actor_rgb_forward.5} parent=1 // pred_check
      _
    $region27: #{actor_rgb_forward.5} parent=1 // pred_check_branch
      %35 = sbr.rel (0) target = $region29
    $region28: #{actor_rgb_forward.5} parent=1 // pred_region
      _
    $region29: #{actor_rgb_forward.5} parent=1 // pred_fallthru
      _
    // Predicated region
    $region30: #{actor_rgb_forward.5} parent=1 // pred_check
      _
    $region31: #{actor_rgb_forward.5} parent=1 // pred_check_branch
      %37 = sbr.rel (0) target = $region33
    $region32: #{actor_rgb_forward.5} parent=1 // pred_region
      _
    $region33: #{actor_rgb_forward.5} parent=1 // pred_fallthru
      _
    // Predicated region
    $region34: #{actor_rgb_forward.5} parent=1 // pred_check
      _
    $region35: #{actor_rgb_forward.5} parent=1 // pred_check_branch
      %39 = sbr.rel (0) target = $region37
    $region36: #{actor_rgb_forward.5} parent=1 // pred_region
      _
    $region37: #{actor_rgb_forward.5} parent=1 // pred_fallthru
      _
    // Predicated region
    $region38: #{actor_rgb_forward.5} parent=1 // pred_check
      _
    $region39: #{actor_rgb_forward.5} parent=1 // pred_check_branch
      %41 = sbr.rel (0) target = $region41
    $region40: #{actor_rgb_forward.5} parent=1 // pred_region
      _
    $region41: #{actor_rgb_forward.5} parent=1 // pred_fallthru
      _
    // Predicated region
    $region42: #{actor_rgb_forward.5} parent=1 // pred_check
      _
    $region43: #{actor_rgb_forward.5} parent=1 // pred_check_branch
      %43 = sbr.rel (0) target = $region45
    $region44: #{actor_rgb_forward.5} parent=1 // pred_region
      _
    $region45: #{actor_rgb_forward.5} parent=1 // pred_fallthru
      _
    // Predicated region
    $region46: #{actor_rgb_forward.5} parent=1 // pred_check
      _
    $region47: #{actor_rgb_forward.5} parent=1 // pred_check_branch
      %45 = sbr.rel (0) target = $region49
    $region48: #{actor_rgb_forward.5} parent=1 // pred_region
      _
    $region49: #{actor_rgb_forward.5} parent=1 // pred_fallthru
      _
    // Predicated region
    $region50: #{actor_rgb_forward.5} parent=1 // pred_check
      _
    $region51: #{actor_rgb_forward.5} parent=1 // pred_check_branch
      %47 = sbr.rel (0) target = $region53
    $region52: #{actor_rgb_forward.5} parent=1 // pred_region
      _
    $region53: #{actor_rgb_forward.5} parent=1 // pred_fallthru
      _
    %v49 = vld [vmem:[%s0] sm:$0x77]
    %v50 = vld [vmem:[%s0 + $0x8] sm:$0x77]
    %v51 = vld [vmem:[%s0 + $0x10] sm:$0x77]
    %v52 = vld [vmem:[%s1] sm:$0xf]
    %v53 = vld [vmem:[%s1 + $0x4] sm:$0xf]
    %v54 = vld [vmem:[%s1 + $0x8] sm:$0xf]
    %v55 = vld [vmem:[%s1 + $0xc] sm:$0xf]
    %v56 = vld [vmem:[%s1 + $0x10] sm:$0xf]
    %v57 = vld [vmem:[%s1 + $0x14] sm:$0xf]
    %v58 = vld [vmem:[%s1 + $0x18] sm:$0xf]
    %v59 = vld [vmem:[%s1 + $0x1c] sm:$0xf]
    %v60 = vld [vmem:[%s1 + $0x20] sm:$0xf]
    %v61 = vld [vmem:[%s1 + $0x24] sm:$0xf]
    %v62 = vld [vmem:[%s1 + $0x28] sm:$0xf]
    %v63 = vld [vmem:[%s1 + $0x2c] sm:$0xf]
    %v64 = vld [vmem:[%s1 + $0x30] sm:$0xf]
    %v65 = vld [vmem:[%s1 + $0x34] sm:$0xf]
    %v66 = vld [vmem:[%s1 + $0x38] sm:$0xf]
    %v67 = vld [vmem:[%s1 + $0x3c] sm:$0xf]
    %v68 = vld [vmem:[%s1 + $0x40] sm:$0xf]
    %v69 = vld [vmem:[%s1 + $0x44] sm:$0xf]
    %v70 = vld [vmem:[%s1 + $0x48] sm:$0xf]
    %v71 = vld [vmem:[%s1 + $0x4c] sm:$0xf]
    %v72 = vld [vmem:[%s1 + $0x50] sm:$0xf]
    %v73 = vld [vmem:[%s1 + $0x54] sm:$0xf]
    %v74 = vld [vmem:[%s1 + $0x58] sm:$0xf]
    %v75 = vld [vmem:[%s1 + $0x5c] sm:$0xf]
    %v76 = vld [vmem:[%s1 + $0x60] sm:$0xf]
    %v77 = vld [vmem:[%s1 + $0x64] sm:$0xf]
    %v78 = vld [vmem:[%s1 + $0x68] sm:$0xf]
    %v79 = vld [vmem:[%s1 + $0x6c] sm:$0xf]
    %v80 = vld [vmem:[%s1 + $0x70] sm:$0xf]
    %v81 = vld [vmem:[%s1 + $0x74] sm:$0xf]
    %v82 = vld [vmem:[%s1 + $0x78] sm:$0xf]
    %v83 = vld [vmem:[%s1 + $0x7c] sm:$0xf]
    %v84 = vld [vmem:[%s1 + $0x80] sm:$0xf]
    %v85 = vld [vmem:[%s1 + $0x84] sm:$0xf]
    %v86 = vld [vmem:[%s1 + $0x88] sm:$0xf]
    %v87 = vld [vmem:[%s1 + $0x8c] sm:$0xf]
    %v88 = vld [vmem:[%s1 + $0x90] sm:$0xf]
    %v89 = vld [vmem:[%s1 + $0x94] sm:$0xf]
    %v90 = vld [vmem:[%s1 + $0x98] sm:$0xf]
    %v91 = vld [vmem:[%s1 + $0x9c] sm:$0xf]
    %v92 = vld [vmem:[%s1 + $0xa0] sm:$0xf]
    %v93 = vld [vmem:[%s1 + $0xa4] sm:$0xf]
    %v94 = vld [vmem:[%s1 + $0xa8] sm:$0xf]
    %v95 = vld [vmem:[%s1 + $0xac] sm:$0xf]
    %v96 = vld [vmem:[%s1 + $0xb0] sm:$0xf]
    %v97 = vld [vmem:[%s1 + $0xb4] sm:$0xf]
    %v98 = vld [vmem:[%s1 + $0xb8] sm:$0xf]
    %v99 = vld [vmem:[%s1 + $0xbc] sm:$0xf]
    %v100 = vld [vmem:[%s1 + $0xc0] sm:$0xf]
    %v101 = vld [vmem:[%s1 + $0xc4] sm:$0xf]
    %v102 = vld [vmem:[%s1 + $0xc8] sm:$0xf]
    %v103 = vld [vmem:[%s1 + $0xcc] sm:$0xf]
    %v104 = vld [vmem:[%s1 + $0xd0] sm:$0xf]
    %v105 = vld [vmem:[%s1 + $0xd4] sm:$0xf]
    %v106 = vld [vmem:[%s1 + $0xd8] sm:$0xf]
    %v107 = vld [vmem:[%s1 + $0xdc] sm:$0xf]
    %v108 = vld [vmem:[%s1 + $0xe0] sm:$0xf]
    %v109 = vld [vmem:[%s1 + $0xe4] sm:$0xf]
    %v110 = vld [vmem:[%s1 + $0xe8] sm:$0xf]
    %v111 = vld [vmem:[%s1 + $0xec] sm:$0xf]
    %v112 = vld [vmem:[%s1 + $0xf0] sm:$0xf]
    %v113 = vld [vmem:[%s1 + $0xf4] sm:$0xf]
    %v114 = vld [vmem:[%s1 + $0xf8] sm:$0xf]
    %v115 = vld [vmem:[%s1 + $0xfc] sm:$0xf]
    %v116 = vld [vmem:[%s1 + $0x100] sm:$0xf]
    %v117 = vld [vmem:[%s1 + $0x104] sm:$0xf]
    %v118 = vld [vmem:[%s1 + $0x108] sm:$0xf]
    %v119 = vld [vmem:[%s1 + $0x10c] sm:$0xf]
    %v120 = vld [vmem:[%s1 + $0x110] sm:$0xf]
    %v121 = vld [vmem:[%s1 + $0x114] sm:$0xf]
    %v122 = vld [vmem:[%s1 + $0x118] sm:$0xf]
    %v123 = vld [vmem:[%s1 + $0x11c] sm:$0xf]
    %v124 = vld [vmem:[%s1 + $0x120] sm:$0xf]
    %v125 = vld [vmem:[%s1 + $0x124] sm:$0xf]
    %v126 = vld [vmem:[%s1 + $0x128] sm:$0xf]
    %v127 = vld [vmem:[%s1 + $0x12c] sm:$0xf]
    %v128 = vld [vmem:[%s1 + $0x130] sm:$0xf]
    %v129 = vld [vmem:[%s1 + $0x134] sm:$0xf]
    %v130 = vld [vmem:[%s1 + $0x138] sm:$0xf]
    %v131 = vld [vmem:[%s1 + $0x13c] sm:$0xf]
    %v132 = vld [vmem:[%s1 + $0x140] sm:$0xf]
    %v133 = vld [vmem:[%s2] sm:$0x1]
    %v135 = vperm.slane %v133, 0
    %v140 = vunpack.c.l.b16 %v49
    %v141 = vunpack.c.h.b16 %v49
    %v142 = vunpack.c.l.b16 %v50
    %v143 = vunpack.c.h.b16 %v50
    %v144 = vunpack.c.l.b16 %v51
    %v145 = vunpack.c.h.b16 %v51
    %v146 = vpack.c.b16 %v140, %v140
    %v147 = vpack.c.b16 %v141, %v141
    %v148 = vpack.c.b16 %v142, %v142
    %v149 = vpack.c.b16 %v143, %v143
    %v150 = vpack.c.b16 %v144, %v144
    %v151 = vpack.c.b16 %v145, %v145
    %v238 = vunpack.c.l.b16 %v52
    %v239 = vunpack.c.l.b16 %v53
    %v240 = vunpack.c.l.b16 %v54
    %v241 = vunpack.c.l.b16 %v55
    %v242 = vunpack.c.l.b16 %v56
    %v243 = vunpack.c.l.b16 %v57
    %v244 = vunpack.c.l.b16 %v58
    %v245 = vunpack.c.l.b16 %v59
    %v246 = vunpack.c.l.b16 %v60
    %v247 = vunpack.c.l.b16 %v61
    %v248 = vunpack.c.l.b16 %v62
    %v249 = vunpack.c.l.b16 %v63
    %v250 = vunpack.c.l.b16 %v64
    %v251 = vunpack.c.l.b16 %v65
    %v252 = vunpack.c.l.b16 %v66
    %v253 = vunpack.c.l.b16 %v67
    %v254 = vunpack.c.l.b16 %v68
    %v255 = vunpack.c.l.b16 %v69
    %v256 = vunpack.c.l.b16 %v70
    %v257 = vunpack.c.l.b16 %v71
    %v258 = vunpack.c.l.b16 %v72
    %v259 = vunpack.c.l.b16 %v73
    %v260 = vunpack.c.l.b16 %v74
    %v261 = vunpack.c.l.b16 %v75
    %v262 = vunpack.c.l.b16 %v76
    %v263 = vunpack.c.l.b16 %v77
    %v264 = vunpack.c.l.b16 %v78
    %v265 = vunpack.c.l.b16 %v79
    %v266 = vunpack.c.l.b16 %v80
    %v267 = vunpack.c.l.b16 %v81
    %v268 = vunpack.c.l.b16 %v82
    %v269 = vunpack.c.l.b16 %v83
    %v270 = vunpack.c.l.b16 %v84
    %v271 = vunpack.c.l.b16 %v85
    %v272 = vunpack.c.l.b16 %v86
    %v273 = vunpack.c.l.b16 %v87
    %v274 = vunpack.c.l.b16 %v88
    %v275 = vunpack.c.l.b16 %v89
    %v276 = vunpack.c.l.b16 %v90
    %v277 = vunpack.c.l.b16 %v91
    %v278 = vunpack.c.l.b16 %v92
    %v279 = vunpack.c.l.b16 %v93
    %v280 = vunpack.c.l.b16 %v94
    %v281 = vunpack.c.l.b16 %v95
    %v282 = vunpack.c.l.b16 %v96
    %v283 = vunpack.c.l.b16 %v97
    %v284 = vunpack.c.l.b16 %v98
    %v285 = vunpack.c.l.b16 %v99
    %v286 = vunpack.c.l.b16 %v100
    %v287 = vunpack.c.l.b16 %v101
    %v288 = vunpack.c.l.b16 %v102
    %v289 = vunpack.c.l.b16 %v103
    %v290 = vunpack.c.l.b16 %v104
    %v291 = vunpack.c.l.b16 %v105
    %v292 = vunpack.c.l.b16 %v106
    %v293 = vunpack.c.l.b16 %v107
    %v294 = vunpack.c.l.b16 %v108
    %v295 = vunpack.c.l.b16 %v109
    %v296 = vunpack.c.l.b16 %v110
    %v297 = vunpack.c.l.b16 %v111
    %v298 = vunpack.c.l.b16 %v112
    %v299 = vunpack.c.l.b16 %v113
    %v300 = vunpack.c.l.b16 %v114
    %v301 = vunpack.c.l.b16 %v115
    %v302 = vunpack.c.l.b16 %v116
    %v303 = vunpack.c.l.b16 %v117
    %v304 = vunpack.c.l.b16 %v118
    %v305 = vunpack.c.l.b16 %v119
    %v306 = vunpack.c.l.b16 %v120
    %v307 = vunpack.c.l.b16 %v121
    %v308 = vunpack.c.l.b16 %v122
    %v309 = vunpack.c.l.b16 %v123
    %v310 = vunpack.c.l.b16 %v124
    %v311 = vunpack.c.l.b16 %v125
    %v312 = vunpack.c.l.b16 %v126
    %v313 = vunpack.c.l.b16 %v127
    %v314 = vunpack.c.l.b16 %v128
    %v315 = vunpack.c.l.b16 %v129
    %v316 = vunpack.c.l.b16 %v130
    %v317 = vunpack.c.l.b16 %v131
    %v318 = vunpack.c.l.b16 %v132
    %v319 = vpack.c.b16 %v239, %v238
    %v320 = vpack.c.b16 %v241, %v240
    %v321 = vpack.c.b16 %v243, %v242
    %v322 = vpack.c.b16 %v245, %v244
    %v323 = vpack.c.b16 %v247, %v246
    %v324 = vpack.c.b16 %v249, %v248
    %v325 = vpack.c.b16 %v251, %v250
    %v326 = vpack.c.b16 %v253, %v252
    %v327 = vpack.c.b16 %v255, %v254
    %v328 = vpack.c.b16 %v257, %v256
    %v329 = vpack.c.b16 %v259, %v258
    %v330 = vpack.c.b16 %v261, %v260
    %v331 = vpack.c.b16 %v263, %v262
    %v332 = vpack.c.b16 %v265, %v264
    %v333 = vpack.c.b16 %v267, %v266
    %v334 = vpack.c.b16 %v269, %v268
    %v335 = vpack.c.b16 %v271, %v270
    %v336 = vpack.c.b16 %v273, %v272
    %v337 = vpack.c.b16 %v275, %v274
    %v338 = vpack.c.b16 %v277, %v276
    %v339 = vpack.c.b16 %v279, %v278
    %v340 = vpack.c.b16 %v281, %v280
    %v341 = vpack.c.b16 %v283, %v282
    %v342 = vpack.c.b16 %v285, %v284
    %v343 = vpack.c.b16 %v287, %v286
    %v344 = vpack.c.b16 %v289, %v288
    %v345 = vpack.c.b16 %v291, %v290
    %v346 = vpack.c.b16 %v293, %v292
    %v347 = vpack.c.b16 %v295, %v294
    %v348 = vpack.c.b16 %v297, %v296
    %v349 = vpack.c.b16 %v299, %v298
    %v350 = vpack.c.b16 %v301, %v300
    %v351 = vpack.c.b16 %v303, %v302
    %v352 = vpack.c.b16 %v305, %v304
    %v353 = vpack.c.b16 %v307, %v306
    %v354 = vpack.c.b16 %v309, %v308
    %v355 = vpack.c.b16 %v311, %v310
    %v356 = vpack.c.b16 %v313, %v312
    %v357 = vpack.c.b16 %v315, %v314
    %v358 = vpack.c.b16 %v317, %v316
    %v359 = vpack.c.b16 %v318, %v318
    %vm400 = vcmask 64512
    %v402 = vsel %vm400, %v151, 0
    %vm404 = vcmask 1043456
    %v406 = vsel %vm404, %v359, 0
    %408 = vmatpush.bf16.msra.mxu0 %v326
    %409 = vmatpush.bf16.msra.mxu0 %v325
    %410 = vmatpush.bf16.msra.mxu0 %v324
    %411 = vmatpush.bf16.msra.mxu0 %v323
    %412 = vmatpush.bf16.msra.mxu0 %v322
    %413 = vmatpush.bf16.msra.mxu0 %v321
    %414 = vmatpush.bf16.msra.mxu0 %v320
    %415 = vmatpush.bf16.msra.mxu0 %v319
    %416 = vmatmul.bf16.gmra.mxu0 %v146
    %v417 = vpop.f32.mrf.mxu0
    %v418 = vadd.f32 %v135, %v417
    %v419 = vpop.f32.mrf.mxu0
    %420 = vdwg.mxu0
    %421 = vmatpush.bf16.msra.mxu0 %v334
    %422 = vmatpush.bf16.msra.mxu0 %v333
    %423 = vmatpush.bf16.msra.mxu0 %v332
    %424 = vmatpush.bf16.msra.mxu0 %v331
    %425 = vmatpush.bf16.msra.mxu0 %v330
    %426 = vmatpush.bf16.msra.mxu0 %v329
    %427 = vmatpush.bf16.msra.mxu0 %v328
    %428 = vmatpush.bf16.msra.mxu0 %v327
    %429 = vmatmul.bf16.gmra.mxu0 %v147
    %v430 = vpop.f32.mrf.mxu0
    %v431 = vadd.f32 %v418, %v430
    %v432 = vpop.f32.mrf.mxu0
    %433 = vdwg.mxu0
    %434 = vmatpush.bf16.msra.mxu0 %v342
    %435 = vmatpush.bf16.msra.mxu0 %v341
    %436 = vmatpush.bf16.msra.mxu0 %v340
    %437 = vmatpush.bf16.msra.mxu0 %v339
    %438 = vmatpush.bf16.msra.mxu0 %v338
    %439 = vmatpush.bf16.msra.mxu0 %v337
    %440 = vmatpush.bf16.msra.mxu0 %v336
    %441 = vmatpush.bf16.msra.mxu0 %v335
    %442 = vmatmul.bf16.gmra.mxu0 %v148
    %v443 = vpop.f32.mrf.mxu0
    %v444 = vadd.f32 %v431, %v443
    %v445 = vpop.f32.mrf.mxu0
    %446 = vdwg.mxu0
    %447 = vmatpush.bf16.msra.mxu0 %v350
    %448 = vmatpush.bf16.msra.mxu0 %v349
    %449 = vmatpush.bf16.msra.mxu0 %v348
    %450 = vmatpush.bf16.msra.mxu0 %v347
    %451 = vmatpush.bf16.msra.mxu0 %v346
    %452 = vmatpush.bf16.msra.mxu0 %v345
    %453 = vmatpush.bf16.msra.mxu0 %v344
    %454 = vmatpush.bf16.msra.mxu0 %v343
    %455 = vmatmul.bf16.gmra.mxu0 %v149
    %v456 = vpop.f32.mrf.mxu0
    %v457 = vadd.f32 %v444, %v456
    %v458 = vpop.f32.mrf.mxu0
    %459 = vdwg.mxu0
    %460 = vmatpush.bf16.msra.mxu0 %v358
    %461 = vmatpush.bf16.msra.mxu0 %v357
    %462 = vmatpush.bf16.msra.mxu0 %v356
    %463 = vmatpush.bf16.msra.mxu0 %v355
    %464 = vmatpush.bf16.msra.mxu0 %v354
    %465 = vmatpush.bf16.msra.mxu0 %v353
    %466 = vmatpush.bf16.msra.mxu0 %v352
    %467 = vmatpush.bf16.msra.mxu0 %v351
    %468 = vmatmul.bf16.gmra.mxu0 %v150
    %v469 = vpop.f32.mrf.mxu0
    %v470 = vadd.f32 %v457, %v469
    %v471 = vpop.f32.mrf.mxu0
    %472 = vdwg.mxu0
    %473 = vmatpush.bf16.msra.mxu0 0
    %474 = vmatpush.bf16.msra.mxu0 0
    %475 = vmatpush.bf16.msra.mxu0 0
    %476 = vmatpush.bf16.msra.mxu0 0
    %477 = vmatpush.bf16.msra.mxu0 0
    %478 = vmatpush.bf16.msra.mxu0 0
    %479 = vmatpush.bf16.msra.mxu0 0
    %480 = vmatpush.bf16.msra.mxu0 %v406
    %481 = vmatmul.bf16.gmra.mxu0 %v402
    %v482 = vpop.f32.mrf.mxu0
    %v483 = vadd.f32 %v470, %v482
    %v484 = vpop.f32.mrf.mxu0
    %485 = vdwg.mxu0
    %v486 = vmax.f32 %v483, 0.0
    %v487 = vpack.c.bf16 %v486, %v486
    %v488 = vld [vmem:[%s3] sm:$0xf]
    %v489 = vld [vmem:[%s3 + $0x4] sm:$0xf]
    %v490 = vld [vmem:[%s3 + $0x8] sm:$0xf]
    %v491 = vld [vmem:[%s3 + $0xc] sm:$0xf]
    %v492 = vld [vmem:[%s4] sm:$0x1]
    %v494 = vperm.slane %v492, 0
    %v500 = vunpack.c.l.b16 %v488
    %v501 = vunpack.c.l.b16 %v489
    %v502 = vunpack.c.l.b16 %v490
    %v503 = vunpack.c.l.b16 %v491
    %v504 = vpack.c.b16 %v501, %v500
    %v505 = vpack.c.b16 %v503, %v502
    %vm508 = vcmask 261120
    %v510 = vsel %vm508, %v487, 0
    %512 = vmatpush.bf16.msra.mxu0 0
    %513 = vmatpush.bf16.msra.mxu0 0
    %514 = vmatpush.bf16.msra.mxu0 0
    %515 = vmatpush.bf16.msra.mxu0 0
    %516 = vmatpush.bf16.msra.mxu0 0
    %517 = vmatpush.bf16.msra.mxu0 0
    %518 = vmatpush.bf16.msra.mxu0 %v505
    %519 = vmatpush.bf16.msra.mxu0 %v504
    %520 = vmatmul.bf16.gmra.mxu0 %v510
    %v521 = vpop.f32.mrf.mxu0
    %v522 = vadd.f32 %v494, %v521
    %v523 = vpop.f32.mrf.mxu0
    %524 = vdwg.mxu0
    %v525 = vld [vmem:[%s5] sm:$0xff]
    %v526 = vld [vmem:[%s5 + $0x8] sm:$0xff]
    %v527 = vld [vmem:[%s6] sm:$0x1]
    %v528 = vld [vmem:[%s7] sm:$0xff]
    %v529 = vld [vmem:[%s7 + $0x8] sm:$0xff]
    %v530 = vld [vmem:[%s8] sm:$0x3]
    %v531 = vld [vmem:[%s9] sm:$0xf]
    %v532 = vld [vmem:[%s9 + $0x4] sm:$0xf]
    %v533 = vld [vmem:[%s9 + $0x8] sm:$0xf]
    %v534 = vld [vmem:[%s9 + $0xc] sm:$0xf]
    %v535 = vld [vmem:[%s9 + $0x10] sm:$0xf]
    %v536 = vld [vmem:[%s9 + $0x14] sm:$0xf]
    %v537 = vld [vmem:[%s9 + $0x18] sm:$0xf]
    %v538 = vld [vmem:[%s9 + $0x1c] sm:$0xf]
    %v539 = vld [vmem:[%s9 + $0x20] sm:$0xf]
    %v540 = vld [vmem:[%s9 + $0x24] sm:$0xf]
    %v541 = vld [vmem:[%s9 + $0x28] sm:$0xf]
    %v542 = vld [vmem:[%s9 + $0x2c] sm:$0xf]
    %v543 = vld [vmem:[%s9 + $0x30] sm:$0xf]
    %v544 = vld [vmem:[%s9 + $0x34] sm:$0xf]
    %v545 = vld [vmem:[%s9 + $0x38] sm:$0xf]
    %v546 = vld [vmem:[%s9 + $0x3c] sm:$0xf]
    %v547 = vld [vmem:[%s9 + $0x40] sm:$0xf]
    %v548 = vld [vmem:[%s9 + $0x44] sm:$0xf]
    %v549 = vld [vmem:[%s9 + $0x48] sm:$0xf]
    %v550 = vld [vmem:[%s9 + $0x4c] sm:$0xf]
    %v551 = vld [vmem:[%s9 + $0x50] sm:$0xf]
    %v552 = vld [vmem:[%s9 + $0x54] sm:$0xf]
    %v553 = vld [vmem:[%s9 + $0x58] sm:$0xf]
    %v554 = vld [vmem:[%s9 + $0x5c] sm:$0xf]
    %v555 = vld [vmem:[%s9 + $0x60] sm:$0xf]
    %v556 = vld [vmem:[%s10] sm:$0x1]
    %v557 = vld [vmem:[%s11] sm:$0xff]
    %v558 = vld [vmem:[%s11 + $0x8] sm:$0xff]
    %v559 = vld [vmem:[%s11 + $0x10] sm:$0xff]
    %v560 = vld [vmem:[%s11 + $0x18] sm:$0xff]
    %v561 = vld [vmem:[%s11 + $0x20] sm:$0xff]
    %v562 = vld [vmem:[%s11 + $0x28] sm:$0xff]
    %v563 = vld [vmem:[%s11 + $0x30] sm:$0xff]
    %v564 = vld [vmem:[%s11 + $0x38] sm:$0xff]
    %v565 = vld [vmem:[%s11 + $0x40] sm:$0xff]
    %v566 = vld [vmem:[%s11 + $0x48] sm:$0xff]
    %v567 = vld [vmem:[%s11 + $0x50] sm:$0xff]
    %v568 = vld [vmem:[%s11 + $0x58] sm:$0xff]
    %v569 = vld [vmem:[%s11 + $0x60] sm:$0xf]
    %v570 = vld [vmem:[%s12] sm:$0x1]
    %v572 = vperm.slane %v527, 0
    %vm574 = vcmask 130048
    %v576 = vsel %vm574, 0.0, 0
    %578 = vmatpush.msra.mxu0 0.0
    %579 = vmatpush.msra.mxu0 0.0
    %580 = vmatpush.msra.mxu0 0.0
    %581 = vmatpush.msra.mxu0 0.0
    %582 = vmatpush.msra.mxu0 0.0
    %583 = vmatpush.msra.mxu0 0.0
    %584 = vmatpush.msra.mxu0 0.0
    %585 = vmatpush.msra.mxu0 0.0
    %586 = vmatpush.msra.mxu0 0.0
    %587 = vmatpush.msra.mxu0 0.0
    %588 = vmatpush.msra.mxu0 0.0
    %589 = vmatpush.msra.mxu0 0.0
    %590 = vmatpush.msra.mxu0 0.0
    %591 = vmatpush.msra.mxu0 0.0
    %592 = vmatpush.msra.mxu0 %v526
    %593 = vmatpush.msra.mxu0 %v525
    %594 = vmatmul.f32.gmra.mxu0 %v576
    %v595 = vpop.f32.mrf.mxu0
    %v596 = vadd.f32 %v572, %v595
    %597 = vdwg.mxu0
    %v598 = vadd.f32 %v522, %v596
    %v599 = vxor.u32 %v598, 2147483648
    %v600 = vmul.f32 %v599, 1.442695
    %v601 = vpow.pop %v600
    %v602 = vadd.f32 %v601, 1.0
    %v603 = vrcp.pop %v602
    %v604 = vmul.f32 %v602, %v603
    %v605 = vsub.f32 1.0, %v604
    %v606 = vmul.f32 %v603, %v605
    %v607 = vadd.f32 %v603, %v606
    %vm608 = vweird.f32 %v602
    %vm609 = vweird.f32 %v603
    %vm610 = vmor %vm608, %vm609
    %v611 = vsel %vm610, %v603, %v607
    %v612 = vand.u32 2147483647, %v602
    %vm613 = vcmp.eq.f32.partialorder %v612, 8.507059e+37
    %v614 = vand.u32 %v602, 2147483648
    %v615 = vor.u32 1.1754944e-38, %v614
    %v616 = vsel %vm613, %v615, %v611
    %v617 = vmul.f32 1.0, %v616
    %619 = vrot.lane.b32.xlu0 %v596, 96
    %v620 = vpop.permute.xlu0 %619
    %v622 = vmul.f32 %v617, %v620
    %624 = vrot.lane.b32.xlu0 %v622, 32
    %v625 = vpop.permute.xlu0 %624
    %v627 = vadd.f32 %v522, %v625
    %v628 = vtanh.pop %v627
    %v629 = vsub.f32 1.0, %v617
    %631 = vrot.lane.b32.xlu0 %v628, 112
    %v632 = vpop.permute.xlu0 %631
    %v634 = vmul.f32 %v629, %v632
    %v635 = vmul.f32 %v617, 0.0
    %v636 = vadd.f32 %v634, %v635
    %v637 = vmax.f32 %v636, 0.0
    %v638 = vpack.c.bf16 %v637, %v637
    %v640 = vperm.slane %v530, 0
    %v641 = vperm.slane %v530, 1
    %645 = vrot.lane.b32.xlu0 %v638, 112
    %v646 = vpop.permute.xlu0 %645
    %v649 = vunpack.c.l.b16 %v528
    %v650 = vunpack.c.h.b16 %v528
    %v651 = vunpack.c.l.b16 %v529
    %v652 = vunpack.c.h.b16 %v529
    %v653 = vpack.c.b16 %v651, %v649
    %v654 = vpack.c.b16 %v652, %v650
    %v658 = vsel %vm574, %v646, 0
    %660 = vmatpush.bf16.msra.mxu0 0
    %661 = vmatpush.bf16.msra.mxu0 0
    %662 = vmatpush.bf16.msra.mxu0 0
    %663 = vmatpush.bf16.msra.mxu0 0
    %664 = vmatpush.bf16.msra.mxu0 0
    %665 = vmatpush.bf16.msra.mxu0 0
    %666 = vmatpush.bf16.msra.mxu0 0
    %667 = vmatpush.bf16.msra.mxu0 %v653
    %668 = vmatmul.bf16.gmra.mxu0 %v658
    %v669 = vpop.f32.mrf.mxu0
    %v670 = vadd.f32 %v640, %v669
    %v671 = vpop.f32.mrf.mxu0
    %672 = vdwg.mxu0
    %673 = vmatpush.bf16.msra.mxu0 0
    %674 = vmatpush.bf16.msra.mxu0 0
    %675 = vmatpush.bf16.msra.mxu0 0
    %676 = vmatpush.bf16.msra.mxu0 0
    %677 = vmatpush.bf16.msra.mxu0 0
    %678 = vmatpush.bf16.msra.mxu0 0
    %679 = vmatpush.bf16.msra.mxu0 0
    %680 = vmatpush.bf16.msra.mxu0 %v654
    %681 = vmatmul.bf16.gmra.mxu0 %v658
    %v682 = vpop.f32.mrf.mxu0
    %v683 = vadd.f32 %v641, %v682
    %v684 = vpop.f32.mrf.mxu0
    %685 = vdwg.mxu0
    %v686 = vmax.f32 %v670, 0.0
    %v687 = vmax.f32 %v683, 0.0
    %v688 = vpack.c.bf16 %v686, %v686
    %v689 = vpack.c.bf16 %v687, %v687
    %v691 = vperm.slane %v556, 0
    %v718 = vunpack.c.l.b16 %v531
    %v719 = vunpack.c.l.b16 %v532
    %v720 = vunpack.c.l.b16 %v533
    %v721 = vunpack.c.l.b16 %v534
    %v722 = vunpack.c.l.b16 %v535
    %v723 = vunpack.c.l.b16 %v536
    %v724 = vunpack.c.l.b16 %v537
    %v725 = vunpack.c.l.b16 %v538
    %v726 = vunpack.c.l.b16 %v539
    %v727 = vunpack.c.l.b16 %v540
    %v728 = vunpack.c.l.b16 %v541
    %v729 = vunpack.c.l.b16 %v542
    %v730 = vunpack.c.l.b16 %v543
    %v731 = vunpack.c.l.b16 %v544
    %v732 = vunpack.c.l.b16 %v545
    %v733 = vunpack.c.l.b16 %v546
    %v734 = vunpack.c.l.b16 %v547
    %v735 = vunpack.c.l.b16 %v548
    %v736 = vunpack.c.l.b16 %v549
    %v737 = vunpack.c.l.b16 %v550
    %v738 = vunpack.c.l.b16 %v551
    %v739 = vunpack.c.l.b16 %v552
    %v740 = vunpack.c.l.b16 %v553
    %v741 = vunpack.c.l.b16 %v554
    %v742 = vunpack.c.l.b16 %v555
    %v743 = vpack.c.b16 %v719, %v718
    %v744 = vpack.c.b16 %v721, %v720
    %v745 = vpack.c.b16 %v723, %v722
    %v746 = vpack.c.b16 %v725, %v724
    %v747 = vpack.c.b16 %v727, %v726
    %v748 = vpack.c.b16 %v729, %v728
    %v749 = vpack.c.b16 %v731, %v730
    %v750 = vpack.c.b16 %v733, %v732
    %v751 = vpack.c.b16 %v735, %v734
    %v752 = vpack.c.b16 %v737, %v736
    %v753 = vpack.c.b16 %v739, %v738
    %v754 = vpack.c.b16 %v741, %v740
    %v755 = vpack.c.b16 %v742, %v742
    %vm768 = vcmask 588800
    %v770 = vsel %vm768, %v689, 0
    %v773 = vsel %vm404, %v755, 0
    %775 = vmatpush.bf16.msra.mxu0 %v750
    %776 = vmatpush.bf16.msra.mxu0 %v749
    %777 = vmatpush.bf16.msra.mxu0 %v748
    %778 = vmatpush.bf16.msra.mxu0 %v747
    %779 = vmatpush.bf16.msra.mxu0 %v746
    %780 = vmatpush.bf16.msra.mxu0 %v745
    %781 = vmatpush.bf16.msra.mxu0 %v744
    %782 = vmatpush.bf16.msra.mxu0 %v743
    %783 = vmatmul.bf16.gmra.mxu0 %v688
    %v784 = vpop.f32.mrf.mxu0
    %v785 = vadd.f32 %v691, %v784
    %v786 = vpop.f32.mrf.mxu0
    %787 = vdwg.mxu0
    %788 = vmatpush.bf16.msra.mxu0 0
    %789 = vmatpush.bf16.msra.mxu0 0
    %790 = vmatpush.bf16.msra.mxu0 0
    %791 = vmatpush.bf16.msra.mxu0 %v773
    %792 = vmatpush.bf16.msra.mxu0 %v754
    %793 = vmatpush.bf16.msra.mxu0 %v753
    %794 = vmatpush.bf16.msra.mxu0 %v752
    %795 = vmatpush.bf16.msra.mxu0 %v751
    %796 = vmatmul.bf16.gmra.mxu0 %v770
    %v797 = vpop.f32.mrf.mxu0
    %v798 = vadd.f32 %v785, %v797
    %v799 = vpop.f32.mrf.mxu0
    %800 = vdwg.mxu0
    %v801 = vmax.f32 %v798, 0.0
    %v803 = vperm.slane %v570, 0
    %vm805 = vcmask 818176
    %v807 = vsel %vm805, %v801, 0
    %v810 = vsel %vm404, %v569, 0
    %812 = vmatpush.msra.mxu0 0.0
    %813 = vmatpush.msra.mxu0 0.0
    %814 = vmatpush.msra.mxu0 0.0
    %815 = vmatpush.msra.mxu0 %v810
    %816 = vmatpush.msra.mxu0 %v568
    %817 = vmatpush.msra.mxu0 %v567
    %818 = vmatpush.msra.mxu0 %v566
    %819 = vmatpush.msra.mxu0 %v565
    %820 = vmatpush.msra.mxu0 %v564
    %821 = vmatpush.msra.mxu0 %v563
    %822 = vmatpush.msra.mxu0 %v562
    %823 = vmatpush.msra.mxu0 %v561
    %824 = vmatpush.msra.mxu0 %v560
    %825 = vmatpush.msra.mxu0 %v559
    %826 = vmatpush.msra.mxu0 %v558
    %827 = vmatpush.msra.mxu0 %v557
    %828 = vmatmul.f32.gmra.mxu0 %v807
    %v829 = vpop.f32.mrf.mxu0
    %v830 = vadd.f32 %v803, %v829
    %831 = vdwg.mxu0
    %v832 = vtanh.pop %v830
    %vm833 = vcmask 25600
    %834 = vst.msk [vmem:[#allocation2] sm:$0x3] %vm833, %v832
    %836 = vrot.lane.b32.xlu0 %v636, 112
    %v837 = vpop.permute.xlu0 %836
    %v838 = vsel %vm574, %v837, 0
    %840 = vmatpush.msra.mxu0 0.0
    %841 = vmatpush.msra.mxu0 0.0
    %842 = vmatpush.msra.mxu0 0.0
    %843 = vmatpush.msra.mxu0 0.0
    %844 = vmatpush.msra.mxu0 0.0
    %845 = vmatpush.msra.mxu0 0.0
    %846 = vmatpush.msra.mxu0 0.0
    %847 = vmatpush.msra.mxu0 0.0
    %848 = vmatpush.msra.mxu0 0.0
    %849 = vmatpush.msra.mxu0 0.0
    %850 = vmatpush.msra.mxu0 0.0
    %851 = vmatpush.msra.mxu0 0.0
    %852 = vmatpush.msra.mxu0 0.0
    %853 = vmatpush.msra.mxu0 0.0
    %854 = vmatpush.msra.mxu0 %v526
    %855 = vmatpush.msra.mxu0 %v525
    %856 = vmatmul.f32.gmra.mxu0 %v838
    %v857 = vpop.f32.mrf.mxu0
    %v858 = vadd.f32 %v572, %v857
    %859 = vdwg.mxu0
    %v861 = vrot.slane %v858, 6
    %v863 = vadd.f32 %v522, %v861
    %v864 = vxor.u32 %v863, 2147483648
    %v865 = vmul.f32 %v864, 1.442695
    %v866 = vpow.pop %v865
    %v867 = vadd.f32 %v866, 1.0
    %v868 = vrcp.pop %v867
    %v869 = vmul.f32 %v867, %v868
    %v870 = vsub.f32 1.0, %v869
    %v871 = vmul.f32 %v868, %v870
    %v872 = vadd.f32 %v868, %v871
    %vm873 = vweird.f32 %v867
    %vm874 = vweird.f32 %v868
    %vm875 = vmor %vm873, %vm874
    %v876 = vsel %vm875, %v868, %v872
    %v877 = vand.u32 2147483647, %v867
    %vm878 = vcmp.eq.f32.partialorder %v877, 8.507059e+37
    %v879 = vand.u32 %v867, 2147483648
    %v880 = vor.u32 1.1754944e-38, %v879
    %v881 = vsel %vm878, %v880, %v876
    %v882 = vmul.f32 1.0, %v881
    %883 = vrot.lane.b32.xlu0 %v861, 96
    %v884 = vpop.permute.xlu0 %883
    %v886 = vmul.f32 %v882, %v884
    %888 = vrot.lane.b32.xlu0 %v886, 32
    %v889 = vpop.permute.xlu0 %888
    %v891 = vadd.f32 %v522, %v889
    %v892 = vtanh.pop %v891
    %v893 = vsub.f32 1.0, %v882
    %895 = vrot.lane.b32.xlu0 %v892, 112
    %v896 = vpop.permute.xlu0 %895
    %v898 = vmul.f32 %v893, %v896
    %v899 = vrot.slane %v636, 6
    %v901 = vmul.f32 %v882, %v899
    %v902 = vadd.f32 %v898, %v901
    %v903 = vmax.f32 %v902, 0.0
    %v904 = vpack.c.bf16 %v903, %v903
    %v906 = vrot.slane %v904, 1
    %907 = vrot.lane.b32.xlu0 %v906, 112
    %v908 = vpop.permute.xlu0 %907
    %v910 = vsel %vm574, %v908, 0
    %912 = vmatpush.bf16.msra.mxu0 0
    %913 = vmatpush.bf16.msra.mxu0 0
    %914 = vmatpush.bf16.msra.mxu0 0
    %915 = vmatpush.bf16.msra.mxu0 0
    %916 = vmatpush.bf16.msra.mxu0 0
    %917 = vmatpush.bf16.msra.mxu0 0
    %918 = vmatpush.bf16.msra.mxu0 0
    %919 = vmatpush.bf16.msra.mxu0 %v653
    %920 = vmatmul.bf16.gmra.mxu0 %v910
    %v921 = vpop.f32.mrf.mxu0
    %v922 = vadd.f32 %v640, %v921
    %v923 = vpop.f32.mrf.mxu0
    %924 = vdwg.mxu0
    %925 = vmatpush.bf16.msra.mxu0 0
    %926 = vmatpush.bf16.msra.mxu0 0
    %927 = vmatpush.bf16.msra.mxu0 0
    %928 = vmatpush.bf16.msra.mxu0 0
    %929 = vmatpush.bf16.msra.mxu0 0
    %930 = vmatpush.bf16.msra.mxu0 0
    %931 = vmatpush.bf16.msra.mxu0 0
    %932 = vmatpush.bf16.msra.mxu0 %v654
    %933 = vmatmul.bf16.gmra.mxu0 %v910
    %v934 = vpop.f32.mrf.mxu0
    %v935 = vadd.f32 %v641, %v934
    %v936 = vpop.f32.mrf.mxu0
    %937 = vdwg.mxu0
    %v938 = vmax.f32 %v922, 0.0
    %v939 = vmax.f32 %v935, 0.0
    %v940 = vpack.c.bf16 %v938, %v938
    %v941 = vpack.c.bf16 %v939, %v939
    %v943 = vsel %vm768, %v941, 0
    %945 = vmatpush.bf16.msra.mxu0 %v750
    %946 = vmatpush.bf16.msra.mxu0 %v749
    %947 = vmatpush.bf16.msra.mxu0 %v748
    %948 = vmatpush.bf16.msra.mxu0 %v747
    %949 = vmatpush.bf16.msra.mxu0 %v746
    %950 = vmatpush.bf16.msra.mxu0 %v745
    %951 = vmatpush.bf16.msra.mxu0 %v744
    %952 = vmatpush.bf16.msra.mxu0 %v743
    %953 = vmatmul.bf16.gmra.mxu0 %v940
    %v954 = vpop.f32.mrf.mxu0
    %v955 = vadd.f32 %v691, %v954
    %v956 = vpop.f32.mrf.mxu0
    %957 = vdwg.mxu0
    %958 = vmatpush.bf16.msra.mxu0 0
    %959 = vmatpush.bf16.msra.mxu0 0
    %960 = vmatpush.bf16.msra.mxu0 0
    %961 = vmatpush.bf16.msra.mxu0 %v773
    %962 = vmatpush.bf16.msra.mxu0 %v754
    %963 = vmatpush.bf16.msra.mxu0 %v753
    %964 = vmatpush.bf16.msra.mxu0 %v752
    %965 = vmatpush.bf16.msra.mxu0 %v751
    %966 = vmatmul.bf16.gmra.mxu0 %v943
    %v967 = vpop.f32.mrf.mxu0
    %v968 = vadd.f32 %v955, %v967
    %v969 = vpop.f32.mrf.mxu0
    %970 = vdwg.mxu0
    %v971 = vmax.f32 %v968, 0.0
    %v973 = vsel %vm805, %v971, 0
    %975 = vmatpush.msra.mxu0 0.0
    %976 = vmatpush.msra.mxu0 0.0
    %977 = vmatpush.msra.mxu0 0.0
    %978 = vmatpush.msra.mxu0 %v810
    %979 = vmatpush.msra.mxu0 %v568
    %980 = vmatpush.msra.mxu0 %v567
    %981 = vmatpush.msra.mxu0 %v566
    %982 = vmatpush.msra.mxu0 %v565
    %983 = vmatpush.msra.mxu0 %v564
    %984 = vmatpush.msra.mxu0 %v563
    %985 = vmatpush.msra.mxu0 %v562
    %986 = vmatpush.msra.mxu0 %v561
    %987 = vmatpush.msra.mxu0 %v560
    %988 = vmatpush.msra.mxu0 %v559
    %989 = vmatpush.msra.mxu0 %v558
    %990 = vmatpush.msra.mxu0 %v557
    %991 = vmatmul.f32.gmra.mxu0 %v973
    %v992 = vpop.f32.mrf.mxu0
    %v993 = vadd.f32 %v803, %v992
    %994 = vdwg.mxu0
    %v995 = vtanh.pop %v993
    %s996 = scalar_lea.vmem [#allocation2], 2
    %997 = vst.msk [vmem:[%s996] sm:$0x3] %vm833, %v995
    %v999 = vrot.slane %v902, 2
    %1000 = vrot.lane.b32.xlu0 %v999, 112
    %v1001 = vpop.permute.xlu0 %1000
    %v1002 = vsel %vm574, %v1001, 0
    %1004 = vmatpush.msra.mxu0 0.0
    %1005 = vmatpush.msra.mxu0 0.0
    %1006 = vmatpush.msra.mxu0 0.0
    %1007 = vmatpush.msra.mxu0 0.0
    %1008 = vmatpush.msra.mxu0 0.0
    %1009 = vmatpush.msra.mxu0 0.0
    %1010 = vmatpush.msra.mxu0 0.0
    %1011 = vmatpush.msra.mxu0 0.0
    %1012 = vmatpush.msra.mxu0 0.0
    %1013 = vmatpush.msra.mxu0 0.0
    %1014 = vmatpush.msra.mxu0 0.0
    %1015 = vmatpush.msra.mxu0 0.0
    %1016 = vmatpush.msra.mxu0 0.0
    %1017 = vmatpush.msra.mxu0 0.0
    %1018 = vmatpush.msra.mxu0 %v526
    %1019 = vmatpush.msra.mxu0 %v525
    %1020 = vmatmul.f32.gmra.mxu0 %v1002
    %v1021 = vpop.f32.mrf.mxu0
    %v1022 = vadd.f32 %v572, %v1021
    %1023 = vdwg.mxu0
    %v1025 = vrot.slane %v1022, 4
    %v1027 = vadd.f32 %v522, %v1025
    %v1028 = vxor.u32 %v1027, 2147483648
    %v1029 = vmul.f32 %v1028, 1.442695
    %v1030 = vpow.pop %v1029
    %v1031 = vadd.f32 %v1030, 1.0
    %v1032 = vrcp.pop %v1031
    %v1033 = vmul.f32 %v1031, %v1032
    %v1034 = vsub.f32 1.0, %v1033
    %v1035 = vmul.f32 %v1032, %v1034
    %v1036 = vadd.f32 %v1032, %v1035
    %vm1037 = vweird.f32 %v1031
    %vm1038 = vweird.f32 %v1032
    %vm1039 = vmor %vm1037, %vm1038
    %v1040 = vsel %vm1039, %v1032, %v1036
    %v1041 = vand.u32 2147483647, %v1031
    %vm1042 = vcmp.eq.f32.partialorder %v1041, 8.507059e+37
    %v1043 = vand.u32 %v1031, 2147483648
    %v1044 = vor.u32 1.1754944e-38, %v1043
    %v1045 = vsel %vm1042, %v1044, %v1040
    %v1046 = vmul.f32 1.0, %v1045
    %1047 = vrot.lane.b32.xlu0 %v1025, 96
    %v1048 = vpop.permute.xlu0 %1047
    %v1050 = vmul.f32 %v1046, %v1048
    %1052 = vrot.lane.b32.xlu0 %v1050, 32
    %v1053 = vpop.permute.xlu0 %1052
    %v1055 = vadd.f32 %v522, %v1053
    %v1056 = vtanh.pop %v1055
    %v1057 = vsub.f32 1.0, %v1046
    %1059 = vrot.lane.b32.xlu0 %v1056, 112
    %v1060 = vpop.permute.xlu0 %1059
    %v1062 = vmul.f32 %v1057, %v1060
    %v1063 = vrot.slane %v902, 6
    %v1065 = vmul.f32 %v1046, %v1063
    %v1066 = vadd.f32 %v1062, %v1065
    %v1067 = vmax.f32 %v1066, 0.0
    %v1068 = vpack.c.bf16 %v1067, %v1067
    %v1070 = vrot.slane %v1068, 2
    %1071 = vrot.lane.b32.xlu0 %v1070, 112
    %v1072 = vpop.permute.xlu0 %1071
    %v1074 = vsel %vm574, %v1072, 0
    %1076 = vmatpush.bf16.msra.mxu0 0
    %1077 = vmatpush.bf16.msra.mxu0 0
    %1078 = vmatpush.bf16.msra.mxu0 0
    %1079 = vmatpush.bf16.msra.mxu0 0
    %1080 = vmatpush.bf16.msra.mxu0 0
    %1081 = vmatpush.bf16.msra.mxu0 0
    %1082 = vmatpush.bf16.msra.mxu0 0
    %1083 = vmatpush.bf16.msra.mxu0 %v653
    %1084 = vmatmul.bf16.gmra.mxu0 %v1074
    %v1085 = vpop.f32.mrf.mxu0
    %v1086 = vadd.f32 %v640, %v1085
    %v1087 = vpop.f32.mrf.mxu0
    %1088 = vdwg.mxu0
    %1089 = vmatpush.bf16.msra.mxu0 0
    %1090 = vmatpush.bf16.msra.mxu0 0
    %1091 = vmatpush.bf16.msra.mxu0 0
    %1092 = vmatpush.bf16.msra.mxu0 0
    %1093 = vmatpush.bf16.msra.mxu0 0
    %1094 = vmatpush.bf16.msra.mxu0 0
    %1095 = vmatpush.bf16.msra.mxu0 0
    %1096 = vmatpush.bf16.msra.mxu0 %v654
    %1097 = vmatmul.bf16.gmra.mxu0 %v1074
    %v1098 = vpop.f32.mrf.mxu0
    %v1099 = vadd.f32 %v641, %v1098
    %v1100 = vpop.f32.mrf.mxu0
    %1101 = vdwg.mxu0
    %v1102 = vmax.f32 %v1086, 0.0
    %v1103 = vmax.f32 %v1099, 0.0
    %v1104 = vpack.c.bf16 %v1102, %v1102
    %v1105 = vpack.c.bf16 %v1103, %v1103
    %v1107 = vsel %vm768, %v1105, 0
    %1109 = vmatpush.bf16.msra.mxu0 %v750
    %1110 = vmatpush.bf16.msra.mxu0 %v749
    %1111 = vmatpush.bf16.msra.mxu0 %v748
    %1112 = vmatpush.bf16.msra.mxu0 %v747
    %1113 = vmatpush.bf16.msra.mxu0 %v746
    %1114 = vmatpush.bf16.msra.mxu0 %v745
    %1115 = vmatpush.bf16.msra.mxu0 %v744
    %1116 = vmatpush.bf16.msra.mxu0 %v743
    %1117 = vmatmul.bf16.gmra.mxu0 %v1104
    %v1118 = vpop.f32.mrf.mxu0
    %v1119 = vadd.f32 %v691, %v1118
    %v1120 = vpop.f32.mrf.mxu0
    %1121 = vdwg.mxu0
    %1122 = vmatpush.bf16.msra.mxu0 0
    %1123 = vmatpush.bf16.msra.mxu0 0
    %1124 = vmatpush.bf16.msra.mxu0 0
    %1125 = vmatpush.bf16.msra.mxu0 %v773
    %1126 = vmatpush.bf16.msra.mxu0 %v754
    %1127 = vmatpush.bf16.msra.mxu0 %v753
    %1128 = vmatpush.bf16.msra.mxu0 %v752
    %1129 = vmatpush.bf16.msra.mxu0 %v751
    %1130 = vmatmul.bf16.gmra.mxu0 %v1107
    %v1131 = vpop.f32.mrf.mxu0
    %v1132 = vadd.f32 %v1119, %v1131
    %v1133 = vpop.f32.mrf.mxu0
    %1134 = vdwg.mxu0
    %v1135 = vmax.f32 %v1132, 0.0
    %v1137 = vsel %vm805, %v1135, 0
    %1139 = vmatpush.msra.mxu0 0.0
    %1140 = vmatpush.msra.mxu0 0.0
    %1141 = vmatpush.msra.mxu0 0.0
    %1142 = vmatpush.msra.mxu0 %v810
    %1143 = vmatpush.msra.mxu0 %v568
    %1144 = vmatpush.msra.mxu0 %v567
    %1145 = vmatpush.msra.mxu0 %v566
    %1146 = vmatpush.msra.mxu0 %v565
    %1147 = vmatpush.msra.mxu0 %v564
    %1148 = vmatpush.msra.mxu0 %v563
    %1149 = vmatpush.msra.mxu0 %v562
    %1150 = vmatpush.msra.mxu0 %v561
    %1151 = vmatpush.msra.mxu0 %v560
    %1152 = vmatpush.msra.mxu0 %v559
    %1153 = vmatpush.msra.mxu0 %v558
    %1154 = vmatpush.msra.mxu0 %v557
    %1155 = vmatmul.f32.gmra.mxu0 %v1137
    %v1156 = vpop.f32.mrf.mxu0
    %v1157 = vadd.f32 %v803, %v1156
    %1158 = vdwg.mxu0
    %v1159 = vtanh.pop %v1157
    %s1160 = scalar_lea.vmem [#allocation2], 4
    %1161 = vst.msk [vmem:[%s1160] sm:$0x3] %vm833, %v1159
    %1163 = vrot.lane.b32.xlu0 %v1066, 112
    %v1164 = vpop.permute.xlu0 %1163
    %vm1166 = vcmask 128004
    %1167 = vst.msk [vmem:[#allocation4 - $0x4] sm:$0x30] %vm1166, %v1164
    // Predicated region
    $region54: #{actor_rgb_forward.5} parent=1 // pred_check
      _
    $region55: #{actor_rgb_forward.5} parent=1 // pred_check_branch
      %1169 = sbr.rel (0) target = $region57
    $region56: #{actor_rgb_forward.5} parent=1 // pred_region
      %1171 = vsyncadd [#allocation3], 0
      %s1172 = sshll.u32 [#allocation2], 4
      %s1173 = int_to_ptr.vmem [resolvable:$true] %s1172
      %s1174 = sshll.u32 %s13, 4
      %s1175 = int_to_ptr.hbm [resolvable:$true] %s1174
      %1180 = dma.vmem_to_hbm [thread:$0]  %s1173, 96, %s1175, [#allocation3], 32, 32, 2
    $region57: #{actor_rgb_forward.5} parent=1 // pred_fallthru
      _
    // Predicated region
    $region58: #{actor_rgb_forward.5} parent=1 // pred_check
      _
    $region59: #{actor_rgb_forward.5} parent=1 // pred_check_branch
      %1182 = sbr.rel (0) target = $region61
    $region60: #{actor_rgb_forward.5} parent=1 // pred_region
      %1184 = vsyncadd [#allocation5], 0
      %s1186 = sshll.u32 [#allocation4], 4
      %s1187 = int_to_ptr.vmem [resolvable:$true] %s1186
      %s1188 = sshll.u32 %s14, 4
      %s1189 = int_to_ptr.hbm [resolvable:$true] %s1188
      %1191 = dma.vmem_to_hbm [thread:$0]  %s1187, 32, %s1189, [#allocation5]
    $region61: #{actor_rgb_forward.5} parent=1 // pred_fallthru
      _
    // Predicated region
    $region62: #{actor_rgb_forward.5} parent=1 // pred_check
      _
    $region63: #{actor_rgb_forward.5} parent=1 // pred_check_branch
      %1193 = sbr.rel (0) target = $region65
    $region64: #{actor_rgb_forward.5} parent=1 // pred_region
      %1195 = dma.done [#allocation3], 96
    $region65: #{actor_rgb_forward.5} parent=1 // pred_fallthru
      _
    // Predicated region
    $region66: #{actor_rgb_forward.5} parent=1 // pred_check
      _
    $region67: #{actor_rgb_forward.5} parent=1 // pred_check_branch
      %1197 = sbr.rel (0) target = $region69
    $region68: #{actor_rgb_forward.5} parent=1 // pred_region
      %1199 = dma.done [#allocation5], 32
    $region69: #{actor_rgb_forward.5} parent=1 // pred_fallthru
      _
    %1200 = vsyncpa [#allocation3], 1
    %1201 = vsyncpa [#allocation5], 1

</llo_original>
